<compile_context>
chip_gen: v6e
topology: v6e:2x2x1
jax: 0.10.0
libtpu: 0.0.40
codegen_flags: <defaults>
</compile_context>

<pallas_src>
import jax
import jax.numpy as jnp
from jax.experimental import pallas as pl
from jax.experimental.pallas import tpu as pltpu

HIDDEN = 48                 # hidden_dim (divisible by 3 and by n_heads)
N_HEADS = 4
HEAD_DIM = HIDDEN // N_HEADS
N_LAYERS = 2                # GRU layers
EMB = HIDDEN // 3           # per-feature embedding dim
CAT = 4 * EMB               # concatenated embedding width
LN_EPS = 1e-5

GSLOT = 128                 # lane slot per GRU gate (tile aligned)
GW = 3 * GSLOT              # packed GRU gate width (r | z | n)

# ---- operand-stack row indices (wrapper and kernel must agree) -------------
# weight stack (NW, H, H): each entry already transposed -> kernel does x @ W
W_Q, W_K, W_V, W_O, W_F1, W_F2, W_MH, W_MHT = range(8)
NW = 8
# bias/vector stack (NB, H) rows
(B_BC, B_BQ, B_BK, B_BV, B_BO, B_G1, B_BE1,
 B_BF1, B_BF2, B_G2, B_BE2, B_FCW, B_FCB) = range(13)
NB = 13


# --------------------------------------------------------------------------
# Fused kernel.  One batch tile (BT batch rows) per grid step; everything is
# time-major (S, BT, ...) inside the kernel.
# --------------------------------------------------------------------------
def _lastquery_kernel(cat_ref, combw_ref, w_ref, b_ref, gw_ref, gb_ref,
                      out_ref, gi_scr, hs_scr):
    S, BT, _ = cat_ref.shape
    H = HIDDEN
    R = S * BT
    f32 = jnp.float32
    cdt = w_ref.dtype                      # matmul-operand dtype (bf16 or f32)

    def brow(i):                           # (1, H) parameter row (f32)
        return b_ref[i:i + 1, :]

    def mm(x, wi):                         # x @ weight_stack[wi], f32 accumulate
        return jnp.dot(x, w_ref[wi], preferred_element_type=f32)

    # ---- comb_proj over all S*BT rows at once -------------------------------
    cat = cat_ref[...].reshape(R, CAT)
    embed = (jnp.dot(cat, combw_ref[...], preferred_element_type=f32)
             + brow(B_BC))                                         # (R, H) f32
    embed_c = embed.astype(cdt)

    # ---- fused (module q/k/v Linear) @ (MHA in-projection) ------------------
    k2 = mm(embed_c, W_K) + brow(B_BK)                             # (R, H)
    v2 = mm(embed_c, W_V) + brow(B_BV)                             # (R, H)
    e_last = embed_c.reshape(S, BT, H)[S - 1]                      # (BT, H)
    q2 = mm(e_last, W_Q) + brow(B_BQ)            # 1/sqrt(head_dim) folded in

    # ---- multi-head attention (head-indicator matmuls, built in wrapper) ----
    q_bc = jnp.broadcast_to(q2[None], (S, BT, H)).reshape(R, H)
    scores = mm((k2 * q_bc).astype(cdt), W_MH).reshape(S, BT, H)
    m = jnp.max(scores, axis=0, keepdims=True)       # softmax over keys (S)
    e = jnp.exp(scores - m)
    p = e * pl.reciprocal(jnp.sum(e, axis=0, keepdims=True), approx=True)
    p_full = mm(p.reshape(R, H).astype(cdt), W_MHT)                # (R, H)
    ctx = jnp.sum((p_full * v2).reshape(S, BT, H), axis=0)         # (BT, H)
    attn = mm(ctx.astype(cdt), W_O) + brow(B_BO)                   # (BT, H)

    # ---- residual (attention broadcast over seq) + LayerNorm 1 --------------
    x = embed + jnp.broadcast_to(attn[None], (S, BT, H)).reshape(R, H)
    mu = jnp.mean(x, axis=-1, keepdims=True)
    var = jnp.mean((x - mu) ** 2, axis=-1, keepdims=True)
    x = (x - mu) * jax.lax.rsqrt(var + LN_EPS) * brow(B_G1) + brow(B_BE1)

    # ---- Feed_Forward_block --------------------------------------------------
    f = jnp.maximum(mm(x.astype(cdt), W_F1) + brow(B_BF1), 0.0)
    f = mm(f.astype(cdt), W_F2) + brow(B_BF2)

    # ---- second residual from the ORIGINAL embed + LayerNorm 2 ---------------
    y = embed + f
    mu2 = jnp.mean(y, axis=-1, keepdims=True)
    var2 = jnp.mean((y - mu2) ** 2, axis=-1, keepdims=True)
    xg = (y - mu2) * jax.lax.rsqrt(var2 + LN_EPS) * brow(B_G2) + brow(B_BE2)

    # ---- multi-layer GRU (h0 = 0): packed gates, scratch-backed recurrence ---
    for l in range(N_LAYERS):
        wih = gw_ref[2 * l]                      # (H, GW)  packed ih gates
        whh = gw_ref[2 * l + 1]                  # (H, GW)  packed hh gates
        bih = gb_ref[2 * l:2 * l + 1, :]         # (1, GW)
        bhh = gb_ref[2 * l + 1:2 * l + 2, :]     # (1, GW)

        # hoisted input-gate matmul: ONE (R,H)x(H,GW) per layer
        gi_scr[...] = (jnp.dot(xg.astype(cdt), wih, preferred_element_type=f32)
                       + bih).reshape(S, BT, GW)

        def step(t, h):
            gi = gi_scr[t]                                        # (BT, GW)
            gh = (jnp.dot(h.astype(cdt), whh, preferred_element_type=f32)
                  + bhh)                                          # (BT, GW)
            r = jax.nn.sigmoid(gi[:, 0:H] + gh[:, 0:H])
            z = jax.nn.sigmoid(gi[:, GSLOT:GSLOT + H] + gh[:, GSLOT:GSLOT + H])
            n = jnp.tanh(gi[:, 2 * GSLOT:2 * GSLOT + H]
                         + r * gh[:, 2 * GSLOT:2 * GSLOT + H])
            hn = (1.0 - z) * n + z * h
            hs_scr[t] = hn                        # one vst per step
            return hn

        jax.lax.fori_loop(0, S, step, jnp.zeros((BT, H), f32),
                          unroll=True if S <= 16 else False)
        xg = hs_scr[...].reshape(R, H)            # input to next layer / fc

    # ---- fc + sigmoid, lane-dense (1, R) output ------------------------------
    wfc = brow(B_FCW)                                              # (1, H)
    logits = jnp.sum(xg * wfc, axis=-1) + b_ref[B_FCB:B_FCB + 1, 0:1]  # (1, R)
    out_ref[...] = jax.nn.sigmoid(logits)


# --------------------------------------------------------------------------
# Wrapper: embedding gathers, weight fusion / packing, pallas_call plumbing.
#   bt_max:   batch rows per grid step (raise toward 128-256 for big batches)
#   min_tiles: set 2 on v7x (2 TensorCores) to shard the parallel axis
#   vmem_limit_bytes: set explicitly on v7x (64 MiB physical) at large BT/S
# --------------------------------------------------------------------------
def last_query_forward(params, test, question, tag, interaction, *,
                       bt_max=128, min_tiles=1, vmem_limit_bytes=None,
                       compute_dtype=jnp.bfloat16):
    B, S = interaction.shape
    H = HIDDEN
    f32 = jnp.float32
    cdt = compute_dtype
    T = jnp.transpose

    # embeddings (nn.Embedding gathers stay in the XLA wrapper)
    e_int = jnp.take(params['emb_interaction'], interaction, axis=0)
    e_test = jnp.take(params['emb_test'], test, axis=0)
    e_q = jnp.take(params['emb_question'], question, axis=0)
    e_tag = jnp.take(params['emb_tag'], tag, axis=0)
    cat = jnp.concatenate([e_int, e_test, e_q, e_tag], axis=2).astype(cdt)

    # batch tiling (no forced multi-tile split: v5e/v6e are single-TC).
    n_tiles = max(min_tiles, -(-B // bt_max))
    BT = -(-B // n_tiles)
    BT = -(-BT // 8) * 8                 # sublane-align (free reshapes inside)
    B_pad = n_tiles * BT
    R = BT * S
    if B_pad != B:
        cat = jnp.pad(cat, ((0, B_pad - B), (0, 0), (0, 0)))
    cat = jnp.transpose(cat, (1, 0, 2))  # time-major (S, B_pad, CAT)

    # fuse the module q/k/v Linears with the MHA in-projection (done once),
    # and fold the 1/sqrt(head_dim) query scaling into the q weights.
    scale = 1.0 / (HEAD_DIM ** 0.5)
    win, binp = params['attn_in_w'], params['attn_in_b']
    wqi_t, wki_t, wvi_t = T(win[0:H]), T(win[H:2 * H]), T(win[2 * H:3 * H])
    bqi, bki, bvi = binp[0:H], binp[H:2 * H], binp[2 * H:3 * H]
    wq_eff = (T(params['q_w']) @ wqi_t) * scale
    wk_eff = T(params['k_w']) @ wki_t
    wv_eff = T(params['v_w']) @ wvi_t
    bq_eff = (params['q_b'] @ wqi_t + bqi) * scale
    bk_eff = params['k_b'] @ wki_t + bki
    bv_eff = params['v_b'] @ wvi_t + bvi

    # head-indicator matrices, hoisted out of the kernel (padded to (H, H);
    # the padding columns produce junk softmax lanes that MH^T projects away).
    head_of = jnp.arange(H) // HEAD_DIM
    mh = (head_of[:, None] == jnp.arange(H)[None, :]).astype(f32)   # (H, H)
    mht = mh.T

    w_list = [wq_eff, wk_eff, wv_eff, T(params['attn_out_w']),
              T(params['ffn_w1']), T(params['ffn_w2']), mh, mht]
    b_list = [params['comb_b'], bq_eff, bk_eff, bv_eff, params['attn_out_b'],
              params['ln1_g'], params['ln1_b'],
              params['ffn_b1'], params['ffn_b2'],
              params['ln2_g'], params['ln2_b'],
              params['fc_w'][0], jnp.full((H,), params['fc_b'][0])]

    # pack GRU gate weights/biases into 128-lane slots: (H, 384) / (384,)
    def pack_w(w3h):                     # (3H, H) [r; z; n] -> (H, GW), x @ W
        out = jnp.zeros((H, GW), f32)
        for g in range(3):
            out = out.at[:, g * GSLOT:g * GSLOT + H].set(T(w3h[g * H:(g + 1) * H]))
        return out

    def pack_b(b3h):                     # (3H,) -> (GW,)
        out = jnp.zeros((GW,), f32)
        for g in range(3):
            out = out.at[g * GSLOT:g * GSLOT + H].set(b3h[g * H:(g + 1) * H])
        return out

    gw_list, gb_list = [], []
    for l in range(N_LAYERS):
        gw_list += [pack_w(params[f'gru_wih_{l}']), pack_w(params[f'gru_whh_{l}'])]
        gb_list += [pack_b(params[f'gru_bih_{l}']), pack_b(params[f'gru_bhh_{l}'])]

    w_stack = jnp.stack(w_list).astype(cdt)           # (NW, H, H)
    b_stack = jnp.stack(b_list).astype(f32)           # (NB, H)   elementwise f32
    gw_stack = jnp.stack(gw_list).astype(cdt)         # (2*NL, H, GW)
    gb_stack = jnp.stack(gb_list).astype(f32)         # (2*NL, GW)
    comb_w_t = T(params['comb_w']).astype(cdt)        # (CAT, H)

    cp_kwargs = dict(dimension_semantics=("parallel",))
    if vmem_limit_bytes is not None:
        cp_kwargs["vmem_limit_bytes"] = vmem_limit_bytes

    out = pl.pallas_call(
        _lastquery_kernel,
        grid=(n_tiles,),
        in_specs=[
            pl.BlockSpec((S, BT, CAT), lambda b: (0, b, 0)),
            pl.BlockSpec((CAT, H), lambda b: (0, 0)),
            pl.BlockSpec((NW, H, H), lambda b: (0, 0, 0)),
            pl.BlockSpec((NB, H), lambda b: (0, 0)),
            pl.BlockSpec((2 * N_LAYERS, H, GW), lambda b: (0, 0, 0)),
            pl.BlockSpec((2 * N_LAYERS, GW), lambda b: (0, 0)),
        ],
        out_specs=pl.BlockSpec((None, 1, R), lambda b: (b, 0, 0)),
        out_shape=jax.ShapeDtypeStruct((n_tiles, 1, R), f32),
        scratch_shapes=[
            pltpu.VMEM((S, BT, GW), jnp.float32),   # hoisted GRU input gates
            pltpu.VMEM((S, BT, H), jnp.float32),    # GRU layer outputs
        ],
        compiler_params=pltpu.CompilerParams(**cp_kwargs),
    )(cat, comb_w_t, w_stack, b_stack, gw_stack, gb_stack)

    # per-tile rows are (s, bt) ordered -> back to (B, S)
    out = out.reshape(n_tiles, S, BT)
    out = jnp.transpose(out, (0, 2, 1)).reshape(B_pad, S)
    return out[:B]


# --------------------------------------------------------------------------
# Deterministic parameter initialization (shapes per the module __init__).
# --------------------------------------------------------------------------
def init_params(key, n_test, n_questions, n_tag):
    keys = iter(jax.random.split(key, 48))
    H, E = HIDDEN, EMB

    def w(shape, scale=0.05):
        return (scale * jax.random.normal(next(keys), shape)).astype(jnp.float32)

    p = {
        'emb_interaction': w((3, E)),
        'emb_test': w((n_test + 1, E)),
        'emb_question': w((n_questions + 1, E)),
        'emb_tag': w((n_tag + 1, E)),
        'comb_w': w((H, 4 * E)), 'comb_b': w((H,)),
        'q_w': w((H, H)), 'q_b': w((H,)),
        'k_w': w((H, H)), 'k_b': w((H,)),
        'v_w': w((H, H)), 'v_b': w((H,)),
        'attn_in_w': w((3 * H, H)), 'attn_in_b': w((3 * H,)),
        'attn_out_w': w((H, H)), 'attn_out_b': w((H,)),
        'ln1_g': jnp.ones((H,), jnp.float32), 'ln1_b': jnp.zeros((H,), jnp.float32),
        'ffn_w1': w((H, H)), 'ffn_b1': w((H,)),
        'ffn_w2': w((H, H)), 'ffn_b2': w((H,)),
        'ln2_g': jnp.ones((H,), jnp.float32), 'ln2_b': jnp.zeros((H,), jnp.float32),
        'fc_w': w((1, H)), 'fc_b': w((1,)),
    }
    for l in range(N_LAYERS):
        p[f'gru_wih_{l}'] = w((3 * H, H))
        p[f'gru_whh_{l}'] = w((3 * H, H))
        p[f'gru_bih_{l}'] = w((3 * H,))
        p[f'gru_bhh_{l}'] = w((3 * H,))
    return p


if __name__ == "__main__":
    key = jax.random.PRNGKey(0)
    B, S = 2, 8
    n_test, n_questions, n_tag = 10, 20, 5

    pkey, k1, k2, k3, k4 = jax.random.split(key, 5)
    params = init_params(pkey, n_test, n_questions, n_tag)

    test = jax.random.randint(k1, (B, S), 0, n_test + 1)
    question = jax.random.randint(k2, (B, S), 0, n_questions + 1)
    tag = jax.random.randint(k3, (B, S), 0, n_tag + 1)
    interaction = jax.random.randint(k4, (B, S), 0, 3)

    # default: bf16 matmul operands (native MXU dtype on v6e/v7x), f32 math
    preds = last_query_forward(params, test, question, tag, interaction)
    preds = jax.block_until_ready(preds)
    assert preds.shape == (B, S)
    assert bool(jnp.all(jnp.isfinite(preds)))
    assert bool(jnp.all((preds >= 0.0) & (preds <= 1.0)))

    # sanity: bf16-operand path stays close to the all-f32 path
    preds_f32 = last_query_forward(params, test, question, tag, interaction,
                                   compute_dtype=jnp.float32)
    preds_f32 = jax.block_until_ready(preds_f32)
    assert float(jnp.max(jnp.abs(preds - preds_f32))) < 0.05

    print("KERNEL_OK")
</pallas_src>

<mosaic_0001>
module attributes {stable_mosaic.version = 11 : i64} {
  func.func @_lastquery_kernel(%arg0: i32, %arg1: memref<8x8x64xbf16, #tpu.memory_space<vmem>>, %arg2: memref<64x48xbf16, #tpu.memory_space<vmem>>, %arg3: memref<8x48x48xbf16, #tpu.memory_space<vmem>>, %arg4: memref<13x48xf32, #tpu.memory_space<vmem>>, %arg5: memref<4x48x384xbf16, #tpu.memory_space<vmem>>, %arg6: memref<4x384xf32, #tpu.memory_space<vmem>>, %arg7: memref<1x1x64xf32, #tpu.memory_space<vmem>>, %arg8: memref<8x8x384xf32, #tpu.memory_space<vmem>>, %arg9: memref<8x8x48xf32, #tpu.memory_space<vmem>>) attributes {dimension_semantics = [#tpu.dimension_semantics<parallel>], iteration_bounds = array<i64: 1>, scalar_prefetch = 0 : i64, scratch_operands = 2 : i64, tpu.core_type = #tpu.core_type<tc>, window_params = [{transform_indices = @transform_0, window_bounds = array<i64: 8, 8, 64>}, {pipeline_mode = #tpu.pipeline_mode<synchronous>, transform_indices = @transform_1, window_bounds = array<i64: 64, 48>}, {pipeline_mode = #tpu.pipeline_mode<synchronous>, transform_indices = @transform_2, window_bounds = array<i64: 8, 48, 48>}, {pipeline_mode = #tpu.pipeline_mode<synchronous>, transform_indices = @transform_3, window_bounds = array<i64: 13, 48>}, {pipeline_mode = #tpu.pipeline_mode<synchronous>, transform_indices = @transform_4, window_bounds = array<i64: 4, 48, 384>}, {pipeline_mode = #tpu.pipeline_mode<synchronous>, transform_indices = @transform_5, window_bounds = array<i64: 4, 384>}, {transform_indices = @transform_6, window_bounds = array<i64: 1, 1, 64>}]} {
    %c0 = arith.constant 0 : index
    %c0_0 = arith.constant 0 : index
    %c0_1 = arith.constant 0 : index
    %0 = vector.load %arg1[%c0, %c0_0, %c0_1] : memref<8x8x64xbf16, #tpu.memory_space<vmem>>, vector<8x8x64xbf16>
    %1 = vector.shape_cast %0 : vector<8x8x64xbf16> to vector<64x64xbf16>
    %c0_2 = arith.constant 0 : index
    %c0_3 = arith.constant 0 : index
    %2 = vector.load %arg2[%c0_2, %c0_3] : memref<64x48xbf16, #tpu.memory_space<vmem>>, vector<64x48xbf16>
    %cst = arith.constant dense<0.000000e+00> : vector<64x48xf32>
    %3 = tpu.matmul %1, %2, %cst {dimension_numbers = #tpu.dot_dimension_numbers<[1], [0], [0], [1], [0, 0, 1, 1], [], []>} : vector<64x64xbf16>, vector<64x48xbf16>, vector<64x48xf32> -> vector<64x48xf32>
    %c0_4 = arith.constant 0 : index
    %c0_5 = arith.constant 0 : index
    %4 = vector.load %arg4[%c0_4, %c0_5] : memref<13x48xf32, #tpu.memory_space<vmem>>, vector<1x48xf32>
    %5 = vector.broadcast %4 : vector<1x48xf32> to vector<64x48xf32>
    %6 = arith.addf %3, %5 : vector<64x48xf32>
    %7 = arith.truncf %6 : vector<64x48xf32> to vector<64x48xbf16>
    %c1 = arith.constant 1 : index
    %c0_6 = arith.constant 0 : index
    %c0_7 = arith.constant 0 : index
    %8 = vector.load %arg3[%c1, %c0_6, %c0_7] : memref<8x48x48xbf16, #tpu.memory_space<vmem>>, vector<1x48x48xbf16>
    %9 = vector.shape_cast %8 : vector<1x48x48xbf16> to vector<48x48xbf16>
    %cst_8 = arith.constant dense<0.000000e+00> : vector<64x48xf32>
    %10 = tpu.matmul %7, %9, %cst_8 {dimension_numbers = #tpu.dot_dimension_numbers<[1], [0], [0], [1], [0, 0, 1, 1], [], []>} : vector<64x48xbf16>, vector<48x48xbf16>, vector<64x48xf32> -> vector<64x48xf32>
    %c2 = arith.constant 2 : index
    %c0_9 = arith.constant 0 : index
    %11 = vector.load %arg4[%c2, %c0_9] : memref<13x48xf32, #tpu.memory_space<vmem>>, vector<1x48xf32>
    %12 = vector.broadcast %11 : vector<1x48xf32> to vector<64x48xf32>
    %13 = arith.addf %10, %12 : vector<64x48xf32>
    %c2_10 = arith.constant 2 : index
    %c0_11 = arith.constant 0 : index
    %c0_12 = arith.constant 0 : index
    %14 = vector.load %arg3[%c2_10, %c0_11, %c0_12] : memref<8x48x48xbf16, #tpu.memory_space<vmem>>, vector<1x48x48xbf16>
    %15 = vector.shape_cast %14 : vector<1x48x48xbf16> to vector<48x48xbf16>
    %cst_13 = arith.constant dense<0.000000e+00> : vector<64x48xf32>
    %16 = tpu.matmul %7, %15, %cst_13 {dimension_numbers = #tpu.dot_dimension_numbers<[1], [0], [0], [1], [0, 0, 1, 1], [], []>} : vector<64x48xbf16>, vector<48x48xbf16>, vector<64x48xf32> -> vector<64x48xf32>
    %c3 = arith.constant 3 : index
    %c0_14 = arith.constant 0 : index
    %17 = vector.load %arg4[%c3, %c0_14] : memref<13x48xf32, #tpu.memory_space<vmem>>, vector<1x48xf32>
    %18 = vector.broadcast %17 : vector<1x48xf32> to vector<64x48xf32>
    %19 = arith.addf %16, %18 : vector<64x48xf32>
    %20 = vector.shape_cast %7 : vector<64x48xbf16> to vector<8x8x48xbf16>
    %21 = vector.extract_strided_slice %20 {offsets = [7, 0, 0], sizes = [1, 8, 48], strides = [1, 1, 1]} : vector<8x8x48xbf16> to vector<1x8x48xbf16>
    %22 = vector.shape_cast %21 : vector<1x8x48xbf16> to vector<8x48xbf16>
    %c0_15 = arith.constant 0 : index
    %c0_16 = arith.constant 0 : index
    %c0_17 = arith.constant 0 : index
    %23 = vector.load %arg3[%c0_15, %c0_16, %c0_17] : memref<8x48x48xbf16, #tpu.memory_space<vmem>>, vector<1x48x48xbf16>
    %24 = vector.shape_cast %23 : vector<1x48x48xbf16> to vector<48x48xbf16>
    %cst_18 = arith.constant dense<0.000000e+00> : vector<8x48xf32>
    %25 = tpu.matmul %22, %24, %cst_18 {dimension_numbers = #tpu.dot_dimension_numbers<[1], [0], [0], [1], [0, 0, 1, 1], [], []>} : vector<8x48xbf16>, vector<48x48xbf16>, vector<8x48xf32> -> vector<8x48xf32>
    %c1_19 = arith.constant 1 : index
    %c0_20 = arith.constant 0 : index
    %26 = vector.load %arg4[%c1_19, %c0_20] : memref<13x48xf32, #tpu.memory_space<vmem>>, vector<1x48xf32>
    %27 = vector.broadcast %26 : vector<1x48xf32> to vector<8x48xf32>
    %28 = arith.addf %25, %27 : vector<8x48xf32>
    %29 = vector.shape_cast %28 : vector<8x48xf32> to vector<1x8x48xf32>
    %30 = vector.shape_cast %29 : vector<1x8x48xf32> to vector<1x8x48xf32>
    %31 = vector.broadcast %30 : vector<1x8x48xf32> to vector<8x8x48xf32>
    %32 = vector.shape_cast %31 : vector<8x8x48xf32> to vector<64x48xf32>
    %33 = arith.mulf %13, %32 : vector<64x48xf32>
    %34 = arith.truncf %33 : vector<64x48xf32> to vector<64x48xbf16>
    %c6 = arith.constant 6 : index
    %c0_21 = arith.constant 0 : index
    %c0_22 = arith.constant 0 : index
    %35 = vector.load %arg3[%c6, %c0_21, %c0_22] : memref<8x48x48xbf16, #tpu.memory_space<vmem>>, vector<1x48x48xbf16>
    %36 = vector.shape_cast %35 : vector<1x48x48xbf16> to vector<48x48xbf16>
    %cst_23 = arith.constant dense<0.000000e+00> : vector<64x48xf32>
    %37 = tpu.matmul %34, %36, %cst_23 {dimension_numbers = #tpu.dot_dimension_numbers<[1], [0], [0], [1], [0, 0, 1, 1], [], []>} : vector<64x48xbf16>, vector<48x48xbf16>, vector<64x48xf32> -> vector<64x48xf32>
    %38 = vector.shape_cast %37 : vector<64x48xf32> to vector<8x8x48xf32>
    %cst_24 = arith.constant dense<0xFF800000> : vector<8x48xf32>
    %39 = vector.multi_reduction <maximumf>, %38, %cst_24 [0] : vector<8x8x48xf32> to vector<8x48xf32>
    %40 = vector.shape_cast %39 : vector<8x48xf32> to vector<1x8x48xf32>
    %41 = vector.broadcast %40 : vector<1x8x48xf32> to vector<8x8x48xf32>
    %42 = arith.subf %38, %41 : vector<8x8x48xf32>
    %43 = math.exp %42 : vector<8x8x48xf32>
    %cst_25 = arith.constant dense<0.000000e+00> : vector<8x48xf32>
    %44 = vector.multi_reduction <add>, %43, %cst_25 [0] : vector<8x8x48xf32> to vector<8x48xf32>
    %45 = vector.shape_cast %44 : vector<8x48xf32> to vector<1x8x48xf32>
    %46 = tpu.reciprocal %45 {approx = true} : vector<1x8x48xf32> -> vector<1x8x48xf32>
    %47 = vector.broadcast %46 : vector<1x8x48xf32> to vector<8x8x48xf32>
    %48 = arith.mulf %43, %47 : vector<8x8x48xf32>
    %49 = vector.shape_cast %48 : vector<8x8x48xf32> to vector<64x48xf32>
    %50 = arith.truncf %49 : vector<64x48xf32> to vector<64x48xbf16>
    %c7 = arith.constant 7 : index
    %c0_26 = arith.constant 0 : index
    %c0_27 = arith.constant 0 : index
    %51 = vector.load %arg3[%c7, %c0_26, %c0_27] : memref<8x48x48xbf16, #tpu.memory_space<vmem>>, vector<1x48x48xbf16>
    %52 = vector.shape_cast %51 : vector<1x48x48xbf16> to vector<48x48xbf16>
    %cst_28 = arith.constant dense<0.000000e+00> : vector<64x48xf32>
    %53 = tpu.matmul %50, %52, %cst_28 {dimension_numbers = #tpu.dot_dimension_numbers<[1], [0], [0], [1], [0, 0, 1, 1], [], []>} : vector<64x48xbf16>, vector<48x48xbf16>, vector<64x48xf32> -> vector<64x48xf32>
    %54 = arith.mulf %53, %19 : vector<64x48xf32>
    %55 = vector.shape_cast %54 : vector<64x48xf32> to vector<8x8x48xf32>
    %cst_29 = arith.constant dense<0.000000e+00> : vector<8x48xf32>
    %56 = vector.multi_reduction <add>, %55, %cst_29 [0] : vector<8x8x48xf32> to vector<8x48xf32>
    %57 = arith.truncf %56 : vector<8x48xf32> to vector<8x48xbf16>
    %c3_30 = arith.constant 3 : index
    %c0_31 = arith.constant 0 : index
    %c0_32 = arith.constant 0 : index
    %58 = vector.load %arg3[%c3_30, %c0_31, %c0_32] : memref<8x48x48xbf16, #tpu.memory_space<vmem>>, vector<1x48x48xbf16>
    %59 = vector.shape_cast %58 : vector<1x48x48xbf16> to vector<48x48xbf16>
    %cst_33 = arith.constant dense<0.000000e+00> : vector<8x48xf32>
    %60 = tpu.matmul %57, %59, %cst_33 {dimension_numbers = #tpu.dot_dimension_numbers<[1], [0], [0], [1], [0, 0, 1, 1], [], []>} : vector<8x48xbf16>, vector<48x48xbf16>, vector<8x48xf32> -> vector<8x48xf32>
    %c4 = arith.constant 4 : index
    %c0_34 = arith.constant 0 : index
    %61 = vector.load %arg4[%c4, %c0_34] : memref<13x48xf32, #tpu.memory_space<vmem>>, vector<1x48xf32>
    %62 = vector.broadcast %61 : vector<1x48xf32> to vector<8x48xf32>
    %63 = arith.addf %60, %62 : vector<8x48xf32>
    %64 = vector.shape_cast %63 : vector<8x48xf32> to vector<1x8x48xf32>
    %65 = vector.shape_cast %64 : vector<1x8x48xf32> to vector<1x8x48xf32>
    %66 = vector.broadcast %65 : vector<1x8x48xf32> to vector<8x8x48xf32>
    %67 = vector.shape_cast %66 : vector<8x8x48xf32> to vector<64x48xf32>
    %68 = arith.addf %6, %67 : vector<64x48xf32>
    %cst_35 = arith.constant dense<0.000000e+00> : vector<64xf32>
    %69 = vector.multi_reduction <add>, %68, %cst_35 [1] : vector<64x48xf32> to vector<64xf32>
    %70 = vector.shape_cast %69 : vector<64xf32> to vector<64x1xf32>
    %cst_36 = arith.constant 4.800000e+01 : f32
    %71 = vector.broadcast %cst_36 : f32 to vector<64x1xf32>
    %72 = arith.divf %70, %71 : vector<64x1xf32>
    %73 = vector.broadcast %72 : vector<64x1xf32> to vector<64x48xf32>
    %74 = arith.subf %68, %73 : vector<64x48xf32>
    %75 = arith.mulf %74, %74 : vector<64x48xf32>
    %cst_37 = arith.constant dense<0.000000e+00> : vector<64xf32>
    %76 = vector.multi_reduction <add>, %75, %cst_37 [1] : vector<64x48xf32> to vector<64xf32>
    %77 = vector.shape_cast %76 : vector<64xf32> to vector<64x1xf32>
    %cst_38 = arith.constant 4.800000e+01 : f32
    %78 = vector.broadcast %cst_38 : f32 to vector<64x1xf32>
    %79 = arith.divf %77, %78 : vector<64x1xf32>
    %80 = vector.broadcast %72 : vector<64x1xf32> to vector<64x48xf32>
    %81 = arith.subf %68, %80 : vector<64x48xf32>
    %cst_39 = arith.constant 9.99999974E-6 : f32
    %82 = vector.broadcast %cst_39 : f32 to vector<64x1xf32>
    %83 = arith.addf %79, %82 : vector<64x1xf32>
    %84 = math.rsqrt %83 : vector<64x1xf32>
    %85 = vector.broadcast %84 : vector<64x1xf32> to vector<64x48xf32>
    %86 = arith.mulf %81, %85 : vector<64x48xf32>
    %c5 = arith.constant 5 : index
    %c0_40 = arith.constant 0 : index
    %87 = vector.load %arg4[%c5, %c0_40] : memref<13x48xf32, #tpu.memory_space<vmem>>, vector<1x48xf32>
    %88 = vector.broadcast %87 : vector<1x48xf32> to vector<64x48xf32>
    %89 = arith.mulf %86, %88 : vector<64x48xf32>
    %c6_41 = arith.constant 6 : index
    %c0_42 = arith.constant 0 : index
    %90 = vector.load %arg4[%c6_41, %c0_42] : memref<13x48xf32, #tpu.memory_space<vmem>>, vector<1x48xf32>
    %91 = vector.broadcast %90 : vector<1x48xf32> to vector<64x48xf32>
    %92 = arith.addf %89, %91 : vector<64x48xf32>
    %93 = arith.truncf %92 : vector<64x48xf32> to vector<64x48xbf16>
    %c4_43 = arith.constant 4 : index
    %c0_44 = arith.constant 0 : index
    %c0_45 = arith.constant 0 : index
    %94 = vector.load %arg3[%c4_43, %c0_44, %c0_45] : memref<8x48x48xbf16, #tpu.memory_space<vmem>>, vector<1x48x48xbf16>
    %95 = vector.shape_cast %94 : vector<1x48x48xbf16> to vector<48x48xbf16>
    %cst_46 = arith.constant dense<0.000000e+00> : vector<64x48xf32>
    %96 = tpu.matmul %93, %95, %cst_46 {dimension_numbers = #tpu.dot_dimension_numbers<[1], [0], [0], [1], [0, 0, 1, 1], [], []>} : vector<64x48xbf16>, vector<48x48xbf16>, vector<64x48xf32> -> vector<64x48xf32>
    %c7_47 = arith.constant 7 : index
    %c0_48 = arith.constant 0 : index
    %97 = vector.load %arg4[%c7_47, %c0_48] : memref<13x48xf32, #tpu.memory_space<vmem>>, vector<1x48xf32>
    %98 = vector.broadcast %97 : vector<1x48xf32> to vector<64x48xf32>
    %99 = arith.addf %96, %98 : vector<64x48xf32>
    %cst_49 = arith.constant 0.000000e+00 : f32
    %100 = vector.broadcast %cst_49 : f32 to vector<64x48xf32>
    %101 = arith.maximumf %99, %100 : vector<64x48xf32>
    %102 = arith.truncf %101 : vector<64x48xf32> to vector<64x48xbf16>
    %c5_50 = arith.constant 5 : index
    %c0_51 = arith.constant 0 : index
    %c0_52 = arith.constant 0 : index
    %103 = vector.load %arg3[%c5_50, %c0_51, %c0_52] : memref<8x48x48xbf16, #tpu.memory_space<vmem>>, vector<1x48x48xbf16>
    %104 = vector.shape_cast %103 : vector<1x48x48xbf16> to vector<48x48xbf16>
    %cst_53 = arith.constant dense<0.000000e+00> : vector<64x48xf32>
    %105 = tpu.matmul %102, %104, %cst_53 {dimension_numbers = #tpu.dot_dimension_numbers<[1], [0], [0], [1], [0, 0, 1, 1], [], []>} : vector<64x48xbf16>, vector<48x48xbf16>, vector<64x48xf32> -> vector<64x48xf32>
    %c8 = arith.constant 8 : index
    %c0_54 = arith.constant 0 : index
    %106 = vector.load %arg4[%c8, %c0_54] : memref<13x48xf32, #tpu.memory_space<vmem>>, vector<1x48xf32>
    %107 = vector.broadcast %106 : vector<1x48xf32> to vector<64x48xf32>
    %108 = arith.addf %105, %107 : vector<64x48xf32>
    %109 = arith.addf %6, %108 : vector<64x48xf32>
    %cst_55 = arith.constant dense<0.000000e+00> : vector<64xf32>
    %110 = vector.multi_reduction <add>, %109, %cst_55 [1] : vector<64x48xf32> to vector<64xf32>
    %111 = vector.shape_cast %110 : vector<64xf32> to vector<64x1xf32>
    %cst_56 = arith.constant 4.800000e+01 : f32
    %112 = vector.broadcast %cst_56 : f32 to vector<64x1xf32>
    %113 = arith.divf %111, %112 : vector<64x1xf32>
    %114 = vector.broadcast %113 : vector<64x1xf32> to vector<64x48xf32>
    %115 = arith.subf %109, %114 : vector<64x48xf32>
    %116 = arith.mulf %115, %115 : vector<64x48xf32>
    %cst_57 = arith.constant dense<0.000000e+00> : vector<64xf32>
    %117 = vector.multi_reduction <add>, %116, %cst_57 [1] : vector<64x48xf32> to vector<64xf32>
    %118 = vector.shape_cast %117 : vector<64xf32> to vector<64x1xf32>
    %cst_58 = arith.constant 4.800000e+01 : f32
    %119 = vector.broadcast %cst_58 : f32 to vector<64x1xf32>
    %120 = arith.divf %118, %119 : vector<64x1xf32>
    %121 = vector.broadcast %113 : vector<64x1xf32> to vector<64x48xf32>
    %122 = arith.subf %109, %121 : vector<64x48xf32>
    %cst_59 = arith.constant 9.99999974E-6 : f32
    %123 = vector.broadcast %cst_59 : f32 to vector<64x1xf32>
    %124 = arith.addf %120, %123 : vector<64x1xf32>
    %125 = math.rsqrt %124 : vector<64x1xf32>
    %126 = vector.broadcast %125 : vector<64x1xf32> to vector<64x48xf32>
    %127 = arith.mulf %122, %126 : vector<64x48xf32>
    %c9 = arith.constant 9 : index
    %c0_60 = arith.constant 0 : index
    %128 = vector.load %arg4[%c9, %c0_60] : memref<13x48xf32, #tpu.memory_space<vmem>>, vector<1x48xf32>
    %129 = vector.broadcast %128 : vector<1x48xf32> to vector<64x48xf32>
    %130 = arith.mulf %127, %129 : vector<64x48xf32>
    %c10 = arith.constant 10 : index
    %c0_61 = arith.constant 0 : index
    %131 = vector.load %arg4[%c10, %c0_61] : memref<13x48xf32, #tpu.memory_space<vmem>>, vector<1x48xf32>
    %132 = vector.broadcast %131 : vector<1x48xf32> to vector<64x48xf32>
    %133 = arith.addf %130, %132 : vector<64x48xf32>
    %c0_62 = arith.constant 0 : index
    %c0_63 = arith.constant 0 : index
    %c0_64 = arith.constant 0 : index
    %134 = vector.load %arg5[%c0_62, %c0_63, %c0_64] : memref<4x48x384xbf16, #tpu.memory_space<vmem>>, vector<1x48x384xbf16>
    %135 = vector.shape_cast %134 : vector<1x48x384xbf16> to vector<48x384xbf16>
    %c1_65 = arith.constant 1 : index
    %c0_66 = arith.constant 0 : index
    %c0_67 = arith.constant 0 : index
    %136 = vector.load %arg5[%c1_65, %c0_66, %c0_67] : memref<4x48x384xbf16, #tpu.memory_space<vmem>>, vector<1x48x384xbf16>
    %137 = vector.shape_cast %136 : vector<1x48x384xbf16> to vector<48x384xbf16>
    %c0_68 = arith.constant 0 : index
    %c0_69 = arith.constant 0 : index
    %138 = vector.load %arg6[%c0_68, %c0_69] : memref<4x384xf32, #tpu.memory_space<vmem>>, vector<1x384xf32>
    %c1_70 = arith.constant 1 : index
    %c0_71 = arith.constant 0 : index
    %139 = vector.load %arg6[%c1_70, %c0_71] : memref<4x384xf32, #tpu.memory_space<vmem>>, vector<1x384xf32>
    %140 = arith.truncf %133 : vector<64x48xf32> to vector<64x48xbf16>
    %cst_72 = arith.constant dense<0.000000e+00> : vector<64x384xf32>
    %141 = tpu.matmul %140, %135, %cst_72 {dimension_numbers = #tpu.dot_dimension_numbers<[1], [0], [0], [1], [0, 0, 1, 1], [], []>} : vector<64x48xbf16>, vector<48x384xbf16>, vector<64x384xf32> -> vector<64x384xf32>
    %142 = vector.broadcast %138 : vector<1x384xf32> to vector<64x384xf32>
    %143 = arith.addf %141, %142 : vector<64x384xf32>
    %144 = vector.shape_cast %143 : vector<64x384xf32> to vector<8x8x384xf32>
    %c0_73 = arith.constant 0 : index
    %c0_74 = arith.constant 0 : index
    %c0_75 = arith.constant 0 : index
    %145 = vector.load %arg8[%c0_73, %c0_74, %c0_75] : memref<8x8x384xf32, #tpu.memory_space<vmem>>, vector<8x8x384xf32>
    tpu.vector_store %arg8[%c0_73, %c0_74, %c0_75], %144 {strides = array<i32>} : memref<8x8x384xf32, #tpu.memory_space<vmem>>, vector<8x8x384xf32>,
    %cst_76 = arith.constant 0.000000e+00 : f32
    %146 = vector.broadcast %cst_76 : f32 to vector<8x48xf32>
    %c0_i32 = arith.constant 0 : i32
    %147 = arith.index_cast %c0_i32 : i32 to index
    %c0_77 = arith.constant 0 : index
    %c0_78 = arith.constant 0 : index
    %148 = vector.load %arg8[%147, %c0_77, %c0_78] : memref<8x8x384xf32, #tpu.memory_space<vmem>>, vector<1x8x384xf32>
    %149 = vector.shape_cast %148 : vector<1x8x384xf32> to vector<8x384xf32>
    %150 = arith.truncf %146 : vector<8x48xf32> to vector<8x48xbf16>
    %cst_79 = arith.constant dense<0.000000e+00> : vector<8x384xf32>
    %151 = tpu.matmul %150, %137, %cst_79 {dimension_numbers = #tpu.dot_dimension_numbers<[1], [0], [0], [1], [0, 0, 1, 1], [], []>} : vector<8x48xbf16>, vector<48x384xbf16>, vector<8x384xf32> -> vector<8x384xf32>
    %152 = vector.broadcast %139 : vector<1x384xf32> to vector<8x384xf32>
    %153 = arith.addf %151, %152 : vector<8x384xf32>
    %154 = vector.extract_strided_slice %149 {offsets = [0, 0], sizes = [8, 48], strides = [1, 1]} : vector<8x384xf32> to vector<8x48xf32>
    %155 = vector.extract_strided_slice %153 {offsets = [0, 0], sizes = [8, 48], strides = [1, 1]} : vector<8x384xf32> to vector<8x48xf32>
    %156 = arith.addf %154, %155 : vector<8x48xf32>
    %157 = arith.negf %156 : vector<8x48xf32>
    %158 = math.exp %157 : vector<8x48xf32>
    %cst_80 = arith.constant 1.000000e+00 : f32
    %159 = vector.broadcast %cst_80 : f32 to vector<8x48xf32>
    %160 = arith.addf %159, %158 : vector<8x48xf32>
    %161 = arith.divf %159, %160 : vector<8x48xf32>
    %162 = vector.extract_strided_slice %149 {offsets = [0, 128], sizes = [8, 48], strides = [1, 1]} : vector<8x384xf32> to vector<8x48xf32>
    %163 = vector.extract_strided_slice %153 {offsets = [0, 128], sizes = [8, 48], strides = [1, 1]} : vector<8x384xf32> to vector<8x48xf32>
    %164 = arith.addf %162, %163 : vector<8x48xf32>
    %165 = arith.negf %164 : vector<8x48xf32>
    %166 = math.exp %165 : vector<8x48xf32>
    %cst_81 = arith.constant 1.000000e+00 : f32
    %167 = vector.broadcast %cst_81 : f32 to vector<8x48xf32>
    %168 = arith.addf %167, %166 : vector<8x48xf32>
    %169 = arith.divf %167, %168 : vector<8x48xf32>
    %170 = vector.extract_strided_slice %149 {offsets = [0, 256], sizes = [8, 48], strides = [1, 1]} : vector<8x384xf32> to vector<8x48xf32>
    %171 = vector.extract_strided_slice %153 {offsets = [0, 256], sizes = [8, 48], strides = [1, 1]} : vector<8x384xf32> to vector<8x48xf32>
    %172 = arith.mulf %161, %171 : vector<8x48xf32>
    %173 = arith.addf %170, %172 : vector<8x48xf32>
    %174 = math.tanh %173 : vector<8x48xf32>
    %cst_82 = arith.constant 1.000000e+00 : f32
    %175 = vector.broadcast %cst_82 : f32 to vector<8x48xf32>
    %176 = arith.subf %175, %169 : vector<8x48xf32>
    %177 = arith.mulf %176, %174 : vector<8x48xf32>
    %178 = arith.mulf %169, %146 : vector<8x48xf32>
    %179 = arith.addf %177, %178 : vector<8x48xf32>
    %180 = arith.index_cast %c0_i32 : i32 to index
    %c0_83 = arith.constant 0 : index
    %c0_84 = arith.constant 0 : index
    %181 = vector.load %arg9[%180, %c0_83, %c0_84] : memref<8x8x48xf32, #tpu.memory_space<vmem>>, vector<1x8x48xf32>
    %182 = vector.shape_cast %181 : vector<1x8x48xf32> to vector<8x48xf32>
    %183 = vector.shape_cast %179 : vector<8x48xf32> to vector<1x8x48xf32>
    tpu.vector_store %arg9[%180, %c0_83, %c0_84], %183 {strides = array<i32>} : memref<8x8x48xf32, #tpu.memory_space<vmem>>, vector<1x8x48xf32>,
    %c1_i32 = arith.constant 1 : i32
    %184 = arith.index_cast %c1_i32 : i32 to index
    %c0_85 = arith.constant 0 : index
    %c0_86 = arith.constant 0 : index
    %185 = vector.load %arg8[%184, %c0_85, %c0_86] : memref<8x8x384xf32, #tpu.memory_space<vmem>>, vector<1x8x384xf32>
    %186 = vector.shape_cast %185 : vector<1x8x384xf32> to vector<8x384xf32>
    %187 = arith.truncf %179 : vector<8x48xf32> to vector<8x48xbf16>
    %cst_87 = arith.constant dense<0.000000e+00> : vector<8x384xf32>
    %188 = tpu.matmul %187, %137, %cst_87 {dimension_numbers = #tpu.dot_dimension_numbers<[1], [0], [0], [1], [0, 0, 1, 1], [], []>} : vector<8x48xbf16>, vector<48x384xbf16>, vector<8x384xf32> -> vector<8x384xf32>
    %189 = vector.broadcast %139 : vector<1x384xf32> to vector<8x384xf32>
    %190 = arith.addf %188, %189 : vector<8x384xf32>
    %191 = vector.extract_strided_slice %186 {offsets = [0, 0], sizes = [8, 48], strides = [1, 1]} : vector<8x384xf32> to vector<8x48xf32>
    %192 = vector.extract_strided_slice %190 {offsets = [0, 0], sizes = [8, 48], strides = [1, 1]} : vector<8x384xf32> to vector<8x48xf32>
    %193 = arith.addf %191, %192 : vector<8x48xf32>
    %194 = arith.negf %193 : vector<8x48xf32>
    %195 = math.exp %194 : vector<8x48xf32>
    %cst_88 = arith.constant 1.000000e+00 : f32
    %196 = vector.broadcast %cst_88 : f32 to vector<8x48xf32>
    %197 = arith.addf %196, %195 : vector<8x48xf32>
    %198 = arith.divf %196, %197 : vector<8x48xf32>
    %199 = vector.extract_strided_slice %186 {offsets = [0, 128], sizes = [8, 48], strides = [1, 1]} : vector<8x384xf32> to vector<8x48xf32>
    %200 = vector.extract_strided_slice %190 {offsets = [0, 128], sizes = [8, 48], strides = [1, 1]} : vector<8x384xf32> to vector<8x48xf32>
    %201 = arith.addf %199, %200 : vector<8x48xf32>
    %202 = arith.negf %201 : vector<8x48xf32>
    %203 = math.exp %202 : vector<8x48xf32>
    %cst_89 = arith.constant 1.000000e+00 : f32
    %204 = vector.broadcast %cst_89 : f32 to vector<8x48xf32>
    %205 = arith.addf %204, %203 : vector<8x48xf32>
    %206 = arith.divf %204, %205 : vector<8x48xf32>
    %207 = vector.extract_strided_slice %186 {offsets = [0, 256], sizes = [8, 48], strides = [1, 1]} : vector<8x384xf32> to vector<8x48xf32>
    %208 = vector.extract_strided_slice %190 {offsets = [0, 256], sizes = [8, 48], strides = [1, 1]} : vector<8x384xf32> to vector<8x48xf32>
    %209 = arith.mulf %198, %208 : vector<8x48xf32>
    %210 = arith.addf %207, %209 : vector<8x48xf32>
    %211 = math.tanh %210 : vector<8x48xf32>
    %cst_90 = arith.constant 1.000000e+00 : f32
    %212 = vector.broadcast %cst_90 : f32 to vector<8x48xf32>
    %213 = arith.subf %212, %206 : vector<8x48xf32>
    %214 = arith.mulf %213, %211 : vector<8x48xf32>
    %215 = arith.mulf %206, %179 : vector<8x48xf32>
    %216 = arith.addf %214, %215 : vector<8x48xf32>
    %217 = arith.index_cast %c1_i32 : i32 to index
    %c0_91 = arith.constant 0 : index
    %c0_92 = arith.constant 0 : index
    %218 = vector.load %arg9[%217, %c0_91, %c0_92] : memref<8x8x48xf32, #tpu.memory_space<vmem>>, vector<1x8x48xf32>
    %219 = vector.shape_cast %218 : vector<1x8x48xf32> to vector<8x48xf32>
    %220 = vector.shape_cast %216 : vector<8x48xf32> to vector<1x8x48xf32>
    tpu.vector_store %arg9[%217, %c0_91, %c0_92], %220 {strides = array<i32>} : memref<8x8x48xf32, #tpu.memory_space<vmem>>, vector<1x8x48xf32>,
    %c2_i32 = arith.constant 2 : i32
    %221 = arith.index_cast %c2_i32 : i32 to index
    %c0_93 = arith.constant 0 : index
    %c0_94 = arith.constant 0 : index
    %222 = vector.load %arg8[%221, %c0_93, %c0_94] : memref<8x8x384xf32, #tpu.memory_space<vmem>>, vector<1x8x384xf32>
    %223 = vector.shape_cast %222 : vector<1x8x384xf32> to vector<8x384xf32>
    %224 = arith.truncf %216 : vector<8x48xf32> to vector<8x48xbf16>
    %cst_95 = arith.constant dense<0.000000e+00> : vector<8x384xf32>
    %225 = tpu.matmul %224, %137, %cst_95 {dimension_numbers = #tpu.dot_dimension_numbers<[1], [0], [0], [1], [0, 0, 1, 1], [], []>} : vector<8x48xbf16>, vector<48x384xbf16>, vector<8x384xf32> -> vector<8x384xf32>
    %226 = vector.broadcast %139 : vector<1x384xf32> to vector<8x384xf32>
    %227 = arith.addf %225, %226 : vector<8x384xf32>
    %228 = vector.extract_strided_slice %223 {offsets = [0, 0], sizes = [8, 48], strides = [1, 1]} : vector<8x384xf32> to vector<8x48xf32>
    %229 = vector.extract_strided_slice %227 {offsets = [0, 0], sizes = [8, 48], strides = [1, 1]} : vector<8x384xf32> to vector<8x48xf32>
    %230 = arith.addf %228, %229 : vector<8x48xf32>
    %231 = arith.negf %230 : vector<8x48xf32>
    %232 = math.exp %231 : vector<8x48xf32>
    %cst_96 = arith.constant 1.000000e+00 : f32
    %233 = vector.broadcast %cst_96 : f32 to vector<8x48xf32>
    %234 = arith.addf %233, %232 : vector<8x48xf32>
    %235 = arith.divf %233, %234 : vector<8x48xf32>
    %236 = vector.extract_strided_slice %223 {offsets = [0, 128], sizes = [8, 48], strides = [1, 1]} : vector<8x384xf32> to vector<8x48xf32>
    %237 = vector.extract_strided_slice %227 {offsets = [0, 128], sizes = [8, 48], strides = [1, 1]} : vector<8x384xf32> to vector<8x48xf32>
    %238 = arith.addf %236, %237 : vector<8x48xf32>
    %239 = arith.negf %238 : vector<8x48xf32>
    %240 = math.exp %239 : vector<8x48xf32>
    %cst_97 = arith.constant 1.000000e+00 : f32
    %241 = vector.broadcast %cst_97 : f32 to vector<8x48xf32>
    %242 = arith.addf %241, %240 : vector<8x48xf32>
    %243 = arith.divf %241, %242 : vector<8x48xf32>
    %244 = vector.extract_strided_slice %223 {offsets = [0, 256], sizes = [8, 48], strides = [1, 1]} : vector<8x384xf32> to vector<8x48xf32>
    %245 = vector.extract_strided_slice %227 {offsets = [0, 256], sizes = [8, 48], strides = [1, 1]} : vector<8x384xf32> to vector<8x48xf32>
    %246 = arith.mulf %235, %245 : vector<8x48xf32>
    %247 = arith.addf %244, %246 : vector<8x48xf32>
    %248 = math.tanh %247 : vector<8x48xf32>
    %cst_98 = arith.constant 1.000000e+00 : f32
    %249 = vector.broadcast %cst_98 : f32 to vector<8x48xf32>
    %250 = arith.subf %249, %243 : vector<8x48xf32>
    %251 = arith.mulf %250, %248 : vector<8x48xf32>
    %252 = arith.mulf %243, %216 : vector<8x48xf32>
    %253 = arith.addf %251, %252 : vector<8x48xf32>
    %254 = arith.index_cast %c2_i32 : i32 to index
    %c0_99 = arith.constant 0 : index
    %c0_100 = arith.constant 0 : index
    %255 = vector.load %arg9[%254, %c0_99, %c0_100] : memref<8x8x48xf32, #tpu.memory_space<vmem>>, vector<1x8x48xf32>
    %256 = vector.shape_cast %255 : vector<1x8x48xf32> to vector<8x48xf32>
    %257 = vector.shape_cast %253 : vector<8x48xf32> to vector<1x8x48xf32>
    tpu.vector_store %arg9[%254, %c0_99, %c0_100], %257 {strides = array<i32>} : memref<8x8x48xf32, #tpu.memory_space<vmem>>, vector<1x8x48xf32>,
    %c3_i32 = arith.constant 3 : i32
    %258 = arith.index_cast %c3_i32 : i32 to index
    %c0_101 = arith.constant 0 : index
    %c0_102 = arith.constant 0 : index
    %259 = vector.load %arg8[%258, %c0_101, %c0_102] : memref<8x8x384xf32, #tpu.memory_space<vmem>>, vector<1x8x384xf32>
    %260 = vector.shape_cast %259 : vector<1x8x384xf32> to vector<8x384xf32>
    %261 = arith.truncf %253 : vector<8x48xf32> to vector<8x48xbf16>
    %cst_103 = arith.constant dense<0.000000e+00> : vector<8x384xf32>
    %262 = tpu.matmul %261, %137, %cst_103 {dimension_numbers = #tpu.dot_dimension_numbers<[1], [0], [0], [1], [0, 0, 1, 1], [], []>} : vector<8x48xbf16>, vector<48x384xbf16>, vector<8x384xf32> -> vector<8x384xf32>
    %263 = vector.broadcast %139 : vector<1x384xf32> to vector<8x384xf32>
    %264 = arith.addf %262, %263 : vector<8x384xf32>
    %265 = vector.extract_strided_slice %260 {offsets = [0, 0], sizes = [8, 48], strides = [1, 1]} : vector<8x384xf32> to vector<8x48xf32>
    %266 = vector.extract_strided_slice %264 {offsets = [0, 0], sizes = [8, 48], strides = [1, 1]} : vector<8x384xf32> to vector<8x48xf32>
    %267 = arith.addf %265, %266 : vector<8x48xf32>
    %268 = arith.negf %267 : vector<8x48xf32>
    %269 = math.exp %268 : vector<8x48xf32>
    %cst_104 = arith.constant 1.000000e+00 : f32
    %270 = vector.broadcast %cst_104 : f32 to vector<8x48xf32>
    %271 = arith.addf %270, %269 : vector<8x48xf32>
    %272 = arith.divf %270, %271 : vector<8x48xf32>
    %273 = vector.extract_strided_slice %260 {offsets = [0, 128], sizes = [8, 48], strides = [1, 1]} : vector<8x384xf32> to vector<8x48xf32>
    %274 = vector.extract_strided_slice %264 {offsets = [0, 128], sizes = [8, 48], strides = [1, 1]} : vector<8x384xf32> to vector<8x48xf32>
    %275 = arith.addf %273, %274 : vector<8x48xf32>
    %276 = arith.negf %275 : vector<8x48xf32>
    %277 = math.exp %276 : vector<8x48xf32>
    %cst_105 = arith.constant 1.000000e+00 : f32
    %278 = vector.broadcast %cst_105 : f32 to vector<8x48xf32>
    %279 = arith.addf %278, %277 : vector<8x48xf32>
    %280 = arith.divf %278, %279 : vector<8x48xf32>
    %281 = vector.extract_strided_slice %260 {offsets = [0, 256], sizes = [8, 48], strides = [1, 1]} : vector<8x384xf32> to vector<8x48xf32>
    %282 = vector.extract_strided_slice %264 {offsets = [0, 256], sizes = [8, 48], strides = [1, 1]} : vector<8x384xf32> to vector<8x48xf32>
    %283 = arith.mulf %272, %282 : vector<8x48xf32>
    %284 = arith.addf %281, %283 : vector<8x48xf32>
    %285 = math.tanh %284 : vector<8x48xf32>
    %cst_106 = arith.constant 1.000000e+00 : f32
    %286 = vector.broadcast %cst_106 : f32 to vector<8x48xf32>
    %287 = arith.subf %286, %280 : vector<8x48xf32>
    %288 = arith.mulf %287, %285 : vector<8x48xf32>
    %289 = arith.mulf %280, %253 : vector<8x48xf32>
    %290 = arith.addf %288, %289 : vector<8x48xf32>
    %291 = arith.index_cast %c3_i32 : i32 to index
    %c0_107 = arith.constant 0 : index
    %c0_108 = arith.constant 0 : index
    %292 = vector.load %arg9[%291, %c0_107, %c0_108] : memref<8x8x48xf32, #tpu.memory_space<vmem>>, vector<1x8x48xf32>
    %293 = vector.shape_cast %292 : vector<1x8x48xf32> to vector<8x48xf32>
    %294 = vector.shape_cast %290 : vector<8x48xf32> to vector<1x8x48xf32>
    tpu.vector_store %arg9[%291, %c0_107, %c0_108], %294 {strides = array<i32>} : memref<8x8x48xf32, #tpu.memory_space<vmem>>, vector<1x8x48xf32>,
    %c4_i32 = arith.constant 4 : i32
    %295 = arith.index_cast %c4_i32 : i32 to index
    %c0_109 = arith.constant 0 : index
    %c0_110 = arith.constant 0 : index
    %296 = vector.load %arg8[%295, %c0_109, %c0_110] : memref<8x8x384xf32, #tpu.memory_space<vmem>>, vector<1x8x384xf32>
    %297 = vector.shape_cast %296 : vector<1x8x384xf32> to vector<8x384xf32>
    %298 = arith.truncf %290 : vector<8x48xf32> to vector<8x48xbf16>
    %cst_111 = arith.constant dense<0.000000e+00> : vector<8x384xf32>
    %299 = tpu.matmul %298, %137, %cst_111 {dimension_numbers = #tpu.dot_dimension_numbers<[1], [0], [0], [1], [0, 0, 1, 1], [], []>} : vector<8x48xbf16>, vector<48x384xbf16>, vector<8x384xf32> -> vector<8x384xf32>
    %300 = vector.broadcast %139 : vector<1x384xf32> to vector<8x384xf32>
    %301 = arith.addf %299, %300 : vector<8x384xf32>
    %302 = vector.extract_strided_slice %297 {offsets = [0, 0], sizes = [8, 48], strides = [1, 1]} : vector<8x384xf32> to vector<8x48xf32>
    %303 = vector.extract_strided_slice %301 {offsets = [0, 0], sizes = [8, 48], strides = [1, 1]} : vector<8x384xf32> to vector<8x48xf32>
    %304 = arith.addf %302, %303 : vector<8x48xf32>
    %305 = arith.negf %304 : vector<8x48xf32>
    %306 = math.exp %305 : vector<8x48xf32>
    %cst_112 = arith.constant 1.000000e+00 : f32
    %307 = vector.broadcast %cst_112 : f32 to vector<8x48xf32>
    %308 = arith.addf %307, %306 : vector<8x48xf32>
    %309 = arith.divf %307, %308 : vector<8x48xf32>
    %310 = vector.extract_strided_slice %297 {offsets = [0, 128], sizes = [8, 48], strides = [1, 1]} : vector<8x384xf32> to vector<8x48xf32>
    %311 = vector.extract_strided_slice %301 {offsets = [0, 128], sizes = [8, 48], strides = [1, 1]} : vector<8x384xf32> to vector<8x48xf32>
    %312 = arith.addf %310, %311 : vector<8x48xf32>
    %313 = arith.negf %312 : vector<8x48xf32>
    %314 = math.exp %313 : vector<8x48xf32>
    %cst_113 = arith.constant 1.000000e+00 : f32
    %315 = vector.broadcast %cst_113 : f32 to vector<8x48xf32>
    %316 = arith.addf %315, %314 : vector<8x48xf32>
    %317 = arith.divf %315, %316 : vector<8x48xf32>
    %318 = vector.extract_strided_slice %297 {offsets = [0, 256], sizes = [8, 48], strides = [1, 1]} : vector<8x384xf32> to vector<8x48xf32>
    %319 = vector.extract_strided_slice %301 {offsets = [0, 256], sizes = [8, 48], strides = [1, 1]} : vector<8x384xf32> to vector<8x48xf32>
    %320 = arith.mulf %309, %319 : vector<8x48xf32>
    %321 = arith.addf %318, %320 : vector<8x48xf32>
    %322 = math.tanh %321 : vector<8x48xf32>
    %cst_114 = arith.constant 1.000000e+00 : f32
    %323 = vector.broadcast %cst_114 : f32 to vector<8x48xf32>
    %324 = arith.subf %323, %317 : vector<8x48xf32>
    %325 = arith.mulf %324, %322 : vector<8x48xf32>
    %326 = arith.mulf %317, %290 : vector<8x48xf32>
    %327 = arith.addf %325, %326 : vector<8x48xf32>
    %328 = arith.index_cast %c4_i32 : i32 to index
    %c0_115 = arith.constant 0 : index
    %c0_116 = arith.constant 0 : index
    %329 = vector.load %arg9[%328, %c0_115, %c0_116] : memref<8x8x48xf32, #tpu.memory_space<vmem>>, vector<1x8x48xf32>
    %330 = vector.shape_cast %329 : vector<1x8x48xf32> to vector<8x48xf32>
    %331 = vector.shape_cast %327 : vector<8x48xf32> to vector<1x8x48xf32>
    tpu.vector_store %arg9[%328, %c0_115, %c0_116], %331 {strides = array<i32>} : memref<8x8x48xf32, #tpu.memory_space<vmem>>, vector<1x8x48xf32>,
    %c5_i32 = arith.constant 5 : i32
    %332 = arith.index_cast %c5_i32 : i32 to index
    %c0_117 = arith.constant 0 : index
    %c0_118 = arith.constant 0 : index
    %333 = vector.load %arg8[%332, %c0_117, %c0_118] : memref<8x8x384xf32, #tpu.memory_space<vmem>>, vector<1x8x384xf32>
    %334 = vector.shape_cast %333 : vector<1x8x384xf32> to vector<8x384xf32>
    %335 = arith.truncf %327 : vector<8x48xf32> to vector<8x48xbf16>
    %cst_119 = arith.constant dense<0.000000e+00> : vector<8x384xf32>
    %336 = tpu.matmul %335, %137, %cst_119 {dimension_numbers = #tpu.dot_dimension_numbers<[1], [0], [0], [1], [0, 0, 1, 1], [], []>} : vector<8x48xbf16>, vector<48x384xbf16>, vector<8x384xf32> -> vector<8x384xf32>
    %337 = vector.broadcast %139 : vector<1x384xf32> to vector<8x384xf32>
    %338 = arith.addf %336, %337 : vector<8x384xf32>
    %339 = vector.extract_strided_slice %334 {offsets = [0, 0], sizes = [8, 48], strides = [1, 1]} : vector<8x384xf32> to vector<8x48xf32>
    %340 = vector.extract_strided_slice %338 {offsets = [0, 0], sizes = [8, 48], strides = [1, 1]} : vector<8x384xf32> to vector<8x48xf32>
    %341 = arith.addf %339, %340 : vector<8x48xf32>
    %342 = arith.negf %341 : vector<8x48xf32>
    %343 = math.exp %342 : vector<8x48xf32>
    %cst_120 = arith.constant 1.000000e+00 : f32
    %344 = vector.broadcast %cst_120 : f32 to vector<8x48xf32>
    %345 = arith.addf %344, %343 : vector<8x48xf32>
    %346 = arith.divf %344, %345 : vector<8x48xf32>
    %347 = vector.extract_strided_slice %334 {offsets = [0, 128], sizes = [8, 48], strides = [1, 1]} : vector<8x384xf32> to vector<8x48xf32>
    %348 = vector.extract_strided_slice %338 {offsets = [0, 128], sizes = [8, 48], strides = [1, 1]} : vector<8x384xf32> to vector<8x48xf32>
    %349 = arith.addf %347, %348 : vector<8x48xf32>
    %350 = arith.negf %349 : vector<8x48xf32>
    %351 = math.exp %350 : vector<8x48xf32>
    %cst_121 = arith.constant 1.000000e+00 : f32
    %352 = vector.broadcast %cst_121 : f32 to vector<8x48xf32>
    %353 = arith.addf %352, %351 : vector<8x48xf32>
    %354 = arith.divf %352, %353 : vector<8x48xf32>
    %355 = vector.extract_strided_slice %334 {offsets = [0, 256], sizes = [8, 48], strides = [1, 1]} : vector<8x384xf32> to vector<8x48xf32>
    %356 = vector.extract_strided_slice %338 {offsets = [0, 256], sizes = [8, 48], strides = [1, 1]} : vector<8x384xf32> to vector<8x48xf32>
    %357 = arith.mulf %346, %356 : vector<8x48xf32>
    %358 = arith.addf %355, %357 : vector<8x48xf32>
    %359 = math.tanh %358 : vector<8x48xf32>
    %cst_122 = arith.constant 1.000000e+00 : f32
    %360 = vector.broadcast %cst_122 : f32 to vector<8x48xf32>
    %361 = arith.subf %360, %354 : vector<8x48xf32>
    %362 = arith.mulf %361, %359 : vector<8x48xf32>
    %363 = arith.mulf %354, %327 : vector<8x48xf32>
    %364 = arith.addf %362, %363 : vector<8x48xf32>
    %365 = arith.index_cast %c5_i32 : i32 to index
    %c0_123 = arith.constant 0 : index
    %c0_124 = arith.constant 0 : index
    %366 = vector.load %arg9[%365, %c0_123, %c0_124] : memref<8x8x48xf32, #tpu.memory_space<vmem>>, vector<1x8x48xf32>
    %367 = vector.shape_cast %366 : vector<1x8x48xf32> to vector<8x48xf32>
    %368 = vector.shape_cast %364 : vector<8x48xf32> to vector<1x8x48xf32>
    tpu.vector_store %arg9[%365, %c0_123, %c0_124], %368 {strides = array<i32>} : memref<8x8x48xf32, #tpu.memory_space<vmem>>, vector<1x8x48xf32>,
    %c6_i32 = arith.constant 6 : i32
    %369 = arith.index_cast %c6_i32 : i32 to index
    %c0_125 = arith.constant 0 : index
    %c0_126 = arith.constant 0 : index
    %370 = vector.load %arg8[%369, %c0_125, %c0_126] : memref<8x8x384xf32, #tpu.memory_space<vmem>>, vector<1x8x384xf32>
    %371 = vector.shape_cast %370 : vector<1x8x384xf32> to vector<8x384xf32>
    %372 = arith.truncf %364 : vector<8x48xf32> to vector<8x48xbf16>
    %cst_127 = arith.constant dense<0.000000e+00> : vector<8x384xf32>
    %373 = tpu.matmul %372, %137, %cst_127 {dimension_numbers = #tpu.dot_dimension_numbers<[1], [0], [0], [1], [0, 0, 1, 1], [], []>} : vector<8x48xbf16>, vector<48x384xbf16>, vector<8x384xf32> -> vector<8x384xf32>
    %374 = vector.broadcast %139 : vector<1x384xf32> to vector<8x384xf32>
    %375 = arith.addf %373, %374 : vector<8x384xf32>
    %376 = vector.extract_strided_slice %371 {offsets = [0, 0], sizes = [8, 48], strides = [1, 1]} : vector<8x384xf32> to vector<8x48xf32>
    %377 = vector.extract_strided_slice %375 {offsets = [0, 0], sizes = [8, 48], strides = [1, 1]} : vector<8x384xf32> to vector<8x48xf32>
    %378 = arith.addf %376, %377 : vector<8x48xf32>
    %379 = arith.negf %378 : vector<8x48xf32>
    %380 = math.exp %379 : vector<8x48xf32>
    %cst_128 = arith.constant 1.000000e+00 : f32
    %381 = vector.broadcast %cst_128 : f32 to vector<8x48xf32>
    %382 = arith.addf %381, %380 : vector<8x48xf32>
    %383 = arith.divf %381, %382 : vector<8x48xf32>
    %384 = vector.extract_strided_slice %371 {offsets = [0, 128], sizes = [8, 48], strides = [1, 1]} : vector<8x384xf32> to vector<8x48xf32>
    %385 = vector.extract_strided_slice %375 {offsets = [0, 128], sizes = [8, 48], strides = [1, 1]} : vector<8x384xf32> to vector<8x48xf32>
    %386 = arith.addf %384, %385 : vector<8x48xf32>
    %387 = arith.negf %386 : vector<8x48xf32>
    %388 = math.exp %387 : vector<8x48xf32>
    %cst_129 = arith.constant 1.000000e+00 : f32
    %389 = vector.broadcast %cst_129 : f32 to vector<8x48xf32>
    %390 = arith.addf %389, %388 : vector<8x48xf32>
    %391 = arith.divf %389, %390 : vector<8x48xf32>
    %392 = vector.extract_strided_slice %371 {offsets = [0, 256], sizes = [8, 48], strides = [1, 1]} : vector<8x384xf32> to vector<8x48xf32>
    %393 = vector.extract_strided_slice %375 {offsets = [0, 256], sizes = [8, 48], strides = [1, 1]} : vector<8x384xf32> to vector<8x48xf32>
    %394 = arith.mulf %383, %393 : vector<8x48xf32>
    %395 = arith.addf %392, %394 : vector<8x48xf32>
    %396 = math.tanh %395 : vector<8x48xf32>
    %cst_130 = arith.constant 1.000000e+00 : f32
    %397 = vector.broadcast %cst_130 : f32 to vector<8x48xf32>
    %398 = arith.subf %397, %391 : vector<8x48xf32>
    %399 = arith.mulf %398, %396 : vector<8x48xf32>
    %400 = arith.mulf %391, %364 : vector<8x48xf32>
    %401 = arith.addf %399, %400 : vector<8x48xf32>
    %402 = arith.index_cast %c6_i32 : i32 to index
    %c0_131 = arith.constant 0 : index
    %c0_132 = arith.constant 0 : index
    %403 = vector.load %arg9[%402, %c0_131, %c0_132] : memref<8x8x48xf32, #tpu.memory_space<vmem>>, vector<1x8x48xf32>
    %404 = vector.shape_cast %403 : vector<1x8x48xf32> to vector<8x48xf32>
    %405 = vector.shape_cast %401 : vector<8x48xf32> to vector<1x8x48xf32>
    tpu.vector_store %arg9[%402, %c0_131, %c0_132], %405 {strides = array<i32>} : memref<8x8x48xf32, #tpu.memory_space<vmem>>, vector<1x8x48xf32>,
    %c7_i32 = arith.constant 7 : i32
    %406 = arith.index_cast %c7_i32 : i32 to index
    %c0_133 = arith.constant 0 : index
    %c0_134 = arith.constant 0 : index
    %407 = vector.load %arg8[%406, %c0_133, %c0_134] : memref<8x8x384xf32, #tpu.memory_space<vmem>>, vector<1x8x384xf32>
    %408 = vector.shape_cast %407 : vector<1x8x384xf32> to vector<8x384xf32>
    %409 = arith.truncf %401 : vector<8x48xf32> to vector<8x48xbf16>
    %cst_135 = arith.constant dense<0.000000e+00> : vector<8x384xf32>
    %410 = tpu.matmul %409, %137, %cst_135 {dimension_numbers = #tpu.dot_dimension_numbers<[1], [0], [0], [1], [0, 0, 1, 1], [], []>} : vector<8x48xbf16>, vector<48x384xbf16>, vector<8x384xf32> -> vector<8x384xf32>
    %411 = vector.broadcast %139 : vector<1x384xf32> to vector<8x384xf32>
    %412 = arith.addf %410, %411 : vector<8x384xf32>
    %413 = vector.extract_strided_slice %408 {offsets = [0, 0], sizes = [8, 48], strides = [1, 1]} : vector<8x384xf32> to vector<8x48xf32>
    %414 = vector.extract_strided_slice %412 {offsets = [0, 0], sizes = [8, 48], strides = [1, 1]} : vector<8x384xf32> to vector<8x48xf32>
    %415 = arith.addf %413, %414 : vector<8x48xf32>
    %416 = arith.negf %415 : vector<8x48xf32>
    %417 = math.exp %416 : vector<8x48xf32>
    %cst_136 = arith.constant 1.000000e+00 : f32
    %418 = vector.broadcast %cst_136 : f32 to vector<8x48xf32>
    %419 = arith.addf %418, %417 : vector<8x48xf32>
    %420 = arith.divf %418, %419 : vector<8x48xf32>
    %421 = vector.extract_strided_slice %408 {offsets = [0, 128], sizes = [8, 48], strides = [1, 1]} : vector<8x384xf32> to vector<8x48xf32>
    %422 = vector.extract_strided_slice %412 {offsets = [0, 128], sizes = [8, 48], strides = [1, 1]} : vector<8x384xf32> to vector<8x48xf32>
    %423 = arith.addf %421, %422 : vector<8x48xf32>
    %424 = arith.negf %423 : vector<8x48xf32>
    %425 = math.exp %424 : vector<8x48xf32>
    %cst_137 = arith.constant 1.000000e+00 : f32
    %426 = vector.broadcast %cst_137 : f32 to vector<8x48xf32>
    %427 = arith.addf %426, %425 : vector<8x48xf32>
    %428 = arith.divf %426, %427 : vector<8x48xf32>
    %429 = vector.extract_strided_slice %408 {offsets = [0, 256], sizes = [8, 48], strides = [1, 1]} : vector<8x384xf32> to vector<8x48xf32>
    %430 = vector.extract_strided_slice %412 {offsets = [0, 256], sizes = [8, 48], strides = [1, 1]} : vector<8x384xf32> to vector<8x48xf32>
    %431 = arith.mulf %420, %430 : vector<8x48xf32>
    %432 = arith.addf %429, %431 : vector<8x48xf32>
    %433 = math.tanh %432 : vector<8x48xf32>
    %cst_138 = arith.constant 1.000000e+00 : f32
    %434 = vector.broadcast %cst_138 : f32 to vector<8x48xf32>
    %435 = arith.subf %434, %428 : vector<8x48xf32>
    %436 = arith.mulf %435, %433 : vector<8x48xf32>
    %437 = arith.mulf %428, %401 : vector<8x48xf32>
    %438 = arith.addf %436, %437 : vector<8x48xf32>
    %439 = arith.index_cast %c7_i32 : i32 to index
    %c0_139 = arith.constant 0 : index
    %c0_140 = arith.constant 0 : index
    %440 = vector.load %arg9[%439, %c0_139, %c0_140] : memref<8x8x48xf32, #tpu.memory_space<vmem>>, vector<1x8x48xf32>
    %441 = vector.shape_cast %440 : vector<1x8x48xf32> to vector<8x48xf32>
    %442 = vector.shape_cast %438 : vector<8x48xf32> to vector<1x8x48xf32>
    tpu.vector_store %arg9[%439, %c0_139, %c0_140], %442 {strides = array<i32>} : memref<8x8x48xf32, #tpu.memory_space<vmem>>, vector<1x8x48xf32>,
    %c8_i32 = arith.constant 8 : i32
    %c0_141 = arith.constant 0 : index
    %c0_142 = arith.constant 0 : index
    %c0_143 = arith.constant 0 : index
    %443 = vector.load %arg9[%c0_141, %c0_142, %c0_143] : memref<8x8x48xf32, #tpu.memory_space<vmem>>, vector<8x8x48xf32>
    %444 = vector.shape_cast %443 : vector<8x8x48xf32> to vector<64x48xf32>
    %c2_144 = arith.constant 2 : index
    %c0_145 = arith.constant 0 : index
    %c0_146 = arith.constant 0 : index
    %445 = vector.load %arg5[%c2_144, %c0_145, %c0_146] : memref<4x48x384xbf16, #tpu.memory_space<vmem>>, vector<1x48x384xbf16>
    %446 = vector.shape_cast %445 : vector<1x48x384xbf16> to vector<48x384xbf16>
    %c3_147 = arith.constant 3 : index
    %c0_148 = arith.constant 0 : index
    %c0_149 = arith.constant 0 : index
    %447 = vector.load %arg5[%c3_147, %c0_148, %c0_149] : memref<4x48x384xbf16, #tpu.memory_space<vmem>>, vector<1x48x384xbf16>
    %448 = vector.shape_cast %447 : vector<1x48x384xbf16> to vector<48x384xbf16>
    %c2_150 = arith.constant 2 : index
    %c0_151 = arith.constant 0 : index
    %449 = vector.load %arg6[%c2_150, %c0_151] : memref<4x384xf32, #tpu.memory_space<vmem>>, vector<1x384xf32>
    %c3_152 = arith.constant 3 : index
    %c0_153 = arith.constant 0 : index
    %450 = vector.load %arg6[%c3_152, %c0_153] : memref<4x384xf32, #tpu.memory_space<vmem>>, vector<1x384xf32>
    %451 = arith.truncf %444 : vector<64x48xf32> to vector<64x48xbf16>
    %cst_154 = arith.constant dense<0.000000e+00> : vector<64x384xf32>
    %452 = tpu.matmul %451, %446, %cst_154 {dimension_numbers = #tpu.dot_dimension_numbers<[1], [0], [0], [1], [0, 0, 1, 1], [], []>} : vector<64x48xbf16>, vector<48x384xbf16>, vector<64x384xf32> -> vector<64x384xf32>
    %453 = vector.broadcast %449 : vector<1x384xf32> to vector<64x384xf32>
    %454 = arith.addf %452, %453 : vector<64x384xf32>
    %455 = vector.shape_cast %454 : vector<64x384xf32> to vector<8x8x384xf32>
    %c0_155 = arith.constant 0 : index
    %c0_156 = arith.constant 0 : index
    %c0_157 = arith.constant 0 : index
    %456 = vector.load %arg8[%c0_155, %c0_156, %c0_157] : memref<8x8x384xf32, #tpu.memory_space<vmem>>, vector<8x8x384xf32>
    tpu.vector_store %arg8[%c0_155, %c0_156, %c0_157], %455 {strides = array<i32>} : memref<8x8x384xf32, #tpu.memory_space<vmem>>, vector<8x8x384xf32>,
    %cst_158 = arith.constant 0.000000e+00 : f32
    %457 = vector.broadcast %cst_158 : f32 to vector<8x48xf32>
    %c0_i32_159 = arith.constant 0 : i32
    %458 = arith.index_cast %c0_i32_159 : i32 to index
    %c0_160 = arith.constant 0 : index
    %c0_161 = arith.constant 0 : index
    %459 = vector.load %arg8[%458, %c0_160, %c0_161] : memref<8x8x384xf32, #tpu.memory_space<vmem>>, vector<1x8x384xf32>
    %460 = vector.shape_cast %459 : vector<1x8x384xf32> to vector<8x384xf32>
    %461 = arith.truncf %457 : vector<8x48xf32> to vector<8x48xbf16>
    %cst_162 = arith.constant dense<0.000000e+00> : vector<8x384xf32>
    %462 = tpu.matmul %461, %448, %cst_162 {dimension_numbers = #tpu.dot_dimension_numbers<[1], [0], [0], [1], [0, 0, 1, 1], [], []>} : vector<8x48xbf16>, vector<48x384xbf16>, vector<8x384xf32> -> vector<8x384xf32>
    %463 = vector.broadcast %450 : vector<1x384xf32> to vector<8x384xf32>
    %464 = arith.addf %462, %463 : vector<8x384xf32>
    %465 = vector.extract_strided_slice %460 {offsets = [0, 0], sizes = [8, 48], strides = [1, 1]} : vector<8x384xf32> to vector<8x48xf32>
    %466 = vector.extract_strided_slice %464 {offsets = [0, 0], sizes = [8, 48], strides = [1, 1]} : vector<8x384xf32> to vector<8x48xf32>
    %467 = arith.addf %465, %466 : vector<8x48xf32>
    %468 = arith.negf %467 : vector<8x48xf32>
    %469 = math.exp %468 : vector<8x48xf32>
    %cst_163 = arith.constant 1.000000e+00 : f32
    %470 = vector.broadcast %cst_163 : f32 to vector<8x48xf32>
    %471 = arith.addf %470, %469 : vector<8x48xf32>
    %472 = arith.divf %470, %471 : vector<8x48xf32>
    %473 = vector.extract_strided_slice %460 {offsets = [0, 128], sizes = [8, 48], strides = [1, 1]} : vector<8x384xf32> to vector<8x48xf32>
    %474 = vector.extract_strided_slice %464 {offsets = [0, 128], sizes = [8, 48], strides = [1, 1]} : vector<8x384xf32> to vector<8x48xf32>
    %475 = arith.addf %473, %474 : vector<8x48xf32>
    %476 = arith.negf %475 : vector<8x48xf32>
    %477 = math.exp %476 : vector<8x48xf32>
    %cst_164 = arith.constant 1.000000e+00 : f32
    %478 = vector.broadcast %cst_164 : f32 to vector<8x48xf32>
    %479 = arith.addf %478, %477 : vector<8x48xf32>
    %480 = arith.divf %478, %479 : vector<8x48xf32>
    %481 = vector.extract_strided_slice %460 {offsets = [0, 256], sizes = [8, 48], strides = [1, 1]} : vector<8x384xf32> to vector<8x48xf32>
    %482 = vector.extract_strided_slice %464 {offsets = [0, 256], sizes = [8, 48], strides = [1, 1]} : vector<8x384xf32> to vector<8x48xf32>
    %483 = arith.mulf %472, %482 : vector<8x48xf32>
    %484 = arith.addf %481, %483 : vector<8x48xf32>
    %485 = math.tanh %484 : vector<8x48xf32>
    %cst_165 = arith.constant 1.000000e+00 : f32
    %486 = vector.broadcast %cst_165 : f32 to vector<8x48xf32>
    %487 = arith.subf %486, %480 : vector<8x48xf32>
    %488 = arith.mulf %487, %485 : vector<8x48xf32>
    %489 = arith.mulf %480, %457 : vector<8x48xf32>
    %490 = arith.addf %488, %489 : vector<8x48xf32>
    %491 = arith.index_cast %c0_i32_159 : i32 to index
    %c0_166 = arith.constant 0 : index
    %c0_167 = arith.constant 0 : index
    %492 = vector.load %arg9[%491, %c0_166, %c0_167] : memref<8x8x48xf32, #tpu.memory_space<vmem>>, vector<1x8x48xf32>
    %493 = vector.shape_cast %492 : vector<1x8x48xf32> to vector<8x48xf32>
    %494 = vector.shape_cast %490 : vector<8x48xf32> to vector<1x8x48xf32>
    tpu.vector_store %arg9[%491, %c0_166, %c0_167], %494 {strides = array<i32>} : memref<8x8x48xf32, #tpu.memory_space<vmem>>, vector<1x8x48xf32>,
    %c1_i32_168 = arith.constant 1 : i32
    %495 = arith.index_cast %c1_i32_168 : i32 to index
    %c0_169 = arith.constant 0 : index
    %c0_170 = arith.constant 0 : index
    %496 = vector.load %arg8[%495, %c0_169, %c0_170] : memref<8x8x384xf32, #tpu.memory_space<vmem>>, vector<1x8x384xf32>
    %497 = vector.shape_cast %496 : vector<1x8x384xf32> to vector<8x384xf32>
    %498 = arith.truncf %490 : vector<8x48xf32> to vector<8x48xbf16>
    %cst_171 = arith.constant dense<0.000000e+00> : vector<8x384xf32>
    %499 = tpu.matmul %498, %448, %cst_171 {dimension_numbers = #tpu.dot_dimension_numbers<[1], [0], [0], [1], [0, 0, 1, 1], [], []>} : vector<8x48xbf16>, vector<48x384xbf16>, vector<8x384xf32> -> vector<8x384xf32>
    %500 = vector.broadcast %450 : vector<1x384xf32> to vector<8x384xf32>
    %501 = arith.addf %499, %500 : vector<8x384xf32>
    %502 = vector.extract_strided_slice %497 {offsets = [0, 0], sizes = [8, 48], strides = [1, 1]} : vector<8x384xf32> to vector<8x48xf32>
    %503 = vector.extract_strided_slice %501 {offsets = [0, 0], sizes = [8, 48], strides = [1, 1]} : vector<8x384xf32> to vector<8x48xf32>
    %504 = arith.addf %502, %503 : vector<8x48xf32>
    %505 = arith.negf %504 : vector<8x48xf32>
    %506 = math.exp %505 : vector<8x48xf32>
    %cst_172 = arith.constant 1.000000e+00 : f32
    %507 = vector.broadcast %cst_172 : f32 to vector<8x48xf32>
    %508 = arith.addf %507, %506 : vector<8x48xf32>
    %509 = arith.divf %507, %508 : vector<8x48xf32>
    %510 = vector.extract_strided_slice %497 {offsets = [0, 128], sizes = [8, 48], strides = [1, 1]} : vector<8x384xf32> to vector<8x48xf32>
    %511 = vector.extract_strided_slice %501 {offsets = [0, 128], sizes = [8, 48], strides = [1, 1]} : vector<8x384xf32> to vector<8x48xf32>
    %512 = arith.addf %510, %511 : vector<8x48xf32>
    %513 = arith.negf %512 : vector<8x48xf32>
    %514 = math.exp %513 : vector<8x48xf32>
    %cst_173 = arith.constant 1.000000e+00 : f32
    %515 = vector.broadcast %cst_173 : f32 to vector<8x48xf32>
    %516 = arith.addf %515, %514 : vector<8x48xf32>
    %517 = arith.divf %515, %516 : vector<8x48xf32>
    %518 = vector.extract_strided_slice %497 {offsets = [0, 256], sizes = [8, 48], strides = [1, 1]} : vector<8x384xf32> to vector<8x48xf32>
    %519 = vector.extract_strided_slice %501 {offsets = [0, 256], sizes = [8, 48], strides = [1, 1]} : vector<8x384xf32> to vector<8x48xf32>
    %520 = arith.mulf %509, %519 : vector<8x48xf32>
    %521 = arith.addf %518, %520 : vector<8x48xf32>
    %522 = math.tanh %521 : vector<8x48xf32>
    %cst_174 = arith.constant 1.000000e+00 : f32
    %523 = vector.broadcast %cst_174 : f32 to vector<8x48xf32>
    %524 = arith.subf %523, %517 : vector<8x48xf32>
    %525 = arith.mulf %524, %522 : vector<8x48xf32>
    %526 = arith.mulf %517, %490 : vector<8x48xf32>
    %527 = arith.addf %525, %526 : vector<8x48xf32>
    %528 = arith.index_cast %c1_i32_168 : i32 to index
    %c0_175 = arith.constant 0 : index
    %c0_176 = arith.constant 0 : index
    %529 = vector.load %arg9[%528, %c0_175, %c0_176] : memref<8x8x48xf32, #tpu.memory_space<vmem>>, vector<1x8x48xf32>
    %530 = vector.shape_cast %529 : vector<1x8x48xf32> to vector<8x48xf32>
    %531 = vector.shape_cast %527 : vector<8x48xf32> to vector<1x8x48xf32>
    tpu.vector_store %arg9[%528, %c0_175, %c0_176], %531 {strides = array<i32>} : memref<8x8x48xf32, #tpu.memory_space<vmem>>, vector<1x8x48xf32>,
    %c2_i32_177 = arith.constant 2 : i32
    %532 = arith.index_cast %c2_i32_177 : i32 to index
    %c0_178 = arith.constant 0 : index
    %c0_179 = arith.constant 0 : index
    %533 = vector.load %arg8[%532, %c0_178, %c0_179] : memref<8x8x384xf32, #tpu.memory_space<vmem>>, vector<1x8x384xf32>
    %534 = vector.shape_cast %533 : vector<1x8x384xf32> to vector<8x384xf32>
    %535 = arith.truncf %527 : vector<8x48xf32> to vector<8x48xbf16>
    %cst_180 = arith.constant dense<0.000000e+00> : vector<8x384xf32>
    %536 = tpu.matmul %535, %448, %cst_180 {dimension_numbers = #tpu.dot_dimension_numbers<[1], [0], [0], [1], [0, 0, 1, 1], [], []>} : vector<8x48xbf16>, vector<48x384xbf16>, vector<8x384xf32> -> vector<8x384xf32>
    %537 = vector.broadcast %450 : vector<1x384xf32> to vector<8x384xf32>
    %538 = arith.addf %536, %537 : vector<8x384xf32>
    %539 = vector.extract_strided_slice %534 {offsets = [0, 0], sizes = [8, 48], strides = [1, 1]} : vector<8x384xf32> to vector<8x48xf32>
    %540 = vector.extract_strided_slice %538 {offsets = [0, 0], sizes = [8, 48], strides = [1, 1]} : vector<8x384xf32> to vector<8x48xf32>
    %541 = arith.addf %539, %540 : vector<8x48xf32>
    %542 = arith.negf %541 : vector<8x48xf32>
    %543 = math.exp %542 : vector<8x48xf32>
    %cst_181 = arith.constant 1.000000e+00 : f32
    %544 = vector.broadcast %cst_181 : f32 to vector<8x48xf32>
    %545 = arith.addf %544, %543 : vector<8x48xf32>
    %546 = arith.divf %544, %545 : vector<8x48xf32>
    %547 = vector.extract_strided_slice %534 {offsets = [0, 128], sizes = [8, 48], strides = [1, 1]} : vector<8x384xf32> to vector<8x48xf32>
    %548 = vector.extract_strided_slice %538 {offsets = [0, 128], sizes = [8, 48], strides = [1, 1]} : vector<8x384xf32> to vector<8x48xf32>
    %549 = arith.addf %547, %548 : vector<8x48xf32>
    %550 = arith.negf %549 : vector<8x48xf32>
    %551 = math.exp %550 : vector<8x48xf32>
    %cst_182 = arith.constant 1.000000e+00 : f32
    %552 = vector.broadcast %cst_182 : f32 to vector<8x48xf32>
    %553 = arith.addf %552, %551 : vector<8x48xf32>
    %554 = arith.divf %552, %553 : vector<8x48xf32>
    %555 = vector.extract_strided_slice %534 {offsets = [0, 256], sizes = [8, 48], strides = [1, 1]} : vector<8x384xf32> to vector<8x48xf32>
    %556 = vector.extract_strided_slice %538 {offsets = [0, 256], sizes = [8, 48], strides = [1, 1]} : vector<8x384xf32> to vector<8x48xf32>
    %557 = arith.mulf %546, %556 : vector<8x48xf32>
    %558 = arith.addf %555, %557 : vector<8x48xf32>
    %559 = math.tanh %558 : vector<8x48xf32>
    %cst_183 = arith.constant 1.000000e+00 : f32
    %560 = vector.broadcast %cst_183 : f32 to vector<8x48xf32>
    %561 = arith.subf %560, %554 : vector<8x48xf32>
    %562 = arith.mulf %561, %559 : vector<8x48xf32>
    %563 = arith.mulf %554, %527 : vector<8x48xf32>
    %564 = arith.addf %562, %563 : vector<8x48xf32>
    %565 = arith.index_cast %c2_i32_177 : i32 to index
    %c0_184 = arith.constant 0 : index
    %c0_185 = arith.constant 0 : index
    %566 = vector.load %arg9[%565, %c0_184, %c0_185] : memref<8x8x48xf32, #tpu.memory_space<vmem>>, vector<1x8x48xf32>
    %567 = vector.shape_cast %566 : vector<1x8x48xf32> to vector<8x48xf32>
    %568 = vector.shape_cast %564 : vector<8x48xf32> to vector<1x8x48xf32>
    tpu.vector_store %arg9[%565, %c0_184, %c0_185], %568 {strides = array<i32>} : memref<8x8x48xf32, #tpu.memory_space<vmem>>, vector<1x8x48xf32>,
    %c3_i32_186 = arith.constant 3 : i32
    %569 = arith.index_cast %c3_i32_186 : i32 to index
    %c0_187 = arith.constant 0 : index
    %c0_188 = arith.constant 0 : index
    %570 = vector.load %arg8[%569, %c0_187, %c0_188] : memref<8x8x384xf32, #tpu.memory_space<vmem>>, vector<1x8x384xf32>
    %571 = vector.shape_cast %570 : vector<1x8x384xf32> to vector<8x384xf32>
    %572 = arith.truncf %564 : vector<8x48xf32> to vector<8x48xbf16>
    %cst_189 = arith.constant dense<0.000000e+00> : vector<8x384xf32>
    %573 = tpu.matmul %572, %448, %cst_189 {dimension_numbers = #tpu.dot_dimension_numbers<[1], [0], [0], [1], [0, 0, 1, 1], [], []>} : vector<8x48xbf16>, vector<48x384xbf16>, vector<8x384xf32> -> vector<8x384xf32>
    %574 = vector.broadcast %450 : vector<1x384xf32> to vector<8x384xf32>
    %575 = arith.addf %573, %574 : vector<8x384xf32>
    %576 = vector.extract_strided_slice %571 {offsets = [0, 0], sizes = [8, 48], strides = [1, 1]} : vector<8x384xf32> to vector<8x48xf32>
    %577 = vector.extract_strided_slice %575 {offsets = [0, 0], sizes = [8, 48], strides = [1, 1]} : vector<8x384xf32> to vector<8x48xf32>
    %578 = arith.addf %576, %577 : vector<8x48xf32>
    %579 = arith.negf %578 : vector<8x48xf32>
    %580 = math.exp %579 : vector<8x48xf32>
    %cst_190 = arith.constant 1.000000e+00 : f32
    %581 = vector.broadcast %cst_190 : f32 to vector<8x48xf32>
    %582 = arith.addf %581, %580 : vector<8x48xf32>
    %583 = arith.divf %581, %582 : vector<8x48xf32>
    %584 = vector.extract_strided_slice %571 {offsets = [0, 128], sizes = [8, 48], strides = [1, 1]} : vector<8x384xf32> to vector<8x48xf32>
    %585 = vector.extract_strided_slice %575 {offsets = [0, 128], sizes = [8, 48], strides = [1, 1]} : vector<8x384xf32> to vector<8x48xf32>
    %586 = arith.addf %584, %585 : vector<8x48xf32>
    %587 = arith.negf %586 : vector<8x48xf32>
    %588 = math.exp %587 : vector<8x48xf32>
    %cst_191 = arith.constant 1.000000e+00 : f32
    %589 = vector.broadcast %cst_191 : f32 to vector<8x48xf32>
    %590 = arith.addf %589, %588 : vector<8x48xf32>
    %591 = arith.divf %589, %590 : vector<8x48xf32>
    %592 = vector.extract_strided_slice %571 {offsets = [0, 256], sizes = [8, 48], strides = [1, 1]} : vector<8x384xf32> to vector<8x48xf32>
    %593 = vector.extract_strided_slice %575 {offsets = [0, 256], sizes = [8, 48], strides = [1, 1]} : vector<8x384xf32> to vector<8x48xf32>
    %594 = arith.mulf %583, %593 : vector<8x48xf32>
    %595 = arith.addf %592, %594 : vector<8x48xf32>
    %596 = math.tanh %595 : vector<8x48xf32>
    %cst_192 = arith.constant 1.000000e+00 : f32
    %597 = vector.broadcast %cst_192 : f32 to vector<8x48xf32>
    %598 = arith.subf %597, %591 : vector<8x48xf32>
    %599 = arith.mulf %598, %596 : vector<8x48xf32>
    %600 = arith.mulf %591, %564 : vector<8x48xf32>
    %601 = arith.addf %599, %600 : vector<8x48xf32>
    %602 = arith.index_cast %c3_i32_186 : i32 to index
    %c0_193 = arith.constant 0 : index
    %c0_194 = arith.constant 0 : index
    %603 = vector.load %arg9[%602, %c0_193, %c0_194] : memref<8x8x48xf32, #tpu.memory_space<vmem>>, vector<1x8x48xf32>
    %604 = vector.shape_cast %603 : vector<1x8x48xf32> to vector<8x48xf32>
    %605 = vector.shape_cast %601 : vector<8x48xf32> to vector<1x8x48xf32>
    tpu.vector_store %arg9[%602, %c0_193, %c0_194], %605 {strides = array<i32>} : memref<8x8x48xf32, #tpu.memory_space<vmem>>, vector<1x8x48xf32>,
    %c4_i32_195 = arith.constant 4 : i32
    %606 = arith.index_cast %c4_i32_195 : i32 to index
    %c0_196 = arith.constant 0 : index
    %c0_197 = arith.constant 0 : index
    %607 = vector.load %arg8[%606, %c0_196, %c0_197] : memref<8x8x384xf32, #tpu.memory_space<vmem>>, vector<1x8x384xf32>
    %608 = vector.shape_cast %607 : vector<1x8x384xf32> to vector<8x384xf32>
    %609 = arith.truncf %601 : vector<8x48xf32> to vector<8x48xbf16>
    %cst_198 = arith.constant dense<0.000000e+00> : vector<8x384xf32>
    %610 = tpu.matmul %609, %448, %cst_198 {dimension_numbers = #tpu.dot_dimension_numbers<[1], [0], [0], [1], [0, 0, 1, 1], [], []>} : vector<8x48xbf16>, vector<48x384xbf16>, vector<8x384xf32> -> vector<8x384xf32>
    %611 = vector.broadcast %450 : vector<1x384xf32> to vector<8x384xf32>
    %612 = arith.addf %610, %611 : vector<8x384xf32>
    %613 = vector.extract_strided_slice %608 {offsets = [0, 0], sizes = [8, 48], strides = [1, 1]} : vector<8x384xf32> to vector<8x48xf32>
    %614 = vector.extract_strided_slice %612 {offsets = [0, 0], sizes = [8, 48], strides = [1, 1]} : vector<8x384xf32> to vector<8x48xf32>
    %615 = arith.addf %613, %614 : vector<8x48xf32>
    %616 = arith.negf %615 : vector<8x48xf32>
    %617 = math.exp %616 : vector<8x48xf32>
    %cst_199 = arith.constant 1.000000e+00 : f32
    %618 = vector.broadcast %cst_199 : f32 to vector<8x48xf32>
    %619 = arith.addf %618, %617 : vector<8x48xf32>
    %620 = arith.divf %618, %619 : vector<8x48xf32>
    %621 = vector.extract_strided_slice %608 {offsets = [0, 128], sizes = [8, 48], strides = [1, 1]} : vector<8x384xf32> to vector<8x48xf32>
    %622 = vector.extract_strided_slice %612 {offsets = [0, 128], sizes = [8, 48], strides = [1, 1]} : vector<8x384xf32> to vector<8x48xf32>
    %623 = arith.addf %621, %622 : vector<8x48xf32>
    %624 = arith.negf %623 : vector<8x48xf32>
    %625 = math.exp %624 : vector<8x48xf32>
    %cst_200 = arith.constant 1.000000e+00 : f32
    %626 = vector.broadcast %cst_200 : f32 to vector<8x48xf32>
    %627 = arith.addf %626, %625 : vector<8x48xf32>
    %628 = arith.divf %626, %627 : vector<8x48xf32>
    %629 = vector.extract_strided_slice %608 {offsets = [0, 256], sizes = [8, 48], strides = [1, 1]} : vector<8x384xf32> to vector<8x48xf32>
    %630 = vector.extract_strided_slice %612 {offsets = [0, 256], sizes = [8, 48], strides = [1, 1]} : vector<8x384xf32> to vector<8x48xf32>
    %631 = arith.mulf %620, %630 : vector<8x48xf32>
    %632 = arith.addf %629, %631 : vector<8x48xf32>
    %633 = math.tanh %632 : vector<8x48xf32>
    %cst_201 = arith.constant 1.000000e+00 : f32
    %634 = vector.broadcast %cst_201 : f32 to vector<8x48xf32>
    %635 = arith.subf %634, %628 : vector<8x48xf32>
    %636 = arith.mulf %635, %633 : vector<8x48xf32>
    %637 = arith.mulf %628, %601 : vector<8x48xf32>
    %638 = arith.addf %636, %637 : vector<8x48xf32>
    %639 = arith.index_cast %c4_i32_195 : i32 to index
    %c0_202 = arith.constant 0 : index
    %c0_203 = arith.constant 0 : index
    %640 = vector.load %arg9[%639, %c0_202, %c0_203] : memref<8x8x48xf32, #tpu.memory_space<vmem>>, vector<1x8x48xf32>
    %641 = vector.shape_cast %640 : vector<1x8x48xf32> to vector<8x48xf32>
    %642 = vector.shape_cast %638 : vector<8x48xf32> to vector<1x8x48xf32>
    tpu.vector_store %arg9[%639, %c0_202, %c0_203], %642 {strides = array<i32>} : memref<8x8x48xf32, #tpu.memory_space<vmem>>, vector<1x8x48xf32>,
    %c5_i32_204 = arith.constant 5 : i32
    %643 = arith.index_cast %c5_i32_204 : i32 to index
    %c0_205 = arith.constant 0 : index
    %c0_206 = arith.constant 0 : index
    %644 = vector.load %arg8[%643, %c0_205, %c0_206] : memref<8x8x384xf32, #tpu.memory_space<vmem>>, vector<1x8x384xf32>
    %645 = vector.shape_cast %644 : vector<1x8x384xf32> to vector<8x384xf32>
    %646 = arith.truncf %638 : vector<8x48xf32> to vector<8x48xbf16>
    %cst_207 = arith.constant dense<0.000000e+00> : vector<8x384xf32>
    %647 = tpu.matmul %646, %448, %cst_207 {dimension_numbers = #tpu.dot_dimension_numbers<[1], [0], [0], [1], [0, 0, 1, 1], [], []>} : vector<8x48xbf16>, vector<48x384xbf16>, vector<8x384xf32> -> vector<8x384xf32>
    %648 = vector.broadcast %450 : vector<1x384xf32> to vector<8x384xf32>
    %649 = arith.addf %647, %648 : vector<8x384xf32>
    %650 = vector.extract_strided_slice %645 {offsets = [0, 0], sizes = [8, 48], strides = [1, 1]} : vector<8x384xf32> to vector<8x48xf32>
    %651 = vector.extract_strided_slice %649 {offsets = [0, 0], sizes = [8, 48], strides = [1, 1]} : vector<8x384xf32> to vector<8x48xf32>
    %652 = arith.addf %650, %651 : vector<8x48xf32>
    %653 = arith.negf %652 : vector<8x48xf32>
    %654 = math.exp %653 : vector<8x48xf32>
    %cst_208 = arith.constant 1.000000e+00 : f32
    %655 = vector.broadcast %cst_208 : f32 to vector<8x48xf32>
    %656 = arith.addf %655, %654 : vector<8x48xf32>
    %657 = arith.divf %655, %656 : vector<8x48xf32>
    %658 = vector.extract_strided_slice %645 {offsets = [0, 128], sizes = [8, 48], strides = [1, 1]} : vector<8x384xf32> to vector<8x48xf32>
    %659 = vector.extract_strided_slice %649 {offsets = [0, 128], sizes = [8, 48], strides = [1, 1]} : vector<8x384xf32> to vector<8x48xf32>
    %660 = arith.addf %658, %659 : vector<8x48xf32>
    %661 = arith.negf %660 : vector<8x48xf32>
    %662 = math.exp %661 : vector<8x48xf32>
    %cst_209 = arith.constant 1.000000e+00 : f32
    %663 = vector.broadcast %cst_209 : f32 to vector<8x48xf32>
    %664 = arith.addf %663, %662 : vector<8x48xf32>
    %665 = arith.divf %663, %664 : vector<8x48xf32>
    %666 = vector.extract_strided_slice %645 {offsets = [0, 256], sizes = [8, 48], strides = [1, 1]} : vector<8x384xf32> to vector<8x48xf32>
    %667 = vector.extract_strided_slice %649 {offsets = [0, 256], sizes = [8, 48], strides = [1, 1]} : vector<8x384xf32> to vector<8x48xf32>
    %668 = arith.mulf %657, %667 : vector<8x48xf32>
    %669 = arith.addf %666, %668 : vector<8x48xf32>
    %670 = math.tanh %669 : vector<8x48xf32>
    %cst_210 = arith.constant 1.000000e+00 : f32
    %671 = vector.broadcast %cst_210 : f32 to vector<8x48xf32>
    %672 = arith.subf %671, %665 : vector<8x48xf32>
    %673 = arith.mulf %672, %670 : vector<8x48xf32>
    %674 = arith.mulf %665, %638 : vector<8x48xf32>
    %675 = arith.addf %673, %674 : vector<8x48xf32>
    %676 = arith.index_cast %c5_i32_204 : i32 to index
    %c0_211 = arith.constant 0 : index
    %c0_212 = arith.constant 0 : index
    %677 = vector.load %arg9[%676, %c0_211, %c0_212] : memref<8x8x48xf32, #tpu.memory_space<vmem>>, vector<1x8x48xf32>
    %678 = vector.shape_cast %677 : vector<1x8x48xf32> to vector<8x48xf32>
    %679 = vector.shape_cast %675 : vector<8x48xf32> to vector<1x8x48xf32>
    tpu.vector_store %arg9[%676, %c0_211, %c0_212], %679 {strides = array<i32>} : memref<8x8x48xf32, #tpu.memory_space<vmem>>, vector<1x8x48xf32>,
    %c6_i32_213 = arith.constant 6 : i32
    %680 = arith.index_cast %c6_i32_213 : i32 to index
    %c0_214 = arith.constant 0 : index
    %c0_215 = arith.constant 0 : index
    %681 = vector.load %arg8[%680, %c0_214, %c0_215] : memref<8x8x384xf32, #tpu.memory_space<vmem>>, vector<1x8x384xf32>
    %682 = vector.shape_cast %681 : vector<1x8x384xf32> to vector<8x384xf32>
    %683 = arith.truncf %675 : vector<8x48xf32> to vector<8x48xbf16>
    %cst_216 = arith.constant dense<0.000000e+00> : vector<8x384xf32>
    %684 = tpu.matmul %683, %448, %cst_216 {dimension_numbers = #tpu.dot_dimension_numbers<[1], [0], [0], [1], [0, 0, 1, 1], [], []>} : vector<8x48xbf16>, vector<48x384xbf16>, vector<8x384xf32> -> vector<8x384xf32>
    %685 = vector.broadcast %450 : vector<1x384xf32> to vector<8x384xf32>
    %686 = arith.addf %684, %685 : vector<8x384xf32>
    %687 = vector.extract_strided_slice %682 {offsets = [0, 0], sizes = [8, 48], strides = [1, 1]} : vector<8x384xf32> to vector<8x48xf32>
    %688 = vector.extract_strided_slice %686 {offsets = [0, 0], sizes = [8, 48], strides = [1, 1]} : vector<8x384xf32> to vector<8x48xf32>
    %689 = arith.addf %687, %688 : vector<8x48xf32>
    %690 = arith.negf %689 : vector<8x48xf32>
    %691 = math.exp %690 : vector<8x48xf32>
    %cst_217 = arith.constant 1.000000e+00 : f32
    %692 = vector.broadcast %cst_217 : f32 to vector<8x48xf32>
    %693 = arith.addf %692, %691 : vector<8x48xf32>
    %694 = arith.divf %692, %693 : vector<8x48xf32>
    %695 = vector.extract_strided_slice %682 {offsets = [0, 128], sizes = [8, 48], strides = [1, 1]} : vector<8x384xf32> to vector<8x48xf32>
    %696 = vector.extract_strided_slice %686 {offsets = [0, 128], sizes = [8, 48], strides = [1, 1]} : vector<8x384xf32> to vector<8x48xf32>
    %697 = arith.addf %695, %696 : vector<8x48xf32>
    %698 = arith.negf %697 : vector<8x48xf32>
    %699 = math.exp %698 : vector<8x48xf32>
    %cst_218 = arith.constant 1.000000e+00 : f32
    %700 = vector.broadcast %cst_218 : f32 to vector<8x48xf32>
    %701 = arith.addf %700, %699 : vector<8x48xf32>
    %702 = arith.divf %700, %701 : vector<8x48xf32>
    %703 = vector.extract_strided_slice %682 {offsets = [0, 256], sizes = [8, 48], strides = [1, 1]} : vector<8x384xf32> to vector<8x48xf32>
    %704 = vector.extract_strided_slice %686 {offsets = [0, 256], sizes = [8, 48], strides = [1, 1]} : vector<8x384xf32> to vector<8x48xf32>
    %705 = arith.mulf %694, %704 : vector<8x48xf32>
    %706 = arith.addf %703, %705 : vector<8x48xf32>
    %707 = math.tanh %706 : vector<8x48xf32>
    %cst_219 = arith.constant 1.000000e+00 : f32
    %708 = vector.broadcast %cst_219 : f32 to vector<8x48xf32>
    %709 = arith.subf %708, %702 : vector<8x48xf32>
    %710 = arith.mulf %709, %707 : vector<8x48xf32>
    %711 = arith.mulf %702, %675 : vector<8x48xf32>
    %712 = arith.addf %710, %711 : vector<8x48xf32>
    %713 = arith.index_cast %c6_i32_213 : i32 to index
    %c0_220 = arith.constant 0 : index
    %c0_221 = arith.constant 0 : index
    %714 = vector.load %arg9[%713, %c0_220, %c0_221] : memref<8x8x48xf32, #tpu.memory_space<vmem>>, vector<1x8x48xf32>
    %715 = vector.shape_cast %714 : vector<1x8x48xf32> to vector<8x48xf32>
    %716 = vector.shape_cast %712 : vector<8x48xf32> to vector<1x8x48xf32>
    tpu.vector_store %arg9[%713, %c0_220, %c0_221], %716 {strides = array<i32>} : memref<8x8x48xf32, #tpu.memory_space<vmem>>, vector<1x8x48xf32>,
    %c7_i32_222 = arith.constant 7 : i32
    %717 = arith.index_cast %c7_i32_222 : i32 to index
    %c0_223 = arith.constant 0 : index
    %c0_224 = arith.constant 0 : index
    %718 = vector.load %arg8[%717, %c0_223, %c0_224] : memref<8x8x384xf32, #tpu.memory_space<vmem>>, vector<1x8x384xf32>
    %719 = vector.shape_cast %718 : vector<1x8x384xf32> to vector<8x384xf32>
    %720 = arith.truncf %712 : vector<8x48xf32> to vector<8x48xbf16>
    %cst_225 = arith.constant dense<0.000000e+00> : vector<8x384xf32>
    %721 = tpu.matmul %720, %448, %cst_225 {dimension_numbers = #tpu.dot_dimension_numbers<[1], [0], [0], [1], [0, 0, 1, 1], [], []>} : vector<8x48xbf16>, vector<48x384xbf16>, vector<8x384xf32> -> vector<8x384xf32>
    %722 = vector.broadcast %450 : vector<1x384xf32> to vector<8x384xf32>
    %723 = arith.addf %721, %722 : vector<8x384xf32>
    %724 = vector.extract_strided_slice %719 {offsets = [0, 0], sizes = [8, 48], strides = [1, 1]} : vector<8x384xf32> to vector<8x48xf32>
    %725 = vector.extract_strided_slice %723 {offsets = [0, 0], sizes = [8, 48], strides = [1, 1]} : vector<8x384xf32> to vector<8x48xf32>
    %726 = arith.addf %724, %725 : vector<8x48xf32>
    %727 = arith.negf %726 : vector<8x48xf32>
    %728 = math.exp %727 : vector<8x48xf32>
    %cst_226 = arith.constant 1.000000e+00 : f32
    %729 = vector.broadcast %cst_226 : f32 to vector<8x48xf32>
    %730 = arith.addf %729, %728 : vector<8x48xf32>
    %731 = arith.divf %729, %730 : vector<8x48xf32>
    %732 = vector.extract_strided_slice %719 {offsets = [0, 128], sizes = [8, 48], strides = [1, 1]} : vector<8x384xf32> to vector<8x48xf32>
    %733 = vector.extract_strided_slice %723 {offsets = [0, 128], sizes = [8, 48], strides = [1, 1]} : vector<8x384xf32> to vector<8x48xf32>
    %734 = arith.addf %732, %733 : vector<8x48xf32>
    %735 = arith.negf %734 : vector<8x48xf32>
    %736 = math.exp %735 : vector<8x48xf32>
    %cst_227 = arith.constant 1.000000e+00 : f32
    %737 = vector.broadcast %cst_227 : f32 to vector<8x48xf32>
    %738 = arith.addf %737, %736 : vector<8x48xf32>
    %739 = arith.divf %737, %738 : vector<8x48xf32>
    %740 = vector.extract_strided_slice %719 {offsets = [0, 256], sizes = [8, 48], strides = [1, 1]} : vector<8x384xf32> to vector<8x48xf32>
    %741 = vector.extract_strided_slice %723 {offsets = [0, 256], sizes = [8, 48], strides = [1, 1]} : vector<8x384xf32> to vector<8x48xf32>
    %742 = arith.mulf %731, %741 : vector<8x48xf32>
    %743 = arith.addf %740, %742 : vector<8x48xf32>
    %744 = math.tanh %743 : vector<8x48xf32>
    %cst_228 = arith.constant 1.000000e+00 : f32
    %745 = vector.broadcast %cst_228 : f32 to vector<8x48xf32>
    %746 = arith.subf %745, %739 : vector<8x48xf32>
    %747 = arith.mulf %746, %744 : vector<8x48xf32>
    %748 = arith.mulf %739, %712 : vector<8x48xf32>
    %749 = arith.addf %747, %748 : vector<8x48xf32>
    %750 = arith.index_cast %c7_i32_222 : i32 to index
    %c0_229 = arith.constant 0 : index
    %c0_230 = arith.constant 0 : index
    %751 = vector.load %arg9[%750, %c0_229, %c0_230] : memref<8x8x48xf32, #tpu.memory_space<vmem>>, vector<1x8x48xf32>
    %752 = vector.shape_cast %751 : vector<1x8x48xf32> to vector<8x48xf32>
    %753 = vector.shape_cast %749 : vector<8x48xf32> to vector<1x8x48xf32>
    tpu.vector_store %arg9[%750, %c0_229, %c0_230], %753 {strides = array<i32>} : memref<8x8x48xf32, #tpu.memory_space<vmem>>, vector<1x8x48xf32>,
    %c8_i32_231 = arith.constant 8 : i32
    %c0_232 = arith.constant 0 : index
    %c0_233 = arith.constant 0 : index
    %c0_234 = arith.constant 0 : index
    %754 = vector.load %arg9[%c0_232, %c0_233, %c0_234] : memref<8x8x48xf32, #tpu.memory_space<vmem>>, vector<8x8x48xf32>
    %755 = vector.shape_cast %754 : vector<8x8x48xf32> to vector<64x48xf32>
    %c11 = arith.constant 11 : index
    %c0_235 = arith.constant 0 : index
    %756 = vector.load %arg4[%c11, %c0_235] : memref<13x48xf32, #tpu.memory_space<vmem>>, vector<1x48xf32>
    %757 = vector.broadcast %756 : vector<1x48xf32> to vector<64x48xf32>
    %758 = arith.mulf %755, %757 : vector<64x48xf32>
    %cst_236 = arith.constant dense<0.000000e+00> : vector<64xf32>
    %759 = vector.multi_reduction <add>, %758, %cst_236 [1] : vector<64x48xf32> to vector<64xf32>
    %c12 = arith.constant 12 : index
    %c0_237 = arith.constant 0 : index
    %760 = vector.load %arg4[%c12, %c0_237] : memref<13x48xf32, #tpu.memory_space<vmem>>, vector<1x1xf32>
    %761 = vector.shape_cast %759 : vector<64xf32> to vector<1x64xf32>
    %762 = vector.broadcast %760 : vector<1x1xf32> to vector<1x64xf32>
    %763 = arith.addf %761, %762 : vector<1x64xf32>
    %764 = arith.negf %763 : vector<1x64xf32>
    %765 = math.exp %764 : vector<1x64xf32>
    %cst_238 = arith.constant 1.000000e+00 : f32
    %766 = vector.broadcast %cst_238 : f32 to vector<1x64xf32>
    %767 = arith.addf %766, %765 : vector<1x64xf32>
    %768 = arith.divf %766, %767 : vector<1x64xf32>
    %c0_239 = arith.constant 0 : index
    %c0_240 = arith.constant 0 : index
    %c0_241 = arith.constant 0 : index
    %769 = vector.load %arg7[%c0_239, %c0_240, %c0_241] : memref<1x1x64xf32, #tpu.memory_space<vmem>>, vector<1x1x64xf32>
    %770 = vector.shape_cast %769 : vector<1x1x64xf32> to vector<1x64xf32>
    %771 = vector.shape_cast %768 : vector<1x64xf32> to vector<1x1x64xf32>
    tpu.vector_store %arg7[%c0_239, %c0_240, %c0_241], %771 {strides = array<i32>} : memref<1x1x64xf32, #tpu.memory_space<vmem>>, vector<1x1x64xf32>,
    return
  }
  func.func @transform_0(%arg0: i32) -> (i32, i32, i32) {
    %c0_i32 = arith.constant 0 : i32
    %c0_i32_0 = arith.constant 0 : i32
    %c0_i32_1 = arith.constant 0 : i32
    return %c0_i32, %arg0, %c0_i32_0 : i32, i32, i32
  }
  func.func @transform_1(%arg0: i32) -> (i32, i32) {
    %c0_i32 = arith.constant 0 : i32
    %c0_i32_0 = arith.constant 0 : i32
    %c0_i32_1 = arith.constant 0 : i32
    return %c0_i32, %c0_i32_0 : i32, i32
  }
  func.func @transform_2(%arg0: i32) -> (i32, i32, i32) {
    %c0_i32 = arith.constant 0 : i32
    %c0_i32_0 = arith.constant 0 : i32
    %c0_i32_1 = arith.constant 0 : i32
    %c0_i32_2 = arith.constant 0 : i32
    return %c0_i32, %c0_i32_0, %c0_i32_1 : i32, i32, i32
  }
  func.func @transform_3(%arg0: i32) -> (i32, i32) {
    %c0_i32 = arith.constant 0 : i32
    %c0_i32_0 = arith.constant 0 : i32
    %c0_i32_1 = arith.constant 0 : i32
    return %c0_i32, %c0_i32_0 : i32, i32
  }
  func.func @transform_4(%arg0: i32) -> (i32, i32, i32) {
    %c0_i32 = arith.constant 0 : i32
    %c0_i32_0 = arith.constant 0 : i32
    %c0_i32_1 = arith.constant 0 : i32
    %c0_i32_2 = arith.constant 0 : i32
    return %c0_i32, %c0_i32_0, %c0_i32_1 : i32, i32, i32
  }
  func.func @transform_5(%arg0: i32) -> (i32, i32) {
    %c0_i32 = arith.constant 0 : i32
    %c0_i32_0 = arith.constant 0 : i32
    %c0_i32_1 = arith.constant 0 : i32
    return %c0_i32, %c0_i32_0 : i32, i32
  }
  func.func @transform_6(%arg0: i32) -> (i32, i32, i32) {
    %c0_i32 = arith.constant 0 : i32
    %c0_i32_0 = arith.constant 0 : i32
    %c0_i32_1 = arith.constant 0 : i32
    return %arg0, %c0_i32, %c0_i32_0 : i32, i32, i32
  }
}

</mosaic_0001>

<llo_original>
// kernel: tpu_custom_call.1
$region0: #{tpu_custom_call.1}
  #allocation0 [shape = 'u32[]', space=smem, size = 0x4, offset = 0x4, fixed_abs, tag = 'smem constant byte address 0x4 - core index']
  #allocation1 [shape = 'u32[144,128]{1,0:T(1,128)}', space=vmem, size = 0x12000, scoped, tag = 'internal scratch']
  #allocation2 [shape = 'f32[8,8,384]{2,1,0:T(8,128)}', space=vmem, size = 0x18000, scoped, tag = 'scratch operand']
  #allocation3 [shape = 'f32[8,8,48]{2,1,0:T(8,128)}', space=vmem, size = 0x8000, scoped, tag = 'scratch operand']
  %s0 = inlined_call_operand.vmem [shape: bf16[8,8,64], index: 0, kind: input, shape index: {}]
  %s1 = inlined_call_operand.vmem [shape: bf16[64,48], index: 1, kind: input, shape index: {}]
  %s2 = inlined_call_operand.hbm [shape: bf16[8,48,48], index: 2, kind: input, shape index: {}]
  %s3 = inlined_call_operand.vmem [shape: f32[13,48], index: 3, kind: input, shape index: {}]
  %s4 = inlined_call_operand.hbm [shape: bf16[4,48,384], index: 4, kind: input, shape index: {}]
  %s5 = inlined_call_operand.vmem [shape: f32[4,384], index: 5, kind: input, shape index: {}]
  %s6 = inlined_call_operand.hbm [shape: f32[1,1,64], index: 6, kind: output, shape index: {}]
  %s7 = sld [smem:[#allocation0]]
  $region42: #{tpu_custom_call.1} parent=0
    _
  %s9 = ssub.s32 1, %s7
  %s10 = scalar_select 0, %s9, %s7
  $region1: #{tpu_custom_call.1} parent=0
    #allocation4 [shape = 'u8[98304]{0}', space=vmem, size = 0x18000, scoped, tag = 'input window, operand 2, single buffered']
    #allocation5 [shape = 's32[1]{0}', space=sflag, size = 0x4, scoped, tag = 'scoped memory for tpu_custom_call.1']
    #allocation6 [shape = 's32[1]{0}', space=sflag, size = 0x4, scoped, tag = 'scoped memory for tpu_custom_call.1']
    #allocation7 [shape = 'u8[147456]{0}', space=vmem, size = 0x24000, scoped, tag = 'input window, operand 4, single buffered']
    #allocation8 [shape = 's32[1]{0}', space=sflag, size = 0x4, scoped, tag = 'scoped memory for tpu_custom_call.1']
    #allocation9 [shape = 'u8[512]{0}', space=vmem, size = 0x400, scoped, tag = 'output window, operand 0, single buffered']
    %11 = vsyncpa [#allocation5], 0
    %12 = vsyncpa [#allocation8], 0
    %13 = vsyncpa [#allocation6], 0
    // Predicated region
    $region2: #{tpu_custom_call.1} parent=1 // pred_check
      _
    $region3: #{tpu_custom_call.1} parent=1 // pred_check_branch
      %15 = sbr.rel (0) target = $region5
    $region4: #{tpu_custom_call.1} parent=1 // pred_region
      _
    $region5: #{tpu_custom_call.1} parent=1 // pred_fallthru
      _
    // Predicated region
    $region6: #{tpu_custom_call.1} parent=1 // pred_check
      _
    $region7: #{tpu_custom_call.1} parent=1 // pred_check_branch
      %17 = sbr.rel (0) target = $region9
    $region8: #{tpu_custom_call.1} parent=1 // pred_region
      _
    $region9: #{tpu_custom_call.1} parent=1 // pred_fallthru
      _
    // Predicated region
    $region10: #{tpu_custom_call.1} parent=1 // pred_check
      _
    $region11: #{tpu_custom_call.1} parent=1 // pred_check_branch
      %19 = sbr.rel (0) target = $region13
    $region12: #{tpu_custom_call.1} parent=1 // pred_region
      %s21 = ssub.s32 3072, 3072
      %22 = vsyncadd [#allocation5], %s21
      %s23 = sshll.u32 [#allocation4], 4
      %s24 = int_to_ptr.vmem [resolvable:$true] %s23
      %29 = dma.hbm_to_vmem [thread:$0]  %s2, 3072, %s24, [#allocation5], 64, 64, 4
    $region13: #{tpu_custom_call.1} parent=1 // pred_fallthru
      _
    // Predicated region
    $region14: #{tpu_custom_call.1} parent=1 // pred_check
      _
    $region15: #{tpu_custom_call.1} parent=1 // pred_check_branch
      %31 = sbr.rel (0) target = $region17
    $region16: #{tpu_custom_call.1} parent=1 // pred_region
      _
    $region17: #{tpu_custom_call.1} parent=1 // pred_fallthru
      _
    // Predicated region
    $region18: #{tpu_custom_call.1} parent=1 // pred_check
      _
    $region19: #{tpu_custom_call.1} parent=1 // pred_check_branch
      %33 = sbr.rel (0) target = $region21
    $region20: #{tpu_custom_call.1} parent=1 // pred_region
      %s35 = ssub.s32 4608, 4608
      %36 = vsyncadd [#allocation8], %s35
      %s37 = sshll.u32 [#allocation7], 4
      %s38 = int_to_ptr.vmem [resolvable:$true] %s37
      %43 = dma.hbm_to_vmem [thread:$0]  %s4, 4608, %s38, [#allocation8], 192, 192, 12
    $region21: #{tpu_custom_call.1} parent=1 // pred_fallthru
      _
    // Predicated region
    $region22: #{tpu_custom_call.1} parent=1 // pred_check
      _
    $region23: #{tpu_custom_call.1} parent=1 // pred_check_branch
      %45 = sbr.rel (0) target = $region25
    $region24: #{tpu_custom_call.1} parent=1 // pred_region
      _
    $region25: #{tpu_custom_call.1} parent=1 // pred_fallthru
      _
    // Predicated region
    $region26: #{tpu_custom_call.1} parent=1 // pred_check
      _
    $region27: #{tpu_custom_call.1} parent=1 // pred_check_branch
      %47 = sbr.rel (0) target = $region29
    $region28: #{tpu_custom_call.1} parent=1 // pred_region
      %48 = dma.done [#allocation5], 3072
    $region29: #{tpu_custom_call.1} parent=1 // pred_fallthru
      _
    // Predicated region
    $region30: #{tpu_custom_call.1} parent=1 // pred_check
      _
    $region31: #{tpu_custom_call.1} parent=1 // pred_check_branch
      %50 = sbr.rel (0) target = $region33
    $region32: #{tpu_custom_call.1} parent=1 // pred_region
      %51 = dma.done [#allocation8], 4608
    $region33: #{tpu_custom_call.1} parent=1 // pred_fallthru
      _
    %v53 = vld [vmem:[%s0] sm:$0xf]
    %v54 = vld [vmem:[%s0 + $0x4] sm:$0xf]
    %v55 = vld [vmem:[%s0 + $0x8] sm:$0xf]
    %v56 = vld [vmem:[%s0 + $0xc] sm:$0xf]
    %v57 = vld [vmem:[%s0 + $0x10] sm:$0xf]
    %v58 = vld [vmem:[%s0 + $0x14] sm:$0xf]
    %v59 = vld [vmem:[%s0 + $0x18] sm:$0xf]
    %v60 = vld [vmem:[%s0 + $0x1c] sm:$0xf]
    %v61 = vld [vmem:[%s1] sm:$0xf]
    %v62 = vld [vmem:[%s1 + $0x4] sm:$0xf]
    %v63 = vld [vmem:[%s1 + $0x8] sm:$0xf]
    %v64 = vld [vmem:[%s1 + $0xc] sm:$0xf]
    %v65 = vld [vmem:[%s1 + $0x10] sm:$0xf]
    %v66 = vld [vmem:[%s1 + $0x14] sm:$0xf]
    %v67 = vld [vmem:[%s1 + $0x18] sm:$0xf]
    %v68 = vld [vmem:[%s1 + $0x1c] sm:$0xf]
    %v69 = vld [vmem:[%s3] sm:$0x1]
    %v70 = vlaneseq
    %v71 = vshrl.u32 %v70, 7
    %v72 = vsub.s32 0, %v71
    %v73 = vrot.slane %v69, %v72
    %v82 = vunpack.c.l.b16 %v53
    %v83 = vunpack.c.l.b16 %v54
    %v84 = vunpack.c.l.b16 %v55
    %v85 = vunpack.c.l.b16 %v56
    %v86 = vunpack.c.l.b16 %v57
    %v87 = vunpack.c.l.b16 %v58
    %v88 = vunpack.c.l.b16 %v59
    %v89 = vunpack.c.l.b16 %v60
    %v90 = vpack.c.b16 %v83, %v82
    %v91 = vpack.c.b16 %v85, %v84
    %v92 = vpack.c.b16 %v87, %v86
    %v93 = vpack.c.b16 %v89, %v88
    %v102 = vunpack.c.l.b16 %v61
    %v103 = vunpack.c.l.b16 %v62
    %v104 = vunpack.c.l.b16 %v63
    %v105 = vunpack.c.l.b16 %v64
    %v106 = vunpack.c.l.b16 %v65
    %v107 = vunpack.c.l.b16 %v66
    %v108 = vunpack.c.l.b16 %v67
    %v109 = vunpack.c.l.b16 %v68
    %v110 = vpack.c.b16 %v103, %v102
    %v111 = vpack.c.b16 %v105, %v104
    %v112 = vpack.c.b16 %v107, %v106
    %v113 = vpack.c.b16 %v109, %v108
    %vm118 = vcmask 523264
    %v120 = vsel %vm118, %v90, 0
    %v123 = vsel %vm118, %v91, 0
    %v126 = vsel %vm118, %v92, 0
    %v129 = vsel %vm118, %v93, 0
    %131 = vmatprep.subr.bf16.mxu0 0
    %132 = vmatpush1.bf16.msra.mxu0 0
    %133 = vmatprep.subr.bf16.mxu0 0
    %134 = vmatpush1.bf16.msra.mxu0 0
    %135 = vmatprep.subr.bf16.mxu0 0
    %136 = vmatpush1.bf16.msra.mxu0 0
    %137 = vmatprep.subr.bf16.mxu0 0
    %138 = vmatpush1.bf16.msra.mxu0 0
    %139 = vmatprep.subr.bf16.mxu0 0
    %140 = vmatpush1.bf16.msra.mxu0 %v113
    %141 = vmatprep.subr.bf16.mxu0 0
    %142 = vmatpush1.bf16.msra.mxu0 %v112
    %143 = vmatprep.subr.bf16.mxu0 0
    %144 = vmatpush1.bf16.msra.mxu0 %v111
    %145 = vmatprep.subr.bf16.mxu0 0
    %146 = vmatpush1.bf16.msra.mxu0 %v110
    %147 = vmatprep.subr.bf16.mxu0 0
    %148 = vmatpush2.bf16.msra.mxu0 0
    %149 = vmatprep.subr.bf16.mxu0 0
    %150 = vmatpush2.bf16.msra.mxu0 0
    %151 = vmatprep.subr.bf16.mxu0 0
    %152 = vmatpush2.bf16.msra.mxu0 0
    %153 = vmatprep.subr.bf16.mxu0 0
    %154 = vmatpush2.bf16.msra.mxu0 0
    %155 = vmatprep.subr.bf16.mxu0 0
    %156 = vmatpush2.bf16.msra.mxu0 0
    %157 = vmatprep.subr.bf16.mxu0 0
    %158 = vmatpush2.bf16.msra.mxu0 0
    %159 = vmatprep.subr.bf16.mxu0 0
    %160 = vmatpush2.bf16.msra.mxu0 0
    %161 = vmatprep.subr.bf16.mxu0 0
    %162 = vmatpush2.bf16.msra.mxu0 0
    %163 = vmatprep.mubr.bf16.mxu0 0
    %164 = vmatmul.mubr.bf16.gmra.mxu0 %v120
    %v165 = vpop.f32.mrf.mxu0
    %v166 = vadd.f32 %v73, %v165
    %v167 = vpop.f32.mrf.mxu0
    %v168 = vpop.f32.mrf.mxu0
    %v169 = vadd.f32 %v73, %v168
    %v170 = vpop.f32.mrf.mxu0
    %171 = vmatprep.mubr.bf16.mxu0 0
    %172 = vmatmul.mubr.bf16.gmra.mxu0 %v123
    %v173 = vpop.f32.mrf.mxu0
    %v174 = vadd.f32 %v73, %v173
    %v175 = vpop.f32.mrf.mxu0
    %v176 = vpop.f32.mrf.mxu0
    %v177 = vadd.f32 %v73, %v176
    %v178 = vpop.f32.mrf.mxu0
    %179 = vmatprep.mubr.bf16.mxu0 0
    %180 = vmatmul.mubr.bf16.gmra.mxu0 %v126
    %v181 = vpop.f32.mrf.mxu0
    %v182 = vadd.f32 %v73, %v181
    %v183 = vpop.f32.mrf.mxu0
    %v184 = vpop.f32.mrf.mxu0
    %v185 = vadd.f32 %v73, %v184
    %v186 = vpop.f32.mrf.mxu0
    %187 = vmatprep.mubr.bf16.mxu0 0
    %188 = vmatmul.mubr.bf16.gmra.mxu0 %v129
    %v189 = vpop.f32.mrf.mxu0
    %v190 = vadd.f32 %v73, %v189
    %v191 = vpop.f32.mrf.mxu0
    %v192 = vpop.f32.mrf.mxu0
    %v193 = vadd.f32 %v73, %v192
    %v194 = vpop.f32.mrf.mxu0
    %195 = vdwg.mxu0
    %v196 = vpack.c.bf16 %v169, %v166
    %v197 = vpack.c.bf16 %v177, %v174
    %v198 = vpack.c.bf16 %v185, %v182
    %v199 = vpack.c.bf16 %v193, %v190
    %s200 = scalar_lea.vmem [#allocation4], 24
    %v201 = vld [vmem:[%s200] sm:$0xf]
    %v202 = vld [vmem:[%s200 + $0x4] sm:$0xf]
    %v203 = vld [vmem:[%s200 + $0x8] sm:$0xf]
    %v204 = vld [vmem:[%s200 + $0xc] sm:$0xf]
    %v205 = vld [vmem:[%s200 + $0x10] sm:$0xf]
    %v206 = vld [vmem:[%s200 + $0x14] sm:$0xf]
    %v207 = vld [vmem:[%s3 + $0x2] sm:$0x1]
    %v208 = vlaneseq
    %v209 = vshrl.u32 %v208, 7
    %v210 = vsub.s32 0, %v209
    %v211 = vrot.slane %v207, %v210
    %v218 = vunpack.c.l.b16 %v201
    %v219 = vunpack.c.l.b16 %v202
    %v220 = vunpack.c.l.b16 %v203
    %v221 = vunpack.c.l.b16 %v204
    %v222 = vunpack.c.l.b16 %v205
    %v223 = vunpack.c.l.b16 %v206
    %v224 = vpack.c.b16 %v219, %v218
    %v225 = vpack.c.b16 %v221, %v220
    %v226 = vpack.c.b16 %v223, %v222
    %vm230 = vcmask 392192
    %v232 = vsel %vm230, %v196, 0
    %v235 = vsel %vm230, %v197, 0
    %v238 = vsel %vm230, %v198, 0
    %v241 = vsel %vm230, %v199, 0
    %243 = vmatprep.subr.bf16.mxu0 0
    %244 = vmatpush1.bf16.msra.mxu0 0
    %245 = vmatprep.subr.bf16.mxu0 0
    %246 = vmatpush1.bf16.msra.mxu0 0
    %247 = vmatprep.subr.bf16.mxu0 0
    %248 = vmatpush1.bf16.msra.mxu0 0
    %249 = vmatprep.subr.bf16.mxu0 0
    %250 = vmatpush1.bf16.msra.mxu0 0
    %251 = vmatprep.subr.bf16.mxu0 0
    %252 = vmatpush1.bf16.msra.mxu0 0
    %253 = vmatprep.subr.bf16.mxu0 0
    %254 = vmatpush1.bf16.msra.mxu0 %v226
    %255 = vmatprep.subr.bf16.mxu0 0
    %256 = vmatpush1.bf16.msra.mxu0 %v225
    %257 = vmatprep.subr.bf16.mxu0 0
    %258 = vmatpush1.bf16.msra.mxu0 %v224
    %259 = vmatprep.subr.bf16.mxu0 0
    %260 = vmatpush2.bf16.msra.mxu0 0
    %261 = vmatprep.subr.bf16.mxu0 0
    %262 = vmatpush2.bf16.msra.mxu0 0
    %263 = vmatprep.subr.bf16.mxu0 0
    %264 = vmatpush2.bf16.msra.mxu0 0
    %265 = vmatprep.subr.bf16.mxu0 0
    %266 = vmatpush2.bf16.msra.mxu0 0
    %267 = vmatprep.subr.bf16.mxu0 0
    %268 = vmatpush2.bf16.msra.mxu0 0
    %269 = vmatprep.subr.bf16.mxu0 0
    %270 = vmatpush2.bf16.msra.mxu0 0
    %271 = vmatprep.subr.bf16.mxu0 0
    %272 = vmatpush2.bf16.msra.mxu0 0
    %273 = vmatprep.subr.bf16.mxu0 0
    %274 = vmatpush2.bf16.msra.mxu0 0
    %275 = vmatprep.mubr.bf16.mxu0 0
    %276 = vmatmul.mubr.bf16.gmra.mxu0 %v232
    %v277 = vpop.f32.mrf.mxu0
    %v278 = vadd.f32 %v211, %v277
    %v279 = vpop.f32.mrf.mxu0
    %v280 = vpop.f32.mrf.mxu0
    %v281 = vadd.f32 %v211, %v280
    %v282 = vpop.f32.mrf.mxu0
    %283 = vmatprep.mubr.bf16.mxu0 0
    %284 = vmatmul.mubr.bf16.gmra.mxu0 %v235
    %v285 = vpop.f32.mrf.mxu0
    %v286 = vadd.f32 %v211, %v285
    %v287 = vpop.f32.mrf.mxu0
    %v288 = vpop.f32.mrf.mxu0
    %v289 = vadd.f32 %v211, %v288
    %v290 = vpop.f32.mrf.mxu0
    %291 = vmatprep.mubr.bf16.mxu0 0
    %292 = vmatmul.mubr.bf16.gmra.mxu0 %v238
    %v293 = vpop.f32.mrf.mxu0
    %v294 = vadd.f32 %v211, %v293
    %v295 = vpop.f32.mrf.mxu0
    %v296 = vpop.f32.mrf.mxu0
    %v297 = vadd.f32 %v211, %v296
    %v298 = vpop.f32.mrf.mxu0
    %299 = vmatprep.mubr.bf16.mxu0 0
    %300 = vmatmul.mubr.bf16.gmra.mxu0 %v241
    %v301 = vpop.f32.mrf.mxu0
    %v302 = vadd.f32 %v211, %v301
    %v303 = vpop.f32.mrf.mxu0
    %v304 = vpop.f32.mrf.mxu0
    %v305 = vadd.f32 %v211, %v304
    %v306 = vpop.f32.mrf.mxu0
    %307 = vdwg.mxu0
    %s308 = scalar_lea.vmem [#allocation4], 48
    %v309 = vld [vmem:[%s308] sm:$0xf]
    %v310 = vld [vmem:[%s308 + $0x4] sm:$0xf]
    %v311 = vld [vmem:[%s308 + $0x8] sm:$0xf]
    %v312 = vld [vmem:[%s308 + $0xc] sm:$0xf]
    %v313 = vld [vmem:[%s308 + $0x10] sm:$0xf]
    %v314 = vld [vmem:[%s308 + $0x14] sm:$0xf]
    %v315 = vld [vmem:[%s3 + $0x3] sm:$0x1]
    %v316 = vlaneseq
    %v317 = vshrl.u32 %v316, 7
    %v318 = vsub.s32 0, %v317
    %v319 = vrot.slane %v315, %v318
    %v326 = vunpack.c.l.b16 %v309
    %v327 = vunpack.c.l.b16 %v310
    %v328 = vunpack.c.l.b16 %v311
    %v329 = vunpack.c.l.b16 %v312
    %v330 = vunpack.c.l.b16 %v313
    %v331 = vunpack.c.l.b16 %v314
    %v332 = vpack.c.b16 %v327, %v326
    %v333 = vpack.c.b16 %v329, %v328
    %v334 = vpack.c.b16 %v331, %v330
    %338 = vmatprep.subr.bf16.mxu0 0
    %339 = vmatpush1.bf16.msra.mxu0 0
    %340 = vmatprep.subr.bf16.mxu0 0
    %341 = vmatpush1.bf16.msra.mxu0 0
    %342 = vmatprep.subr.bf16.mxu0 0
    %343 = vmatpush1.bf16.msra.mxu0 0
    %344 = vmatprep.subr.bf16.mxu0 0
    %345 = vmatpush1.bf16.msra.mxu0 0
    %346 = vmatprep.subr.bf16.mxu0 0
    %347 = vmatpush1.bf16.msra.mxu0 0
    %348 = vmatprep.subr.bf16.mxu0 0
    %349 = vmatpush1.bf16.msra.mxu0 %v334
    %350 = vmatprep.subr.bf16.mxu0 0
    %351 = vmatpush1.bf16.msra.mxu0 %v333
    %352 = vmatprep.subr.bf16.mxu0 0
    %353 = vmatpush1.bf16.msra.mxu0 %v332
    %354 = vmatprep.subr.bf16.mxu0 0
    %355 = vmatpush2.bf16.msra.mxu0 0
    %356 = vmatprep.subr.bf16.mxu0 0
    %357 = vmatpush2.bf16.msra.mxu0 0
    %358 = vmatprep.subr.bf16.mxu0 0
    %359 = vmatpush2.bf16.msra.mxu0 0
    %360 = vmatprep.subr.bf16.mxu0 0
    %361 = vmatpush2.bf16.msra.mxu0 0
    %362 = vmatprep.subr.bf16.mxu0 0
    %363 = vmatpush2.bf16.msra.mxu0 0
    %364 = vmatprep.subr.bf16.mxu0 0
    %365 = vmatpush2.bf16.msra.mxu0 0
    %366 = vmatprep.subr.bf16.mxu0 0
    %367 = vmatpush2.bf16.msra.mxu0 0
    %368 = vmatprep.subr.bf16.mxu0 0
    %369 = vmatpush2.bf16.msra.mxu0 0
    %370 = vmatprep.mubr.bf16.mxu0 0
    %371 = vmatmul.mubr.bf16.gmra.mxu0 %v232
    %v372 = vpop.f32.mrf.mxu0
    %v373 = vadd.f32 %v319, %v372
    %v374 = vpop.f32.mrf.mxu0
    %v375 = vpop.f32.mrf.mxu0
    %v376 = vadd.f32 %v319, %v375
    %v377 = vpop.f32.mrf.mxu0
    %378 = vmatprep.mubr.bf16.mxu0 0
    %379 = vmatmul.mubr.bf16.gmra.mxu0 %v235
    %v380 = vpop.f32.mrf.mxu0
    %v381 = vadd.f32 %v319, %v380
    %v382 = vpop.f32.mrf.mxu0
    %v383 = vpop.f32.mrf.mxu0
    %v384 = vadd.f32 %v319, %v383
    %v385 = vpop.f32.mrf.mxu0
    %386 = vmatprep.mubr.bf16.mxu0 0
    %387 = vmatmul.mubr.bf16.gmra.mxu0 %v238
    %v388 = vpop.f32.mrf.mxu0
    %v389 = vadd.f32 %v319, %v388
    %v390 = vpop.f32.mrf.mxu0
    %v391 = vpop.f32.mrf.mxu0
    %v392 = vadd.f32 %v319, %v391
    %v393 = vpop.f32.mrf.mxu0
    %394 = vmatprep.mubr.bf16.mxu0 0
    %395 = vmatmul.mubr.bf16.gmra.mxu0 %v241
    %v396 = vpop.f32.mrf.mxu0
    %v397 = vadd.f32 %v319, %v396
    %v398 = vpop.f32.mrf.mxu0
    %v399 = vpop.f32.mrf.mxu0
    %v400 = vadd.f32 %v319, %v399
    %v401 = vpop.f32.mrf.mxu0
    %402 = vdwg.mxu0
    %v404 = vunpack.c.h.b16 %v199
    %v405 = vpack.c.b16 %v404, %v404
    %v406 = vld [vmem:[#allocation4] sm:$0xf]
    %v407 = vld [vmem:[#allocation4 + $0x4] sm:$0xf]
    %v408 = vld [vmem:[#allocation4 + $0x8] sm:$0xf]
    %v409 = vld [vmem:[#allocation4 + $0xc] sm:$0xf]
    %v410 = vld [vmem:[#allocation4 + $0x10] sm:$0xf]
    %v411 = vld [vmem:[#allocation4 + $0x14] sm:$0xf]
    %v412 = vld [vmem:[%s3 + $0x1] sm:$0x1]
    %v413 = vlaneseq
    %v414 = vshrl.u32 %v413, 7
    %v415 = vsub.s32 0, %v414
    %v416 = vrot.slane %v412, %v415
    %v423 = vunpack.c.l.b16 %v406
    %v424 = vunpack.c.l.b16 %v407
    %v425 = vunpack.c.l.b16 %v408
    %v426 = vunpack.c.l.b16 %v409
    %v427 = vunpack.c.l.b16 %v410
    %v428 = vunpack.c.l.b16 %v411
    %v429 = vpack.c.b16 %v424, %v423
    %v430 = vpack.c.b16 %v426, %v425
    %v431 = vpack.c.b16 %v428, %v427
    %v436 = vsel %vm230, %v405, 0
    %438 = vmatprep.subr.bf16.mxu0 0
    %439 = vmatpush1.bf16.msra.mxu0 0
    %440 = vmatprep.subr.bf16.mxu0 0
    %441 = vmatpush1.bf16.msra.mxu0 0
    %442 = vmatprep.subr.bf16.mxu0 0
    %443 = vmatpush1.bf16.msra.mxu0 0
    %444 = vmatprep.subr.bf16.mxu0 0
    %445 = vmatpush1.bf16.msra.mxu0 0
    %446 = vmatprep.subr.bf16.mxu0 0
    %447 = vmatpush1.bf16.msra.mxu0 0
    %448 = vmatprep.subr.bf16.mxu0 0
    %449 = vmatpush1.bf16.msra.mxu0 %v431
    %450 = vmatprep.subr.bf16.mxu0 0
    %451 = vmatpush1.bf16.msra.mxu0 %v430
    %452 = vmatprep.subr.bf16.mxu0 0
    %453 = vmatpush1.bf16.msra.mxu0 %v429
    %454 = vmatprep.subr.bf16.mxu0 0
    %455 = vmatpush2.bf16.msra.mxu0 0
    %456 = vmatprep.subr.bf16.mxu0 0
    %457 = vmatpush2.bf16.msra.mxu0 0
    %458 = vmatprep.subr.bf16.mxu0 0
    %459 = vmatpush2.bf16.msra.mxu0 0
    %460 = vmatprep.subr.bf16.mxu0 0
    %461 = vmatpush2.bf16.msra.mxu0 0
    %462 = vmatprep.subr.bf16.mxu0 0
    %463 = vmatpush2.bf16.msra.mxu0 0
    %464 = vmatprep.subr.bf16.mxu0 0
    %465 = vmatpush2.bf16.msra.mxu0 0
    %466 = vmatprep.subr.bf16.mxu0 0
    %467 = vmatpush2.bf16.msra.mxu0 0
    %468 = vmatprep.subr.bf16.mxu0 0
    %469 = vmatpush2.bf16.msra.mxu0 0
    %470 = vmatprep.mubr.bf16.mxu0 0
    %471 = vmatmul.mubr.bf16.gmra.mxu0 %v436
    %v472 = vpop.f32.mrf.mxu0
    %v473 = vadd.f32 %v416, %v472
    %v474 = vpop.f32.mrf.mxu0
    %v475 = vpop.f32.mrf.mxu0
    %v476 = vpop.f32.mrf.mxu0
    %477 = vdwg.mxu0
    %v478 = vmul.f32 %v278, %v473
    %v479 = vmul.f32 %v281, %v473
    %v480 = vmul.f32 %v286, %v473
    %v481 = vmul.f32 %v289, %v473
    %v482 = vmul.f32 %v294, %v473
    %v483 = vmul.f32 %v297, %v473
    %v484 = vmul.f32 %v302, %v473
    %v485 = vmul.f32 %v305, %v473
    %v486 = vpack.c.bf16 %v479, %v478
    %v487 = vpack.c.bf16 %v481, %v480
    %v488 = vpack.c.bf16 %v483, %v482
    %v489 = vpack.c.bf16 %v485, %v484
    %s490 = scalar_lea.vmem [#allocation4], 144
    %v491 = vld [vmem:[%s490] sm:$0xf]
    %v492 = vld [vmem:[%s490 + $0x4] sm:$0xf]
    %v493 = vld [vmem:[%s490 + $0x8] sm:$0xf]
    %v494 = vld [vmem:[%s490 + $0xc] sm:$0xf]
    %v495 = vld [vmem:[%s490 + $0x10] sm:$0xf]
    %v496 = vld [vmem:[%s490 + $0x14] sm:$0xf]
    %v503 = vunpack.c.l.b16 %v491
    %v504 = vunpack.c.l.b16 %v492
    %v505 = vunpack.c.l.b16 %v493
    %v506 = vunpack.c.l.b16 %v494
    %v507 = vunpack.c.l.b16 %v495
    %v508 = vunpack.c.l.b16 %v496
    %v509 = vpack.c.b16 %v504, %v503
    %v510 = vpack.c.b16 %v506, %v505
    %v511 = vpack.c.b16 %v508, %v507
    %v516 = vsel %vm230, %v486, 0
    %v519 = vsel %vm230, %v487, 0
    %v522 = vsel %vm230, %v488, 0
    %v525 = vsel %vm230, %v489, 0
    %527 = vmatprep.subr.bf16.mxu0 0
    %528 = vmatpush1.bf16.msra.mxu0 0
    %529 = vmatprep.subr.bf16.mxu0 0
    %530 = vmatpush1.bf16.msra.mxu0 0
    %531 = vmatprep.subr.bf16.mxu0 0
    %532 = vmatpush1.bf16.msra.mxu0 0
    %533 = vmatprep.subr.bf16.mxu0 0
    %534 = vmatpush1.bf16.msra.mxu0 0
    %535 = vmatprep.subr.bf16.mxu0 0
    %536 = vmatpush1.bf16.msra.mxu0 0
    %537 = vmatprep.subr.bf16.mxu0 0
    %538 = vmatpush1.bf16.msra.mxu0 %v511
    %539 = vmatprep.subr.bf16.mxu0 0
    %540 = vmatpush1.bf16.msra.mxu0 %v510
    %541 = vmatprep.subr.bf16.mxu0 0
    %542 = vmatpush1.bf16.msra.mxu0 %v509
    %543 = vmatprep.subr.bf16.mxu0 0
    %544 = vmatpush2.bf16.msra.mxu0 0
    %545 = vmatprep.subr.bf16.mxu0 0
    %546 = vmatpush2.bf16.msra.mxu0 0
    %547 = vmatprep.subr.bf16.mxu0 0
    %548 = vmatpush2.bf16.msra.mxu0 0
    %549 = vmatprep.subr.bf16.mxu0 0
    %550 = vmatpush2.bf16.msra.mxu0 0
    %551 = vmatprep.subr.bf16.mxu0 0
    %552 = vmatpush2.bf16.msra.mxu0 0
    %553 = vmatprep.subr.bf16.mxu0 0
    %554 = vmatpush2.bf16.msra.mxu0 0
    %555 = vmatprep.subr.bf16.mxu0 0
    %556 = vmatpush2.bf16.msra.mxu0 0
    %557 = vmatprep.subr.bf16.mxu0 0
    %558 = vmatpush2.bf16.msra.mxu0 0
    %559 = vmatprep.mubr.bf16.mxu0 0
    %560 = vmatmul.mubr.bf16.gmra.mxu0 %v516
    %v561 = vpop.f32.mrf.mxu0
    %v562 = vadd.f32 0.0, %v561
    %v563 = vpop.f32.mrf.mxu0
    %v564 = vpop.f32.mrf.mxu0
    %v565 = vadd.f32 0.0, %v564
    %v566 = vpop.f32.mrf.mxu0
    %567 = vmatprep.mubr.bf16.mxu0 0
    %568 = vmatmul.mubr.bf16.gmra.mxu0 %v519
    %v569 = vpop.f32.mrf.mxu0
    %v570 = vadd.f32 0.0, %v569
    %v571 = vpop.f32.mrf.mxu0
    %v572 = vpop.f32.mrf.mxu0
    %v573 = vadd.f32 0.0, %v572
    %v574 = vpop.f32.mrf.mxu0
    %575 = vmatprep.mubr.bf16.mxu0 0
    %576 = vmatmul.mubr.bf16.gmra.mxu0 %v522
    %v577 = vpop.f32.mrf.mxu0
    %v578 = vadd.f32 0.0, %v577
    %v579 = vpop.f32.mrf.mxu0
    %v580 = vpop.f32.mrf.mxu0
    %v581 = vadd.f32 0.0, %v580
    %v582 = vpop.f32.mrf.mxu0
    %583 = vmatprep.mubr.bf16.mxu0 0
    %584 = vmatmul.mubr.bf16.gmra.mxu0 %v525
    %v585 = vpop.f32.mrf.mxu0
    %v586 = vadd.f32 0.0, %v585
    %v587 = vpop.f32.mrf.mxu0
    %v588 = vpop.f32.mrf.mxu0
    %v589 = vadd.f32 0.0, %v588
    %v590 = vpop.f32.mrf.mxu0
    %591 = vdwg.mxu0
    %v592 = vsel %vm230, %v562, -inf
    %v593 = vsel %vm230, %v565, -inf
    %v594 = vsel %vm230, %v570, -inf
    %v595 = vsel %vm230, %v573, -inf
    %v596 = vsel %vm230, %v578, -inf
    %v597 = vmax.f32 %v592, %v596
    %v598 = vsel %vm230, %v581, -inf
    %v599 = vmax.f32 %v593, %v598
    %v600 = vsel %vm230, %v586, -inf
    %v601 = vmax.f32 %v594, %v600
    %v602 = vsel %vm230, %v589, -inf
    %v603 = vmax.f32 %v595, %v602
    %v604 = vmax.f32 %v597, %v599
    %v605 = vmax.f32 %v601, %v603
    %v606 = vmax.f32 %v604, %v605
    %v607 = vsub.f32 %v562, %v606
    %v608 = vsub.f32 %v565, %v606
    %v609 = vsub.f32 %v570, %v606
    %v610 = vsub.f32 %v573, %v606
    %v611 = vsub.f32 %v578, %v606
    %v612 = vsub.f32 %v581, %v606
    %v613 = vsub.f32 %v586, %v606
    %v614 = vsub.f32 %v589, %v606
    %v615 = vmul.f32 %v607, 1.442695
    %v616 = vpow.pop %v615
    %v617 = vmul.f32 %v608, 1.442695
    %v618 = vpow.pop %v617
    %v619 = vmul.f32 %v609, 1.442695
    %v620 = vpow.pop %v619
    %v621 = vmul.f32 %v610, 1.442695
    %v622 = vpow.pop %v621
    %v623 = vmul.f32 %v611, 1.442695
    %v624 = vpow.pop %v623
    %v625 = vmul.f32 %v612, 1.442695
    %v626 = vpow.pop %v625
    %v627 = vmul.f32 %v613, 1.442695
    %v628 = vpow.pop %v627
    %v629 = vmul.f32 %v614, 1.442695
    %v630 = vpow.pop %v629
    %v631 = vsel %vm230, %v616, 0.0
    %v632 = vsel %vm230, %v618, 0.0
    %v633 = vadd.f32 %v631, %v632
    %v634 = vsel %vm230, %v620, 0.0
    %v635 = vadd.f32 %v633, %v634
    %v636 = vsel %vm230, %v622, 0.0
    %v637 = vadd.f32 %v635, %v636
    %v638 = vsel %vm230, %v624, 0.0
    %v639 = vadd.f32 %v637, %v638
    %v640 = vsel %vm230, %v626, 0.0
    %v641 = vadd.f32 %v639, %v640
    %v642 = vsel %vm230, %v628, 0.0
    %v643 = vadd.f32 %v641, %v642
    %v644 = vsel %vm230, %v630, 0.0
    %v645 = vadd.f32 %v643, %v644
    %v646 = vrcp.pop %v645
    %v647 = vmul.f32 %v616, %v646
    %v648 = vmul.f32 %v618, %v646
    %v649 = vmul.f32 %v620, %v646
    %v650 = vmul.f32 %v622, %v646
    %v651 = vmul.f32 %v624, %v646
    %v652 = vmul.f32 %v626, %v646
    %v653 = vmul.f32 %v628, %v646
    %v654 = vmul.f32 %v630, %v646
    %v655 = vpack.c.bf16 %v648, %v647
    %v656 = vpack.c.bf16 %v650, %v649
    %v657 = vpack.c.bf16 %v652, %v651
    %v658 = vpack.c.bf16 %v654, %v653
    %s659 = scalar_lea.vmem [#allocation4], 168
    %v660 = vld [vmem:[%s659] sm:$0xf]
    %v661 = vld [vmem:[%s659 + $0x4] sm:$0xf]
    %v662 = vld [vmem:[%s659 + $0x8] sm:$0xf]
    %v663 = vld [vmem:[%s659 + $0xc] sm:$0xf]
    %v664 = vld [vmem:[%s659 + $0x10] sm:$0xf]
    %v665 = vld [vmem:[%s659 + $0x14] sm:$0xf]
    %v672 = vunpack.c.l.b16 %v660
    %v673 = vunpack.c.l.b16 %v661
    %v674 = vunpack.c.l.b16 %v662
    %v675 = vunpack.c.l.b16 %v663
    %v676 = vunpack.c.l.b16 %v664
    %v677 = vunpack.c.l.b16 %v665
    %v678 = vpack.c.b16 %v673, %v672
    %v679 = vpack.c.b16 %v675, %v674
    %v680 = vpack.c.b16 %v677, %v676
    %v685 = vsel %vm230, %v655, 0
    %v688 = vsel %vm230, %v656, 0
    %v691 = vsel %vm230, %v657, 0
    %v694 = vsel %vm230, %v658, 0
    %696 = vmatprep.subr.bf16.mxu0 0
    %697 = vmatpush1.bf16.msra.mxu0 0
    %698 = vmatprep.subr.bf16.mxu0 0
    %699 = vmatpush1.bf16.msra.mxu0 0
    %700 = vmatprep.subr.bf16.mxu0 0
    %701 = vmatpush1.bf16.msra.mxu0 0
    %702 = vmatprep.subr.bf16.mxu0 0
    %703 = vmatpush1.bf16.msra.mxu0 0
    %704 = vmatprep.subr.bf16.mxu0 0
    %705 = vmatpush1.bf16.msra.mxu0 0
    %706 = vmatprep.subr.bf16.mxu0 0
    %707 = vmatpush1.bf16.msra.mxu0 %v680
    %708 = vmatprep.subr.bf16.mxu0 0
    %709 = vmatpush1.bf16.msra.mxu0 %v679
    %710 = vmatprep.subr.bf16.mxu0 0
    %711 = vmatpush1.bf16.msra.mxu0 %v678
    %712 = vmatprep.subr.bf16.mxu0 0
    %713 = vmatpush2.bf16.msra.mxu0 0
    %714 = vmatprep.subr.bf16.mxu0 0
    %715 = vmatpush2.bf16.msra.mxu0 0
    %716 = vmatprep.subr.bf16.mxu0 0
    %717 = vmatpush2.bf16.msra.mxu0 0
    %718 = vmatprep.subr.bf16.mxu0 0
    %719 = vmatpush2.bf16.msra.mxu0 0
    %720 = vmatprep.subr.bf16.mxu0 0
    %721 = vmatpush2.bf16.msra.mxu0 0
    %722 = vmatprep.subr.bf16.mxu0 0
    %723 = vmatpush2.bf16.msra.mxu0 0
    %724 = vmatprep.subr.bf16.mxu0 0
    %725 = vmatpush2.bf16.msra.mxu0 0
    %726 = vmatprep.subr.bf16.mxu0 0
    %727 = vmatpush2.bf16.msra.mxu0 0
    %728 = vmatprep.mubr.bf16.mxu0 0
    %729 = vmatmul.mubr.bf16.gmra.mxu0 %v685
    %v730 = vpop.f32.mrf.mxu0
    %v731 = vadd.f32 0.0, %v730
    %v732 = vpop.f32.mrf.mxu0
    %v733 = vpop.f32.mrf.mxu0
    %v734 = vadd.f32 0.0, %v733
    %v735 = vpop.f32.mrf.mxu0
    %736 = vmatprep.mubr.bf16.mxu0 0
    %737 = vmatmul.mubr.bf16.gmra.mxu0 %v688
    %v738 = vpop.f32.mrf.mxu0
    %v739 = vadd.f32 0.0, %v738
    %v740 = vpop.f32.mrf.mxu0
    %v741 = vpop.f32.mrf.mxu0
    %v742 = vadd.f32 0.0, %v741
    %v743 = vpop.f32.mrf.mxu0
    %744 = vmatprep.mubr.bf16.mxu0 0
    %745 = vmatmul.mubr.bf16.gmra.mxu0 %v691
    %v746 = vpop.f32.mrf.mxu0
    %v747 = vadd.f32 0.0, %v746
    %v748 = vpop.f32.mrf.mxu0
    %v749 = vpop.f32.mrf.mxu0
    %v750 = vadd.f32 0.0, %v749
    %v751 = vpop.f32.mrf.mxu0
    %752 = vmatprep.mubr.bf16.mxu0 0
    %753 = vmatmul.mubr.bf16.gmra.mxu0 %v694
    %v754 = vpop.f32.mrf.mxu0
    %v755 = vadd.f32 0.0, %v754
    %v756 = vpop.f32.mrf.mxu0
    %v757 = vpop.f32.mrf.mxu0
    %v758 = vadd.f32 0.0, %v757
    %v759 = vpop.f32.mrf.mxu0
    %760 = vdwg.mxu0
    %v761 = vmul.f32 %v731, %v373
    %v762 = vmul.f32 %v734, %v376
    %v763 = vmul.f32 %v739, %v381
    %v764 = vmul.f32 %v742, %v384
    %v765 = vmul.f32 %v747, %v389
    %v766 = vmul.f32 %v750, %v392
    %v767 = vmul.f32 %v755, %v397
    %v768 = vmul.f32 %v758, %v400
    %v769 = vsel %vm230, %v761, 0.0
    %v770 = vsel %vm230, %v762, 0.0
    %v771 = vadd.f32 %v769, %v770
    %v772 = vsel %vm230, %v763, 0.0
    %v773 = vadd.f32 %v771, %v772
    %v774 = vsel %vm230, %v764, 0.0
    %v775 = vadd.f32 %v773, %v774
    %v776 = vsel %vm230, %v765, 0.0
    %v777 = vadd.f32 %v775, %v776
    %v778 = vsel %vm230, %v766, 0.0
    %v779 = vadd.f32 %v777, %v778
    %v780 = vsel %vm230, %v767, 0.0
    %v781 = vadd.f32 %v779, %v780
    %v782 = vsel %vm230, %v768, 0.0
    %v783 = vadd.f32 %v781, %v782
    %v784 = vpack.c.bf16 %v783, %v783
    %s785 = scalar_lea.vmem [#allocation4], 72
    %v786 = vld [vmem:[%s785] sm:$0xf]
    %v787 = vld [vmem:[%s785 + $0x4] sm:$0xf]
    %v788 = vld [vmem:[%s785 + $0x8] sm:$0xf]
    %v789 = vld [vmem:[%s785 + $0xc] sm:$0xf]
    %v790 = vld [vmem:[%s785 + $0x10] sm:$0xf]
    %v791 = vld [vmem:[%s785 + $0x14] sm:$0xf]
    %v792 = vld [vmem:[%s3 + $0x4] sm:$0x1]
    %v793 = vlaneseq
    %v794 = vshrl.u32 %v793, 7
    %v795 = vsub.s32 0, %v794
    %v796 = vrot.slane %v792, %v795
    %v803 = vunpack.c.l.b16 %v786
    %v804 = vunpack.c.l.b16 %v787
    %v805 = vunpack.c.l.b16 %v788
    %v806 = vunpack.c.l.b16 %v789
    %v807 = vunpack.c.l.b16 %v790
    %v808 = vunpack.c.l.b16 %v791
    %v809 = vpack.c.b16 %v804, %v803
    %v810 = vpack.c.b16 %v806, %v805
    %v811 = vpack.c.b16 %v808, %v807
    %v816 = vsel %vm230, %v784, 0
    %818 = vmatprep.subr.bf16.mxu0 0
    %819 = vmatpush1.bf16.msra.mxu0 0
    %820 = vmatprep.subr.bf16.mxu0 0
    %821 = vmatpush1.bf16.msra.mxu0 0
    %822 = vmatprep.subr.bf16.mxu0 0
    %823 = vmatpush1.bf16.msra.mxu0 0
    %824 = vmatprep.subr.bf16.mxu0 0
    %825 = vmatpush1.bf16.msra.mxu0 0
    %826 = vmatprep.subr.bf16.mxu0 0
    %827 = vmatpush1.bf16.msra.mxu0 0
    %828 = vmatprep.subr.bf16.mxu0 0
    %829 = vmatpush1.bf16.msra.mxu0 %v811
    %830 = vmatprep.subr.bf16.mxu0 0
    %831 = vmatpush1.bf16.msra.mxu0 %v810
    %832 = vmatprep.subr.bf16.mxu0 0
    %833 = vmatpush1.bf16.msra.mxu0 %v809
    %834 = vmatprep.subr.bf16.mxu0 0
    %835 = vmatpush2.bf16.msra.mxu0 0
    %836 = vmatprep.subr.bf16.mxu0 0
    %837 = vmatpush2.bf16.msra.mxu0 0
    %838 = vmatprep.subr.bf16.mxu0 0
    %839 = vmatpush2.bf16.msra.mxu0 0
    %840 = vmatprep.subr.bf16.mxu0 0
    %841 = vmatpush2.bf16.msra.mxu0 0
    %842 = vmatprep.subr.bf16.mxu0 0
    %843 = vmatpush2.bf16.msra.mxu0 0
    %844 = vmatprep.subr.bf16.mxu0 0
    %845 = vmatpush2.bf16.msra.mxu0 0
    %846 = vmatprep.subr.bf16.mxu0 0
    %847 = vmatpush2.bf16.msra.mxu0 0
    %848 = vmatprep.subr.bf16.mxu0 0
    %849 = vmatpush2.bf16.msra.mxu0 0
    %850 = vmatprep.mubr.bf16.mxu0 0
    %851 = vmatmul.mubr.bf16.gmra.mxu0 %v816
    %v852 = vpop.f32.mrf.mxu0
    %v853 = vadd.f32 %v796, %v852
    %v854 = vpop.f32.mrf.mxu0
    %v855 = vpop.f32.mrf.mxu0
    %v856 = vpop.f32.mrf.mxu0
    %857 = vdwg.mxu0
    %v858 = vadd.f32 %v166, %v853
    %v859 = vadd.f32 %v169, %v853
    %v860 = vadd.f32 %v174, %v853
    %v861 = vadd.f32 %v177, %v853
    %v862 = vadd.f32 %v182, %v853
    %v863 = vadd.f32 %v185, %v853
    %v864 = vadd.f32 %v190, %v853
    %v865 = vadd.f32 %v193, %v853
    %v866 = vsel %vm230, %v858, 0.0
    %867 = vadd.xlane.f32.xlu0 %v866
    %v868 = vpop.xlane.xlu0 %867
    %v869 = vsel %vm230, %v859, 0.0
    %870 = vadd.xlane.f32.xlu0 %v869
    %v871 = vpop.xlane.xlu0 %870
    %v872 = vsel %vm230, %v860, 0.0
    %873 = vadd.xlane.f32.xlu0 %v872
    %v874 = vpop.xlane.xlu0 %873
    %v875 = vsel %vm230, %v861, 0.0
    %876 = vadd.xlane.f32.xlu0 %v875
    %v877 = vpop.xlane.xlu0 %876
    %v878 = vsel %vm230, %v862, 0.0
    %879 = vadd.xlane.f32.xlu0 %v878
    %v880 = vpop.xlane.xlu0 %879
    %v881 = vsel %vm230, %v863, 0.0
    %882 = vadd.xlane.f32.xlu0 %v881
    %v883 = vpop.xlane.xlu0 %882
    %v884 = vsel %vm230, %v864, 0.0
    %885 = vadd.xlane.f32.xlu0 %v884
    %v886 = vpop.xlane.xlu0 %885
    %v887 = vsel %vm230, %v865, 0.0
    %888 = vadd.xlane.f32.xlu0 %v887
    %v889 = vpop.xlane.xlu0 %888
    %v890 = vrcp.pop 48.0
    %v891 = vmul.f32 %v868, %v890
    %v892 = vmul.f32 %v871, %v890
    %v893 = vmul.f32 %v874, %v890
    %v894 = vmul.f32 %v877, %v890
    %v895 = vmul.f32 %v880, %v890
    %v896 = vmul.f32 %v883, %v890
    %v897 = vmul.f32 %v886, %v890
    %v898 = vmul.f32 %v889, %v890
    %v899 = vsub.f32 %v858, %v891
    %v900 = vsub.f32 %v859, %v892
    %v901 = vsub.f32 %v860, %v893
    %v902 = vsub.f32 %v861, %v894
    %v903 = vsub.f32 %v862, %v895
    %v904 = vsub.f32 %v863, %v896
    %v905 = vsub.f32 %v864, %v897
    %v906 = vsub.f32 %v865, %v898
    %v907 = vmul.f32 %v899, %v899
    %v908 = vmul.f32 %v900, %v900
    %v909 = vmul.f32 %v901, %v901
    %v910 = vmul.f32 %v902, %v902
    %v911 = vmul.f32 %v903, %v903
    %v912 = vmul.f32 %v904, %v904
    %v913 = vmul.f32 %v905, %v905
    %v914 = vmul.f32 %v906, %v906
    %v915 = vsel %vm230, %v907, 0.0
    %916 = vadd.xlane.f32.xlu0 %v915
    %v917 = vpop.xlane.xlu0 %916
    %v918 = vsel %vm230, %v908, 0.0
    %919 = vadd.xlane.f32.xlu0 %v918
    %v920 = vpop.xlane.xlu0 %919
    %v921 = vsel %vm230, %v909, 0.0
    %922 = vadd.xlane.f32.xlu0 %v921
    %v923 = vpop.xlane.xlu0 %922
    %v924 = vsel %vm230, %v910, 0.0
    %925 = vadd.xlane.f32.xlu0 %v924
    %v926 = vpop.xlane.xlu0 %925
    %v927 = vsel %vm230, %v911, 0.0
    %928 = vadd.xlane.f32.xlu0 %v927
    %v929 = vpop.xlane.xlu0 %928
    %v930 = vsel %vm230, %v912, 0.0
    %931 = vadd.xlane.f32.xlu0 %v930
    %v932 = vpop.xlane.xlu0 %931
    %v933 = vsel %vm230, %v913, 0.0
    %934 = vadd.xlane.f32.xlu0 %v933
    %v935 = vpop.xlane.xlu0 %934
    %v936 = vsel %vm230, %v914, 0.0
    %937 = vadd.xlane.f32.xlu0 %v936
    %v938 = vpop.xlane.xlu0 %937
    %v939 = vmul.f32 %v917, %v890
    %v940 = vmul.f32 %v920, %v890
    %v941 = vmul.f32 %v923, %v890
    %v942 = vmul.f32 %v926, %v890
    %v943 = vmul.f32 %v929, %v890
    %v944 = vmul.f32 %v932, %v890
    %v945 = vmul.f32 %v935, %v890
    %v946 = vmul.f32 %v938, %v890
    %v947 = vadd.f32 %v939, 1e-05
    %v948 = vadd.f32 %v940, 1e-05
    %v949 = vadd.f32 %v941, 1e-05
    %v950 = vadd.f32 %v942, 1e-05
    %v951 = vadd.f32 %v943, 1e-05
    %v952 = vadd.f32 %v944, 1e-05
    %v953 = vadd.f32 %v945, 1e-05
    %v954 = vadd.f32 %v946, 1e-05
    %v955 = vrsqrt.pop %v947
    %v956 = vrsqrt.pop %v948
    %v957 = vrsqrt.pop %v949
    %v958 = vrsqrt.pop %v950
    %v959 = vrsqrt.pop %v951
    %v960 = vrsqrt.pop %v952
    %v961 = vrsqrt.pop %v953
    %v962 = vrsqrt.pop %v954
    %v963 = vmul.f32 %v899, %v955
    %v964 = vmul.f32 %v900, %v956
    %v965 = vmul.f32 %v901, %v957
    %v966 = vmul.f32 %v902, %v958
    %v967 = vmul.f32 %v903, %v959
    %v968 = vmul.f32 %v904, %v960
    %v969 = vmul.f32 %v905, %v961
    %v970 = vmul.f32 %v906, %v962
    %v971 = vld [vmem:[%s3 + $0x5] sm:$0x1]
    %v972 = vlaneseq
    %v973 = vshrl.u32 %v972, 7
    %v974 = vsub.s32 0, %v973
    %v975 = vrot.slane %v971, %v974
    %v976 = vmul.f32 %v963, %v975
    %v977 = vmul.f32 %v964, %v975
    %v978 = vmul.f32 %v965, %v975
    %v979 = vmul.f32 %v966, %v975
    %v980 = vmul.f32 %v967, %v975
    %v981 = vmul.f32 %v968, %v975
    %v982 = vmul.f32 %v969, %v975
    %v983 = vmul.f32 %v970, %v975
    %v984 = vld [vmem:[%s3 + $0x6] sm:$0x1]
    %v985 = vlaneseq
    %v986 = vshrl.u32 %v985, 7
    %v987 = vsub.s32 0, %v986
    %v988 = vrot.slane %v984, %v987
    %v989 = vadd.f32 %v976, %v988
    %v990 = vadd.f32 %v977, %v988
    %v991 = vadd.f32 %v978, %v988
    %v992 = vadd.f32 %v979, %v988
    %v993 = vadd.f32 %v980, %v988
    %v994 = vadd.f32 %v981, %v988
    %v995 = vadd.f32 %v982, %v988
    %v996 = vadd.f32 %v983, %v988
    %v997 = vpack.c.bf16 %v990, %v989
    %v998 = vpack.c.bf16 %v992, %v991
    %v999 = vpack.c.bf16 %v994, %v993
    %v1000 = vpack.c.bf16 %v996, %v995
    %s1001 = scalar_lea.vmem [#allocation4], 96
    %v1002 = vld [vmem:[%s1001] sm:$0xf]
    %v1003 = vld [vmem:[%s1001 + $0x4] sm:$0xf]
    %v1004 = vld [vmem:[%s1001 + $0x8] sm:$0xf]
    %v1005 = vld [vmem:[%s1001 + $0xc] sm:$0xf]
    %v1006 = vld [vmem:[%s1001 + $0x10] sm:$0xf]
    %v1007 = vld [vmem:[%s1001 + $0x14] sm:$0xf]
    %v1008 = vld [vmem:[%s3 + $0x7] sm:$0x1]
    %v1009 = vlaneseq
    %v1010 = vshrl.u32 %v1009, 7
    %v1011 = vsub.s32 0, %v1010
    %v1012 = vrot.slane %v1008, %v1011
    %v1019 = vunpack.c.l.b16 %v1002
    %v1020 = vunpack.c.l.b16 %v1003
    %v1021 = vunpack.c.l.b16 %v1004
    %v1022 = vunpack.c.l.b16 %v1005
    %v1023 = vunpack.c.l.b16 %v1006
    %v1024 = vunpack.c.l.b16 %v1007
    %v1025 = vpack.c.b16 %v1020, %v1019
    %v1026 = vpack.c.b16 %v1022, %v1021
    %v1027 = vpack.c.b16 %v1024, %v1023
    %v1032 = vsel %vm230, %v997, 0
    %v1035 = vsel %vm230, %v998, 0
    %v1038 = vsel %vm230, %v999, 0
    %v1041 = vsel %vm230, %v1000, 0
    %1043 = vmatprep.subr.bf16.mxu0 0
    %1044 = vmatpush1.bf16.msra.mxu0 0
    %1045 = vmatprep.subr.bf16.mxu0 0
    %1046 = vmatpush1.bf16.msra.mxu0 0
    %1047 = vmatprep.subr.bf16.mxu0 0
    %1048 = vmatpush1.bf16.msra.mxu0 0
    %1049 = vmatprep.subr.bf16.mxu0 0
    %1050 = vmatpush1.bf16.msra.mxu0 0
    %1051 = vmatprep.subr.bf16.mxu0 0
    %1052 = vmatpush1.bf16.msra.mxu0 0
    %1053 = vmatprep.subr.bf16.mxu0 0
    %1054 = vmatpush1.bf16.msra.mxu0 %v1027
    %1055 = vmatprep.subr.bf16.mxu0 0
    %1056 = vmatpush1.bf16.msra.mxu0 %v1026
    %1057 = vmatprep.subr.bf16.mxu0 0
    %1058 = vmatpush1.bf16.msra.mxu0 %v1025
    %1059 = vmatprep.subr.bf16.mxu0 0
    %1060 = vmatpush2.bf16.msra.mxu0 0
    %1061 = vmatprep.subr.bf16.mxu0 0
    %1062 = vmatpush2.bf16.msra.mxu0 0
    %1063 = vmatprep.subr.bf16.mxu0 0
    %1064 = vmatpush2.bf16.msra.mxu0 0
    %1065 = vmatprep.subr.bf16.mxu0 0
    %1066 = vmatpush2.bf16.msra.mxu0 0
    %1067 = vmatprep.subr.bf16.mxu0 0
    %1068 = vmatpush2.bf16.msra.mxu0 0
    %1069 = vmatprep.subr.bf16.mxu0 0
    %1070 = vmatpush2.bf16.msra.mxu0 0
    %1071 = vmatprep.subr.bf16.mxu0 0
    %1072 = vmatpush2.bf16.msra.mxu0 0
    %1073 = vmatprep.subr.bf16.mxu0 0
    %1074 = vmatpush2.bf16.msra.mxu0 0
    %1075 = vmatprep.mubr.bf16.mxu0 0
    %1076 = vmatmul.mubr.bf16.gmra.mxu0 %v1032
    %v1077 = vpop.f32.mrf.mxu0
    %v1078 = vadd.f32 %v1012, %v1077
    %v1079 = vpop.f32.mrf.mxu0
    %v1080 = vpop.f32.mrf.mxu0
    %v1081 = vadd.f32 %v1012, %v1080
    %v1082 = vpop.f32.mrf.mxu0
    %1083 = vmatprep.mubr.bf16.mxu0 0
    %1084 = vmatmul.mubr.bf16.gmra.mxu0 %v1035
    %v1085 = vpop.f32.mrf.mxu0
    %v1086 = vadd.f32 %v1012, %v1085
    %v1087 = vpop.f32.mrf.mxu0
    %v1088 = vpop.f32.mrf.mxu0
    %v1089 = vadd.f32 %v1012, %v1088
    %v1090 = vpop.f32.mrf.mxu0
    %1091 = vmatprep.mubr.bf16.mxu0 0
    %1092 = vmatmul.mubr.bf16.gmra.mxu0 %v1038
    %v1093 = vpop.f32.mrf.mxu0
    %v1094 = vadd.f32 %v1012, %v1093
    %v1095 = vpop.f32.mrf.mxu0
    %v1096 = vpop.f32.mrf.mxu0
    %v1097 = vadd.f32 %v1012, %v1096
    %v1098 = vpop.f32.mrf.mxu0
    %1099 = vmatprep.mubr.bf16.mxu0 0
    %1100 = vmatmul.mubr.bf16.gmra.mxu0 %v1041
    %v1101 = vpop.f32.mrf.mxu0
    %v1102 = vadd.f32 %v1012, %v1101
    %v1103 = vpop.f32.mrf.mxu0
    %v1104 = vpop.f32.mrf.mxu0
    %v1105 = vadd.f32 %v1012, %v1104
    %v1106 = vpop.f32.mrf.mxu0
    %1107 = vdwg.mxu0
    %v1108 = vmax.f32 %v1078, 0.0
    %v1109 = vmax.f32 %v1081, 0.0
    %v1110 = vmax.f32 %v1086, 0.0
    %v1111 = vmax.f32 %v1089, 0.0
    %v1112 = vmax.f32 %v1094, 0.0
    %v1113 = vmax.f32 %v1097, 0.0
    %v1114 = vmax.f32 %v1102, 0.0
    %v1115 = vmax.f32 %v1105, 0.0
    %v1116 = vpack.c.bf16 %v1109, %v1108
    %v1117 = vpack.c.bf16 %v1111, %v1110
    %v1118 = vpack.c.bf16 %v1113, %v1112
    %v1119 = vpack.c.bf16 %v1115, %v1114
    %s1120 = scalar_lea.vmem [#allocation4], 120
    %v1121 = vld [vmem:[%s1120] sm:$0xf]
    %v1122 = vld [vmem:[%s1120 + $0x4] sm:$0xf]
    %v1123 = vld [vmem:[%s1120 + $0x8] sm:$0xf]
    %v1124 = vld [vmem:[%s1120 + $0xc] sm:$0xf]
    %v1125 = vld [vmem:[%s1120 + $0x10] sm:$0xf]
    %v1126 = vld [vmem:[%s1120 + $0x14] sm:$0xf]
    %v1127 = vld [vmem:[%s3 + $0x8] sm:$0x1]
    %v1128 = vlaneseq
    %v1129 = vshrl.u32 %v1128, 7
    %v1130 = vsub.s32 0, %v1129
    %v1131 = vrot.slane %v1127, %v1130
    %v1138 = vunpack.c.l.b16 %v1121
    %v1139 = vunpack.c.l.b16 %v1122
    %v1140 = vunpack.c.l.b16 %v1123
    %v1141 = vunpack.c.l.b16 %v1124
    %v1142 = vunpack.c.l.b16 %v1125
    %v1143 = vunpack.c.l.b16 %v1126
    %v1144 = vpack.c.b16 %v1139, %v1138
    %v1145 = vpack.c.b16 %v1141, %v1140
    %v1146 = vpack.c.b16 %v1143, %v1142
    %v1151 = vsel %vm230, %v1116, 0
    %v1154 = vsel %vm230, %v1117, 0
    %v1157 = vsel %vm230, %v1118, 0
    %v1160 = vsel %vm230, %v1119, 0
    %1162 = vmatprep.subr.bf16.mxu0 0
    %1163 = vmatpush1.bf16.msra.mxu0 0
    %1164 = vmatprep.subr.bf16.mxu0 0
    %1165 = vmatpush1.bf16.msra.mxu0 0
    %1166 = vmatprep.subr.bf16.mxu0 0
    %1167 = vmatpush1.bf16.msra.mxu0 0
    %1168 = vmatprep.subr.bf16.mxu0 0
    %1169 = vmatpush1.bf16.msra.mxu0 0
    %1170 = vmatprep.subr.bf16.mxu0 0
    %1171 = vmatpush1.bf16.msra.mxu0 0
    %1172 = vmatprep.subr.bf16.mxu0 0
    %1173 = vmatpush1.bf16.msra.mxu0 %v1146
    %1174 = vmatprep.subr.bf16.mxu0 0
    %1175 = vmatpush1.bf16.msra.mxu0 %v1145
    %1176 = vmatprep.subr.bf16.mxu0 0
    %1177 = vmatpush1.bf16.msra.mxu0 %v1144
    %1178 = vmatprep.subr.bf16.mxu0 0
    %1179 = vmatpush2.bf16.msra.mxu0 0
    %1180 = vmatprep.subr.bf16.mxu0 0
    %1181 = vmatpush2.bf16.msra.mxu0 0
    %1182 = vmatprep.subr.bf16.mxu0 0
    %1183 = vmatpush2.bf16.msra.mxu0 0
    %1184 = vmatprep.subr.bf16.mxu0 0
    %1185 = vmatpush2.bf16.msra.mxu0 0
    %1186 = vmatprep.subr.bf16.mxu0 0
    %1187 = vmatpush2.bf16.msra.mxu0 0
    %1188 = vmatprep.subr.bf16.mxu0 0
    %1189 = vmatpush2.bf16.msra.mxu0 0
    %1190 = vmatprep.subr.bf16.mxu0 0
    %1191 = vmatpush2.bf16.msra.mxu0 0
    %1192 = vmatprep.subr.bf16.mxu0 0
    %1193 = vmatpush2.bf16.msra.mxu0 0
    %1194 = vmatprep.mubr.bf16.mxu0 0
    %1195 = vmatmul.mubr.bf16.gmra.mxu0 %v1151
    %v1196 = vpop.f32.mrf.mxu0
    %v1197 = vadd.f32 %v1131, %v1196
    %v1198 = vpop.f32.mrf.mxu0
    %v1199 = vpop.f32.mrf.mxu0
    %v1200 = vadd.f32 %v1131, %v1199
    %v1201 = vpop.f32.mrf.mxu0
    %1202 = vmatprep.mubr.bf16.mxu0 0
    %1203 = vmatmul.mubr.bf16.gmra.mxu0 %v1154
    %v1204 = vpop.f32.mrf.mxu0
    %v1205 = vadd.f32 %v1131, %v1204
    %v1206 = vpop.f32.mrf.mxu0
    %v1207 = vpop.f32.mrf.mxu0
    %v1208 = vadd.f32 %v1131, %v1207
    %v1209 = vpop.f32.mrf.mxu0
    %1210 = vmatprep.mubr.bf16.mxu0 0
    %1211 = vmatmul.mubr.bf16.gmra.mxu0 %v1157
    %v1212 = vpop.f32.mrf.mxu0
    %v1213 = vadd.f32 %v1131, %v1212
    %v1214 = vpop.f32.mrf.mxu0
    %v1215 = vpop.f32.mrf.mxu0
    %v1216 = vadd.f32 %v1131, %v1215
    %v1217 = vpop.f32.mrf.mxu0
    %1218 = vmatprep.mubr.bf16.mxu0 0
    %1219 = vmatmul.mubr.bf16.gmra.mxu0 %v1160
    %v1220 = vpop.f32.mrf.mxu0
    %v1221 = vadd.f32 %v1131, %v1220
    %v1222 = vpop.f32.mrf.mxu0
    %v1223 = vpop.f32.mrf.mxu0
    %v1224 = vadd.f32 %v1131, %v1223
    %v1225 = vpop.f32.mrf.mxu0
    %1226 = vdwg.mxu0
    %v1227 = vadd.f32 %v166, %v1197
    %v1228 = vadd.f32 %v169, %v1200
    %v1229 = vadd.f32 %v174, %v1205
    %v1230 = vadd.f32 %v177, %v1208
    %v1231 = vadd.f32 %v182, %v1213
    %v1232 = vadd.f32 %v185, %v1216
    %v1233 = vadd.f32 %v190, %v1221
    %v1234 = vadd.f32 %v193, %v1224
    %v1235 = vsel %vm230, %v1227, 0.0
    %1236 = vadd.xlane.f32.xlu0 %v1235
    %v1237 = vpop.xlane.xlu0 %1236
    %v1238 = vsel %vm230, %v1228, 0.0
    %1239 = vadd.xlane.f32.xlu0 %v1238
    %v1240 = vpop.xlane.xlu0 %1239
    %v1241 = vsel %vm230, %v1229, 0.0
    %1242 = vadd.xlane.f32.xlu0 %v1241
    %v1243 = vpop.xlane.xlu0 %1242
    %v1244 = vsel %vm230, %v1230, 0.0
    %1245 = vadd.xlane.f32.xlu0 %v1244
    %v1246 = vpop.xlane.xlu0 %1245
    %v1247 = vsel %vm230, %v1231, 0.0
    %1248 = vadd.xlane.f32.xlu0 %v1247
    %v1249 = vpop.xlane.xlu0 %1248
    %v1250 = vsel %vm230, %v1232, 0.0
    %1251 = vadd.xlane.f32.xlu0 %v1250
    %v1252 = vpop.xlane.xlu0 %1251
    %v1253 = vsel %vm230, %v1233, 0.0
    %1254 = vadd.xlane.f32.xlu0 %v1253
    %v1255 = vpop.xlane.xlu0 %1254
    %v1256 = vsel %vm230, %v1234, 0.0
    %1257 = vadd.xlane.f32.xlu0 %v1256
    %v1258 = vpop.xlane.xlu0 %1257
    %v1259 = vmul.f32 %v1237, %v890
    %v1260 = vmul.f32 %v1240, %v890
    %v1261 = vmul.f32 %v1243, %v890
    %v1262 = vmul.f32 %v1246, %v890
    %v1263 = vmul.f32 %v1249, %v890
    %v1264 = vmul.f32 %v1252, %v890
    %v1265 = vmul.f32 %v1255, %v890
    %v1266 = vmul.f32 %v1258, %v890
    %v1267 = vsub.f32 %v1227, %v1259
    %v1268 = vsub.f32 %v1228, %v1260
    %v1269 = vsub.f32 %v1229, %v1261
    %v1270 = vsub.f32 %v1230, %v1262
    %v1271 = vsub.f32 %v1231, %v1263
    %v1272 = vsub.f32 %v1232, %v1264
    %v1273 = vsub.f32 %v1233, %v1265
    %v1274 = vsub.f32 %v1234, %v1266
    %v1275 = vmul.f32 %v1267, %v1267
    %v1276 = vmul.f32 %v1268, %v1268
    %v1277 = vmul.f32 %v1269, %v1269
    %v1278 = vmul.f32 %v1270, %v1270
    %v1279 = vmul.f32 %v1271, %v1271
    %v1280 = vmul.f32 %v1272, %v1272
    %v1281 = vmul.f32 %v1273, %v1273
    %v1282 = vmul.f32 %v1274, %v1274
    %v1283 = vsel %vm230, %v1275, 0.0
    %1284 = vadd.xlane.f32.xlu0 %v1283
    %v1285 = vpop.xlane.xlu0 %1284
    %v1286 = vsel %vm230, %v1276, 0.0
    %1287 = vadd.xlane.f32.xlu0 %v1286
    %v1288 = vpop.xlane.xlu0 %1287
    %v1289 = vsel %vm230, %v1277, 0.0
    %1290 = vadd.xlane.f32.xlu0 %v1289
    %v1291 = vpop.xlane.xlu0 %1290
    %v1292 = vsel %vm230, %v1278, 0.0
    %1293 = vadd.xlane.f32.xlu0 %v1292
    %v1294 = vpop.xlane.xlu0 %1293
    %v1295 = vsel %vm230, %v1279, 0.0
    %1296 = vadd.xlane.f32.xlu0 %v1295
    %v1297 = vpop.xlane.xlu0 %1296
    %v1298 = vsel %vm230, %v1280, 0.0
    %1299 = vadd.xlane.f32.xlu0 %v1298
    %v1300 = vpop.xlane.xlu0 %1299
    %v1301 = vsel %vm230, %v1281, 0.0
    %1302 = vadd.xlane.f32.xlu0 %v1301
    %v1303 = vpop.xlane.xlu0 %1302
    %v1304 = vsel %vm230, %v1282, 0.0
    %1305 = vadd.xlane.f32.xlu0 %v1304
    %v1306 = vpop.xlane.xlu0 %1305
    %v1307 = vmul.f32 %v1285, %v890
    %v1308 = vmul.f32 %v1288, %v890
    %v1309 = vmul.f32 %v1291, %v890
    %v1310 = vmul.f32 %v1294, %v890
    %v1311 = vmul.f32 %v1297, %v890
    %v1312 = vmul.f32 %v1300, %v890
    %v1313 = vmul.f32 %v1303, %v890
    %v1314 = vmul.f32 %v1306, %v890
    %v1315 = vadd.f32 %v1307, 1e-05
    %v1316 = vadd.f32 %v1308, 1e-05
    %v1317 = vadd.f32 %v1309, 1e-05
    %v1318 = vadd.f32 %v1310, 1e-05
    %v1319 = vadd.f32 %v1311, 1e-05
    %v1320 = vadd.f32 %v1312, 1e-05
    %v1321 = vadd.f32 %v1313, 1e-05
    %v1322 = vadd.f32 %v1314, 1e-05
    %v1323 = vrsqrt.pop %v1315
    %v1324 = vrsqrt.pop %v1316
    %v1325 = vrsqrt.pop %v1317
    %v1326 = vrsqrt.pop %v1318
    %v1327 = vrsqrt.pop %v1319
    %v1328 = vrsqrt.pop %v1320
    %v1329 = vrsqrt.pop %v1321
    %v1330 = vrsqrt.pop %v1322
    %v1331 = vmul.f32 %v1267, %v1323
    %v1332 = vmul.f32 %v1268, %v1324
    %v1333 = vmul.f32 %v1269, %v1325
    %v1334 = vmul.f32 %v1270, %v1326
    %v1335 = vmul.f32 %v1271, %v1327
    %v1336 = vmul.f32 %v1272, %v1328
    %v1337 = vmul.f32 %v1273, %v1329
    %v1338 = vmul.f32 %v1274, %v1330
    %v1339 = vld [vmem:[%s3 + $0x9] sm:$0x1]
    %v1340 = vlaneseq
    %v1341 = vshrl.u32 %v1340, 7
    %v1342 = vsub.s32 0, %v1341
    %v1343 = vrot.slane %v1339, %v1342
    %v1344 = vmul.f32 %v1331, %v1343
    %v1345 = vmul.f32 %v1332, %v1343
    %v1346 = vmul.f32 %v1333, %v1343
    %v1347 = vmul.f32 %v1334, %v1343
    %v1348 = vmul.f32 %v1335, %v1343
    %v1349 = vmul.f32 %v1336, %v1343
    %v1350 = vmul.f32 %v1337, %v1343
    %v1351 = vmul.f32 %v1338, %v1343
    %v1352 = vld [vmem:[%s3 + $0xa] sm:$0x1]
    %v1353 = vlaneseq
    %v1354 = vshrl.u32 %v1353, 7
    %v1355 = vsub.s32 0, %v1354
    %v1356 = vrot.slane %v1352, %v1355
    %v1357 = vadd.f32 %v1344, %v1356
    %v1358 = vadd.f32 %v1345, %v1356
    %v1359 = vadd.f32 %v1346, %v1356
    %v1360 = vadd.f32 %v1347, %v1356
    %v1361 = vadd.f32 %v1348, %v1356
    %v1362 = vadd.f32 %v1349, %v1356
    %v1363 = vadd.f32 %v1350, %v1356
    %v1364 = vadd.f32 %v1351, %v1356
    %v1365 = vld [vmem:[#allocation7] sm:$0xff]
    %v1366 = vld [vmem:[#allocation7 + $0x8] sm:$0xf]
    %v1367 = vld [vmem:[#allocation7 + $0xc] sm:$0xff]
    %v1368 = vld [vmem:[#allocation7 + $0x14] sm:$0xf]
    %v1369 = vld [vmem:[#allocation7 + $0x18] sm:$0xff]
    %v1370 = vld [vmem:[#allocation7 + $0x20] sm:$0xf]
    %v1371 = vld [vmem:[#allocation7 + $0x24] sm:$0xff]
    %v1372 = vld [vmem:[#allocation7 + $0x2c] sm:$0xf]
    %v1373 = vld [vmem:[#allocation7 + $0x30] sm:$0xff]
    %v1374 = vld [vmem:[#allocation7 + $0x38] sm:$0xf]
    %v1375 = vld [vmem:[#allocation7 + $0x3c] sm:$0xff]
    %v1376 = vld [vmem:[#allocation7 + $0x44] sm:$0xf]
    %s1377 = scalar_lea.vmem [#allocation7], 72
    %v1378 = vld [vmem:[%s1377] sm:$0xff]
    %v1379 = vld [vmem:[%s1377 + $0x8] sm:$0xf]
    %v1380 = vld [vmem:[%s1377 + $0xc] sm:$0xff]
    %v1381 = vld [vmem:[%s1377 + $0x14] sm:$0xf]
    %v1382 = vld [vmem:[%s1377 + $0x18] sm:$0xff]
    %v1383 = vld [vmem:[%s1377 + $0x20] sm:$0xf]
    %v1384 = vld [vmem:[%s1377 + $0x24] sm:$0xff]
    %v1385 = vld [vmem:[%s1377 + $0x2c] sm:$0xf]
    %v1386 = vld [vmem:[%s1377 + $0x30] sm:$0xff]
    %v1387 = vld [vmem:[%s1377 + $0x38] sm:$0xf]
    %v1388 = vld [vmem:[%s1377 + $0x3c] sm:$0xff]
    %v1389 = vld [vmem:[%s1377 + $0x44] sm:$0xf]
    %v1390 = vld [vmem:[%s5] ss:$4 sm:$0x7]
    %s1391 = scalar_lea.vmem %s5, 1
    %v1392 = vld [vmem:[%s1391] ss:$4 sm:$0x7]
    %v1393 = vpack.c.bf16 %v1358, %v1357
    %v1394 = vpack.c.bf16 %v1360, %v1359
    %v1395 = vpack.c.bf16 %v1362, %v1361
    %v1396 = vpack.c.bf16 %v1364, %v1363
    %v1398 = vlaneseq
    %v1399 = vshrl.u32 %v1398, 7
    %v1400 = vsub.s32 0, %v1399
    %v1401 = vrot.slane %v1390, %v1400
    %v1402 = vlaneseq
    %v1403 = vshrl.u32 %v1402, 7
    %v1404 = vsub.s32 1, %v1403
    %v1405 = vrot.slane %v1390, %v1404
    %v1406 = vlaneseq
    %v1407 = vshrl.u32 %v1406, 7
    %v1408 = vsub.s32 2, %v1407
    %v1409 = vrot.slane %v1390, %v1408
    %v1425 = vunpack.c.l.b16 %v1365
    %v1426 = vunpack.c.h.b16 %v1365
    %v1427 = vunpack.c.l.b16 %v1366
    %v1428 = vunpack.c.l.b16 %v1367
    %v1429 = vunpack.c.h.b16 %v1367
    %v1430 = vunpack.c.l.b16 %v1368
    %v1431 = vunpack.c.l.b16 %v1369
    %v1432 = vunpack.c.h.b16 %v1369
    %v1433 = vunpack.c.l.b16 %v1370
    %v1434 = vunpack.c.l.b16 %v1371
    %v1435 = vunpack.c.h.b16 %v1371
    %v1436 = vunpack.c.l.b16 %v1372
    %v1437 = vunpack.c.l.b16 %v1373
    %v1438 = vunpack.c.h.b16 %v1373
    %v1439 = vunpack.c.l.b16 %v1374
    %v1440 = vunpack.c.l.b16 %v1375
    %v1441 = vunpack.c.h.b16 %v1375
    %v1442 = vunpack.c.l.b16 %v1376
    %v1443 = vpack.c.b16 %v1428, %v1425
    %v1444 = vpack.c.b16 %v1429, %v1426
    %v1445 = vpack.c.b16 %v1430, %v1427
    %v1446 = vpack.c.b16 %v1434, %v1431
    %v1447 = vpack.c.b16 %v1435, %v1432
    %v1448 = vpack.c.b16 %v1436, %v1433
    %v1449 = vpack.c.b16 %v1440, %v1437
    %v1450 = vpack.c.b16 %v1441, %v1438
    %v1451 = vpack.c.b16 %v1442, %v1439
    %v1462 = vsel %vm230, %v1393, 0
    %v1465 = vsel %vm230, %v1394, 0
    %v1468 = vsel %vm230, %v1395, 0
    %v1471 = vsel %vm230, %v1396, 0
    %1473 = vmatprep.subr.bf16.mxu0 0
    %1474 = vmatpush1.bf16.msra.mxu0 0
    %1475 = vmatprep.subr.bf16.mxu0 0
    %1476 = vmatpush1.bf16.msra.mxu0 0
    %1477 = vmatprep.subr.bf16.mxu0 0
    %1478 = vmatpush1.bf16.msra.mxu0 0
    %1479 = vmatprep.subr.bf16.mxu0 0
    %1480 = vmatpush1.bf16.msra.mxu0 0
    %1481 = vmatprep.subr.bf16.mxu0 0
    %1482 = vmatpush1.bf16.msra.mxu0 0
    %1483 = vmatprep.subr.bf16.mxu0 %v1450
    %1484 = vmatpush1.bf16.msra.mxu0 %v1449
    %1485 = vmatprep.subr.bf16.mxu0 %v1447
    %1486 = vmatpush1.bf16.msra.mxu0 %v1446
    %1487 = vmatprep.subr.bf16.mxu0 %v1444
    %1488 = vmatpush1.bf16.msra.mxu0 %v1443
    %1489 = vmatprep.subr.bf16.mxu0 0
    %1490 = vmatpush2.bf16.msra.mxu0 0
    %1491 = vmatprep.subr.bf16.mxu0 0
    %1492 = vmatpush2.bf16.msra.mxu0 0
    %1493 = vmatprep.subr.bf16.mxu0 0
    %1494 = vmatpush2.bf16.msra.mxu0 0
    %1495 = vmatprep.subr.bf16.mxu0 0
    %1496 = vmatpush2.bf16.msra.mxu0 0
    %1497 = vmatprep.subr.bf16.mxu0 0
    %1498 = vmatpush2.bf16.msra.mxu0 0
    %1499 = vmatprep.subr.bf16.mxu0 0
    %1500 = vmatpush2.bf16.msra.mxu0 0
    %1501 = vmatprep.subr.bf16.mxu0 0
    %1502 = vmatpush2.bf16.msra.mxu0 0
    %1503 = vmatprep.subr.bf16.mxu0 0
    %1504 = vmatpush2.bf16.msra.mxu0 0
    %1505 = vmatprep.mubr.bf16.mxu0 0
    %1506 = vmatmul.mubr.bf16.gmra.mxu0 %v1462
    %v1507 = vpop.f32.mrf.mxu0
    %v1508 = vadd.f32 %v1401, %v1507
    %v1509 = vpop.f32.mrf.mxu0
    %v1510 = vadd.f32 %v1405, %v1509
    %v1511 = vpop.f32.mrf.mxu0
    %v1512 = vadd.f32 %v1401, %v1511
    %v1513 = vpop.f32.mrf.mxu0
    %v1514 = vadd.f32 %v1405, %v1513
    %1515 = vmatprep.mubr.bf16.mxu0 0
    %1516 = vmatmul.mubr.bf16.gmra.mxu0 %v1465
    %v1517 = vpop.f32.mrf.mxu0
    %v1518 = vadd.f32 %v1401, %v1517
    %v1519 = vpop.f32.mrf.mxu0
    %v1520 = vadd.f32 %v1405, %v1519
    %v1521 = vpop.f32.mrf.mxu0
    %v1522 = vadd.f32 %v1401, %v1521
    %v1523 = vpop.f32.mrf.mxu0
    %v1524 = vadd.f32 %v1405, %v1523
    %1525 = vmatprep.mubr.bf16.mxu0 0
    %1526 = vmatmul.mubr.bf16.gmra.mxu0 %v1468
    %v1527 = vpop.f32.mrf.mxu0
    %v1528 = vadd.f32 %v1401, %v1527
    %v1529 = vpop.f32.mrf.mxu0
    %v1530 = vadd.f32 %v1405, %v1529
    %v1531 = vpop.f32.mrf.mxu0
    %v1532 = vadd.f32 %v1401, %v1531
    %v1533 = vpop.f32.mrf.mxu0
    %v1534 = vadd.f32 %v1405, %v1533
    %1535 = vmatprep.mubr.bf16.mxu0 0
    %1536 = vmatmul.mubr.bf16.gmra.mxu0 %v1471
    %v1537 = vpop.f32.mrf.mxu0
    %v1538 = vadd.f32 %v1401, %v1537
    %v1539 = vpop.f32.mrf.mxu0
    %v1540 = vadd.f32 %v1405, %v1539
    %v1541 = vpop.f32.mrf.mxu0
    %v1542 = vadd.f32 %v1401, %v1541
    %v1543 = vpop.f32.mrf.mxu0
    %v1544 = vadd.f32 %v1405, %v1543
    %1545 = vdwg.mxu0
    %1546 = vmatprep.subr.bf16.mxu0 0
    %1547 = vmatpush1.bf16.msra.mxu0 0
    %1548 = vmatprep.subr.bf16.mxu0 0
    %1549 = vmatpush1.bf16.msra.mxu0 0
    %1550 = vmatprep.subr.bf16.mxu0 0
    %1551 = vmatpush1.bf16.msra.mxu0 0
    %1552 = vmatprep.subr.bf16.mxu0 0
    %1553 = vmatpush1.bf16.msra.mxu0 0
    %1554 = vmatprep.subr.bf16.mxu0 0
    %1555 = vmatpush1.bf16.msra.mxu0 0
    %1556 = vmatprep.subr.bf16.mxu0 0
    %1557 = vmatpush1.bf16.msra.mxu0 %v1451
    %1558 = vmatprep.subr.bf16.mxu0 0
    %1559 = vmatpush1.bf16.msra.mxu0 %v1448
    %1560 = vmatprep.subr.bf16.mxu0 0
    %1561 = vmatpush1.bf16.msra.mxu0 %v1445
    %1562 = vmatprep.subr.bf16.mxu0 0
    %1563 = vmatpush2.bf16.msra.mxu0 0
    %1564 = vmatprep.subr.bf16.mxu0 0
    %1565 = vmatpush2.bf16.msra.mxu0 0
    %1566 = vmatprep.subr.bf16.mxu0 0
    %1567 = vmatpush2.bf16.msra.mxu0 0
    %1568 = vmatprep.subr.bf16.mxu0 0
    %1569 = vmatpush2.bf16.msra.mxu0 0
    %1570 = vmatprep.subr.bf16.mxu0 0
    %1571 = vmatpush2.bf16.msra.mxu0 0
    %1572 = vmatprep.subr.bf16.mxu0 0
    %1573 = vmatpush2.bf16.msra.mxu0 0
    %1574 = vmatprep.subr.bf16.mxu0 0
    %1575 = vmatpush2.bf16.msra.mxu0 0
    %1576 = vmatprep.subr.bf16.mxu0 0
    %1577 = vmatpush2.bf16.msra.mxu0 0
    %1578 = vmatprep.mubr.bf16.mxu0 0
    %1579 = vmatmul.mubr.bf16.gmra.mxu0 %v1462
    %v1580 = vpop.f32.mrf.mxu0
    %v1581 = vadd.f32 %v1409, %v1580
    %v1582 = vpop.f32.mrf.mxu0
    %v1583 = vpop.f32.mrf.mxu0
    %v1584 = vadd.f32 %v1409, %v1583
    %v1585 = vpop.f32.mrf.mxu0
    %1586 = vmatprep.mubr.bf16.mxu0 0
    %1587 = vmatmul.mubr.bf16.gmra.mxu0 %v1465
    %v1588 = vpop.f32.mrf.mxu0
    %v1589 = vadd.f32 %v1409, %v1588
    %v1590 = vpop.f32.mrf.mxu0
    %v1591 = vpop.f32.mrf.mxu0
    %v1592 = vadd.f32 %v1409, %v1591
    %v1593 = vpop.f32.mrf.mxu0
    %1594 = vmatprep.mubr.bf16.mxu0 0
    %1595 = vmatmul.mubr.bf16.gmra.mxu0 %v1468
    %v1596 = vpop.f32.mrf.mxu0
    %v1597 = vadd.f32 %v1409, %v1596
    %v1598 = vpop.f32.mrf.mxu0
    %v1599 = vpop.f32.mrf.mxu0
    %v1600 = vadd.f32 %v1409, %v1599
    %v1601 = vpop.f32.mrf.mxu0
    %1602 = vmatprep.mubr.bf16.mxu0 0
    %1603 = vmatmul.mubr.bf16.gmra.mxu0 %v1471
    %v1604 = vpop.f32.mrf.mxu0
    %v1605 = vadd.f32 %v1409, %v1604
    %v1606 = vpop.f32.mrf.mxu0
    %v1607 = vpop.f32.mrf.mxu0
    %v1608 = vadd.f32 %v1409, %v1607
    %v1609 = vpop.f32.mrf.mxu0
    %1610 = vdwg.mxu0
    %1611 = vst [vmem:[#allocation2] sm:$0xff] %v1508
    %1612 = vst [vmem:[#allocation2 + $0x8] sm:$0xff] %v1510
    %1613 = vst [vmem:[#allocation2 + $0x10] sm:$0xff] %v1581
    %1614 = vst [vmem:[#allocation2 + $0x18] sm:$0xff] %v1512
    %1615 = vst [vmem:[#allocation2 + $0x20] sm:$0xff] %v1514
    %1616 = vst [vmem:[#allocation2 + $0x28] sm:$0xff] %v1584
    %1617 = vst [vmem:[#allocation2 + $0x30] sm:$0xff] %v1518
    %1618 = vst [vmem:[#allocation2 + $0x38] sm:$0xff] %v1520
    %1619 = vst [vmem:[#allocation2 + $0x40] sm:$0xff] %v1589
    %1620 = vst [vmem:[#allocation2 + $0x48] sm:$0xff] %v1522
    %1621 = vst [vmem:[#allocation2 + $0x50] sm:$0xff] %v1524
    %1622 = vst [vmem:[#allocation2 + $0x58] sm:$0xff] %v1592
    %1623 = vst [vmem:[#allocation2 + $0x60] sm:$0xff] %v1528
    %1624 = vst [vmem:[#allocation2 + $0x68] sm:$0xff] %v1530
    %1625 = vst [vmem:[#allocation2 + $0x70] sm:$0xff] %v1597
    %1626 = vst [vmem:[#allocation2 + $0x78] sm:$0xff] %v1532
    %1627 = vst [vmem:[#allocation2 + $0x80] sm:$0xff] %v1534
    %1628 = vst [vmem:[#allocation2 + $0x88] sm:$0xff] %v1600
    %1629 = vst [vmem:[#allocation2 + $0x90] sm:$0xff] %v1538
    %1630 = vst [vmem:[#allocation2 + $0x98] sm:$0xff] %v1540
    %1631 = vst [vmem:[#allocation2 + $0xa0] sm:$0xff] %v1605
    %1632 = vst [vmem:[#allocation2 + $0xa8] sm:$0xff] %v1542
    %1633 = vst [vmem:[#allocation2 + $0xb0] sm:$0xff] %v1544
    %1634 = vst [vmem:[#allocation2 + $0xb8] sm:$0xff] %v1608
    %v1635 = vld [vmem:[#allocation2] sm:$0xff]
    %v1636 = vld [vmem:[#allocation2 + $0x8] sm:$0xff]
    %v1637 = vld [vmem:[#allocation2 + $0x10] sm:$0xff]
    %v1639 = vlaneseq
    %v1640 = vshrl.u32 %v1639, 7
    %v1641 = vsub.s32 0, %v1640
    %v1642 = vrot.slane %v1392, %v1641
    %v1643 = vlaneseq
    %v1644 = vshrl.u32 %v1643, 7
    %v1645 = vsub.s32 1, %v1644
    %v1646 = vrot.slane %v1392, %v1645
    %v1647 = vlaneseq
    %v1648 = vshrl.u32 %v1647, 7
    %v1649 = vsub.s32 2, %v1648
    %v1650 = vrot.slane %v1392, %v1649
    %v1666 = vunpack.c.l.b16 %v1378
    %v1667 = vunpack.c.h.b16 %v1378
    %v1668 = vunpack.c.l.b16 %v1379
    %v1669 = vunpack.c.l.b16 %v1380
    %v1670 = vunpack.c.h.b16 %v1380
    %v1671 = vunpack.c.l.b16 %v1381
    %v1672 = vunpack.c.l.b16 %v1382
    %v1673 = vunpack.c.h.b16 %v1382
    %v1674 = vunpack.c.l.b16 %v1383
    %v1675 = vunpack.c.l.b16 %v1384
    %v1676 = vunpack.c.h.b16 %v1384
    %v1677 = vunpack.c.l.b16 %v1385
    %v1678 = vunpack.c.l.b16 %v1386
    %v1679 = vunpack.c.h.b16 %v1386
    %v1680 = vunpack.c.l.b16 %v1387
    %v1681 = vunpack.c.l.b16 %v1388
    %v1682 = vunpack.c.h.b16 %v1388
    %v1683 = vunpack.c.l.b16 %v1389
    %v1684 = vpack.c.b16 %v1669, %v1666
    %v1685 = vpack.c.b16 %v1670, %v1667
    %v1686 = vpack.c.b16 %v1671, %v1668
    %v1687 = vpack.c.b16 %v1675, %v1672
    %v1688 = vpack.c.b16 %v1676, %v1673
    %v1689 = vpack.c.b16 %v1677, %v1674
    %v1690 = vpack.c.b16 %v1681, %v1678
    %v1691 = vpack.c.b16 %v1682, %v1679
    %v1692 = vpack.c.b16 %v1683, %v1680
    %v1703 = vsel %vm230, 0, 0
    %1705 = vmatprep.subr.bf16.mxu0 0
    %1706 = vmatpush1.bf16.msra.mxu0 0
    %1707 = vmatprep.subr.bf16.mxu0 0
    %1708 = vmatpush1.bf16.msra.mxu0 0
    %1709 = vmatprep.subr.bf16.mxu0 0
    %1710 = vmatpush1.bf16.msra.mxu0 0
    %1711 = vmatprep.subr.bf16.mxu0 0
    %1712 = vmatpush1.bf16.msra.mxu0 0
    %1713 = vmatprep.subr.bf16.mxu0 0
    %1714 = vmatpush1.bf16.msra.mxu0 0
    %1715 = vmatprep.subr.bf16.mxu0 %v1691
    %1716 = vmatpush1.bf16.msra.mxu0 %v1690
    %1717 = vmatprep.subr.bf16.mxu0 %v1688
    %1718 = vmatpush1.bf16.msra.mxu0 %v1687
    %1719 = vmatprep.subr.bf16.mxu0 %v1685
    %1720 = vmatpush1.bf16.msra.mxu0 %v1684
    %1721 = vmatprep.subr.bf16.mxu0 0
    %1722 = vmatpush2.bf16.msra.mxu0 0
    %1723 = vmatprep.subr.bf16.mxu0 0
    %1724 = vmatpush2.bf16.msra.mxu0 0
    %1725 = vmatprep.subr.bf16.mxu0 0
    %1726 = vmatpush2.bf16.msra.mxu0 0
    %1727 = vmatprep.subr.bf16.mxu0 0
    %1728 = vmatpush2.bf16.msra.mxu0 0
    %1729 = vmatprep.subr.bf16.mxu0 0
    %1730 = vmatpush2.bf16.msra.mxu0 0
    %1731 = vmatprep.subr.bf16.mxu0 0
    %1732 = vmatpush2.bf16.msra.mxu0 0
    %1733 = vmatprep.subr.bf16.mxu0 0
    %1734 = vmatpush2.bf16.msra.mxu0 0
    %1735 = vmatprep.subr.bf16.mxu0 0
    %1736 = vmatpush2.bf16.msra.mxu0 0
    %1737 = vmatprep.mubr.bf16.mxu0 0
    %1738 = vmatmul.mubr.bf16.gmra.mxu0 %v1703
    %v1739 = vpop.f32.mrf.mxu0
    %v1740 = vadd.f32 %v1642, %v1739
    %v1741 = vpop.f32.mrf.mxu0
    %v1742 = vadd.f32 %v1646, %v1741
    %v1743 = vpop.f32.mrf.mxu0
    %v1744 = vpop.f32.mrf.mxu0
    %1745 = vdwg.mxu0
    %1746 = vmatprep.subr.bf16.mxu0 0
    %1747 = vmatpush1.bf16.msra.mxu0 0
    %1748 = vmatprep.subr.bf16.mxu0 0
    %1749 = vmatpush1.bf16.msra.mxu0 0
    %1750 = vmatprep.subr.bf16.mxu0 0
    %1751 = vmatpush1.bf16.msra.mxu0 0
    %1752 = vmatprep.subr.bf16.mxu0 0
    %1753 = vmatpush1.bf16.msra.mxu0 0
    %1754 = vmatprep.subr.bf16.mxu0 0
    %1755 = vmatpush1.bf16.msra.mxu0 0
    %1756 = vmatprep.subr.bf16.mxu0 0
    %1757 = vmatpush1.bf16.msra.mxu0 %v1692
    %1758 = vmatprep.subr.bf16.mxu0 0
    %1759 = vmatpush1.bf16.msra.mxu0 %v1689
    %1760 = vmatprep.subr.bf16.mxu0 0
    %1761 = vmatpush1.bf16.msra.mxu0 %v1686
    %1762 = vmatprep.subr.bf16.mxu0 0
    %1763 = vmatpush2.bf16.msra.mxu0 0
    %1764 = vmatprep.subr.bf16.mxu0 0
    %1765 = vmatpush2.bf16.msra.mxu0 0
    %1766 = vmatprep.subr.bf16.mxu0 0
    %1767 = vmatpush2.bf16.msra.mxu0 0
    %1768 = vmatprep.subr.bf16.mxu0 0
    %1769 = vmatpush2.bf16.msra.mxu0 0
    %1770 = vmatprep.subr.bf16.mxu0 0
    %1771 = vmatpush2.bf16.msra.mxu0 0
    %1772 = vmatprep.subr.bf16.mxu0 0
    %1773 = vmatpush2.bf16.msra.mxu0 0
    %1774 = vmatprep.subr.bf16.mxu0 0
    %1775 = vmatpush2.bf16.msra.mxu0 0
    %1776 = vmatprep.subr.bf16.mxu0 0
    %1777 = vmatpush2.bf16.msra.mxu0 0
    %1778 = vmatprep.mubr.bf16.mxu0 0
    %1779 = vmatmul.mubr.bf16.gmra.mxu0 %v1703
    %v1780 = vpop.f32.mrf.mxu0
    %v1781 = vadd.f32 %v1650, %v1780
    %v1782 = vpop.f32.mrf.mxu0
    %v1783 = vpop.f32.mrf.mxu0
    %v1784 = vpop.f32.mrf.mxu0
    %1785 = vdwg.mxu0
    %v1786 = vadd.f32 %v1635, %v1740
    %v1787 = vxor.u32 %v1786, 2147483648
    %v1788 = vmul.f32 %v1787, 1.442695
    %v1789 = vpow.pop %v1788
    %v1790 = vadd.f32 %v1789, 1.0
    %v1791 = vrcp.pop %v1790
    %v1792 = vmul.f32 1.0, %v1791
    %v1793 = vadd.f32 %v1636, %v1742
    %v1794 = vxor.u32 %v1793, 2147483648
    %v1795 = vmul.f32 %v1794, 1.442695
    %v1796 = vpow.pop %v1795
    %v1797 = vadd.f32 %v1796, 1.0
    %v1798 = vrcp.pop %v1797
    %v1799 = vmul.f32 1.0, %v1798
    %v1800 = vmul.f32 %v1792, %v1781
    %v1801 = vadd.f32 %v1637, %v1800
    %v1802 = vtanh.pop %v1801
    %v1803 = vsub.f32 1.0, %v1799
    %v1804 = vmul.f32 %v1803, %v1802
    %v1805 = vmul.f32 %v1799, 0.0
    %v1806 = vadd.f32 %v1804, %v1805
    %1807 = vst.msk [vmem:[#allocation3] sm:$0xff] %vm230, %v1806
    %s1808 = scalar_lea.vmem [#allocation2], 24
    %v1809 = vld [vmem:[%s1808] sm:$0xff]
    %v1810 = vld [vmem:[%s1808 + $0x8] sm:$0xff]
    %v1811 = vld [vmem:[%s1808 + $0x10] sm:$0xff]
    %v1812 = vpack.c.bf16 %v1806, %v1806
    %v1814 = vsel %vm230, %v1812, 0
    %1816 = vmatprep.subr.bf16.mxu0 0
    %1817 = vmatpush1.bf16.msra.mxu0 0
    %1818 = vmatprep.subr.bf16.mxu0 0
    %1819 = vmatpush1.bf16.msra.mxu0 0
    %1820 = vmatprep.subr.bf16.mxu0 0
    %1821 = vmatpush1.bf16.msra.mxu0 0
    %1822 = vmatprep.subr.bf16.mxu0 0
    %1823 = vmatpush1.bf16.msra.mxu0 0
    %1824 = vmatprep.subr.bf16.mxu0 0
    %1825 = vmatpush1.bf16.msra.mxu0 0
    %1826 = vmatprep.subr.bf16.mxu0 %v1691
    %1827 = vmatpush1.bf16.msra.mxu0 %v1690
    %1828 = vmatprep.subr.bf16.mxu0 %v1688
    %1829 = vmatpush1.bf16.msra.mxu0 %v1687
    %1830 = vmatprep.subr.bf16.mxu0 %v1685
    %1831 = vmatpush1.bf16.msra.mxu0 %v1684
    %1832 = vmatprep.subr.bf16.mxu0 0
    %1833 = vmatpush2.bf16.msra.mxu0 0
    %1834 = vmatprep.subr.bf16.mxu0 0
    %1835 = vmatpush2.bf16.msra.mxu0 0
    %1836 = vmatprep.subr.bf16.mxu0 0
    %1837 = vmatpush2.bf16.msra.mxu0 0
    %1838 = vmatprep.subr.bf16.mxu0 0
    %1839 = vmatpush2.bf16.msra.mxu0 0
    %1840 = vmatprep.subr.bf16.mxu0 0
    %1841 = vmatpush2.bf16.msra.mxu0 0
    %1842 = vmatprep.subr.bf16.mxu0 0
    %1843 = vmatpush2.bf16.msra.mxu0 0
    %1844 = vmatprep.subr.bf16.mxu0 0
    %1845 = vmatpush2.bf16.msra.mxu0 0
    %1846 = vmatprep.subr.bf16.mxu0 0
    %1847 = vmatpush2.bf16.msra.mxu0 0
    %1848 = vmatprep.mubr.bf16.mxu0 0
    %1849 = vmatmul.mubr.bf16.gmra.mxu0 %v1814
    %v1850 = vpop.f32.mrf.mxu0
    %v1851 = vadd.f32 %v1642, %v1850
    %v1852 = vpop.f32.mrf.mxu0
    %v1853 = vadd.f32 %v1646, %v1852
    %v1854 = vpop.f32.mrf.mxu0
    %v1855 = vpop.f32.mrf.mxu0
    %1856 = vdwg.mxu0
    %1857 = vmatprep.subr.bf16.mxu0 0
    %1858 = vmatpush1.bf16.msra.mxu0 0
    %1859 = vmatprep.subr.bf16.mxu0 0
    %1860 = vmatpush1.bf16.msra.mxu0 0
    %1861 = vmatprep.subr.bf16.mxu0 0
    %1862 = vmatpush1.bf16.msra.mxu0 0
    %1863 = vmatprep.subr.bf16.mxu0 0
    %1864 = vmatpush1.bf16.msra.mxu0 0
    %1865 = vmatprep.subr.bf16.mxu0 0
    %1866 = vmatpush1.bf16.msra.mxu0 0
    %1867 = vmatprep.subr.bf16.mxu0 0
    %1868 = vmatpush1.bf16.msra.mxu0 %v1692
    %1869 = vmatprep.subr.bf16.mxu0 0
    %1870 = vmatpush1.bf16.msra.mxu0 %v1689
    %1871 = vmatprep.subr.bf16.mxu0 0
    %1872 = vmatpush1.bf16.msra.mxu0 %v1686
    %1873 = vmatprep.subr.bf16.mxu0 0
    %1874 = vmatpush2.bf16.msra.mxu0 0
    %1875 = vmatprep.subr.bf16.mxu0 0
    %1876 = vmatpush2.bf16.msra.mxu0 0
    %1877 = vmatprep.subr.bf16.mxu0 0
    %1878 = vmatpush2.bf16.msra.mxu0 0
    %1879 = vmatprep.subr.bf16.mxu0 0
    %1880 = vmatpush2.bf16.msra.mxu0 0
    %1881 = vmatprep.subr.bf16.mxu0 0
    %1882 = vmatpush2.bf16.msra.mxu0 0
    %1883 = vmatprep.subr.bf16.mxu0 0
    %1884 = vmatpush2.bf16.msra.mxu0 0
    %1885 = vmatprep.subr.bf16.mxu0 0
    %1886 = vmatpush2.bf16.msra.mxu0 0
    %1887 = vmatprep.subr.bf16.mxu0 0
    %1888 = vmatpush2.bf16.msra.mxu0 0
    %1889 = vmatprep.mubr.bf16.mxu0 0
    %1890 = vmatmul.mubr.bf16.gmra.mxu0 %v1814
    %v1891 = vpop.f32.mrf.mxu0
    %v1892 = vadd.f32 %v1650, %v1891
    %v1893 = vpop.f32.mrf.mxu0
    %v1894 = vpop.f32.mrf.mxu0
    %v1895 = vpop.f32.mrf.mxu0
    %1896 = vdwg.mxu0
    %v1897 = vadd.f32 %v1809, %v1851
    %v1898 = vxor.u32 %v1897, 2147483648
    %v1899 = vmul.f32 %v1898, 1.442695
    %v1900 = vpow.pop %v1899
    %v1901 = vadd.f32 %v1900, 1.0
    %v1902 = vrcp.pop %v1901
    %v1903 = vmul.f32 1.0, %v1902
    %v1904 = vadd.f32 %v1810, %v1853
    %v1905 = vxor.u32 %v1904, 2147483648
    %v1906 = vmul.f32 %v1905, 1.442695
    %v1907 = vpow.pop %v1906
    %v1908 = vadd.f32 %v1907, 1.0
    %v1909 = vrcp.pop %v1908
    %v1910 = vmul.f32 1.0, %v1909
    %v1911 = vmul.f32 %v1903, %v1892
    %v1912 = vadd.f32 %v1811, %v1911
    %v1913 = vtanh.pop %v1912
    %v1914 = vsub.f32 1.0, %v1910
    %v1915 = vmul.f32 %v1914, %v1913
    %v1916 = vmul.f32 %v1910, %v1806
    %v1917 = vadd.f32 %v1915, %v1916
    %s1918 = scalar_lea.vmem [#allocation3], 8
    %1919 = vst.msk [vmem:[%s1918] sm:$0xff] %vm230, %v1917
    %s1920 = scalar_lea.vmem [#allocation2], 48
    %v1921 = vld [vmem:[%s1920] sm:$0xff]
    %v1922 = vld [vmem:[%s1920 + $0x8] sm:$0xff]
    %v1923 = vld [vmem:[%s1920 + $0x10] sm:$0xff]
    %v1924 = vpack.c.bf16 %v1917, %v1917
    %v1926 = vsel %vm230, %v1924, 0
    %1928 = vmatprep.subr.bf16.mxu0 0
    %1929 = vmatpush1.bf16.msra.mxu0 0
    %1930 = vmatprep.subr.bf16.mxu0 0
    %1931 = vmatpush1.bf16.msra.mxu0 0
    %1932 = vmatprep.subr.bf16.mxu0 0
    %1933 = vmatpush1.bf16.msra.mxu0 0
    %1934 = vmatprep.subr.bf16.mxu0 0
    %1935 = vmatpush1.bf16.msra.mxu0 0
    %1936 = vmatprep.subr.bf16.mxu0 0
    %1937 = vmatpush1.bf16.msra.mxu0 0
    %1938 = vmatprep.subr.bf16.mxu0 %v1691
    %1939 = vmatpush1.bf16.msra.mxu0 %v1690
    %1940 = vmatprep.subr.bf16.mxu0 %v1688
    %1941 = vmatpush1.bf16.msra.mxu0 %v1687
    %1942 = vmatprep.subr.bf16.mxu0 %v1685
    %1943 = vmatpush1.bf16.msra.mxu0 %v1684
    %1944 = vmatprep.subr.bf16.mxu0 0
    %1945 = vmatpush2.bf16.msra.mxu0 0
    %1946 = vmatprep.subr.bf16.mxu0 0
    %1947 = vmatpush2.bf16.msra.mxu0 0
    %1948 = vmatprep.subr.bf16.mxu0 0
    %1949 = vmatpush2.bf16.msra.mxu0 0
    %1950 = vmatprep.subr.bf16.mxu0 0
    %1951 = vmatpush2.bf16.msra.mxu0 0
    %1952 = vmatprep.subr.bf16.mxu0 0
    %1953 = vmatpush2.bf16.msra.mxu0 0
    %1954 = vmatprep.subr.bf16.mxu0 0
    %1955 = vmatpush2.bf16.msra.mxu0 0
    %1956 = vmatprep.subr.bf16.mxu0 0
    %1957 = vmatpush2.bf16.msra.mxu0 0
    %1958 = vmatprep.subr.bf16.mxu0 0
    %1959 = vmatpush2.bf16.msra.mxu0 0
    %1960 = vmatprep.mubr.bf16.mxu0 0
    %1961 = vmatmul.mubr.bf16.gmra.mxu0 %v1926
    %v1962 = vpop.f32.mrf.mxu0
    %v1963 = vadd.f32 %v1642, %v1962
    %v1964 = vpop.f32.mrf.mxu0
    %v1965 = vadd.f32 %v1646, %v1964
    %v1966 = vpop.f32.mrf.mxu0
    %v1967 = vpop.f32.mrf.mxu0
    %1968 = vdwg.mxu0
    %1969 = vmatprep.subr.bf16.mxu0 0
    %1970 = vmatpush1.bf16.msra.mxu0 0
    %1971 = vmatprep.subr.bf16.mxu0 0
    %1972 = vmatpush1.bf16.msra.mxu0 0
    %1973 = vmatprep.subr.bf16.mxu0 0
    %1974 = vmatpush1.bf16.msra.mxu0 0
    %1975 = vmatprep.subr.bf16.mxu0 0
    %1976 = vmatpush1.bf16.msra.mxu0 0
    %1977 = vmatprep.subr.bf16.mxu0 0
    %1978 = vmatpush1.bf16.msra.mxu0 0
    %1979 = vmatprep.subr.bf16.mxu0 0
    %1980 = vmatpush1.bf16.msra.mxu0 %v1692
    %1981 = vmatprep.subr.bf16.mxu0 0
    %1982 = vmatpush1.bf16.msra.mxu0 %v1689
    %1983 = vmatprep.subr.bf16.mxu0 0
    %1984 = vmatpush1.bf16.msra.mxu0 %v1686
    %1985 = vmatprep.subr.bf16.mxu0 0
    %1986 = vmatpush2.bf16.msra.mxu0 0
    %1987 = vmatprep.subr.bf16.mxu0 0
    %1988 = vmatpush2.bf16.msra.mxu0 0
    %1989 = vmatprep.subr.bf16.mxu0 0
    %1990 = vmatpush2.bf16.msra.mxu0 0
    %1991 = vmatprep.subr.bf16.mxu0 0
    %1992 = vmatpush2.bf16.msra.mxu0 0
    %1993 = vmatprep.subr.bf16.mxu0 0
    %1994 = vmatpush2.bf16.msra.mxu0 0
    %1995 = vmatprep.subr.bf16.mxu0 0
    %1996 = vmatpush2.bf16.msra.mxu0 0
    %1997 = vmatprep.subr.bf16.mxu0 0
    %1998 = vmatpush2.bf16.msra.mxu0 0
    %1999 = vmatprep.subr.bf16.mxu0 0
    %2000 = vmatpush2.bf16.msra.mxu0 0
    %2001 = vmatprep.mubr.bf16.mxu0 0
    %2002 = vmatmul.mubr.bf16.gmra.mxu0 %v1926
    %v2003 = vpop.f32.mrf.mxu0
    %v2004 = vadd.f32 %v1650, %v2003
    %v2005 = vpop.f32.mrf.mxu0
    %v2006 = vpop.f32.mrf.mxu0
    %v2007 = vpop.f32.mrf.mxu0
    %2008 = vdwg.mxu0
    %v2009 = vadd.f32 %v1921, %v1963
    %v2010 = vxor.u32 %v2009, 2147483648
    %v2011 = vmul.f32 %v2010, 1.442695
    %v2012 = vpow.pop %v2011
    %v2013 = vadd.f32 %v2012, 1.0
    %v2014 = vrcp.pop %v2013
    %v2015 = vmul.f32 1.0, %v2014
    %v2016 = vadd.f32 %v1922, %v1965
    %v2017 = vxor.u32 %v2016, 2147483648
    %v2018 = vmul.f32 %v2017, 1.442695
    %v2019 = vpow.pop %v2018
    %v2020 = vadd.f32 %v2019, 1.0
    %v2021 = vrcp.pop %v2020
    %v2022 = vmul.f32 1.0, %v2021
    %v2023 = vmul.f32 %v2015, %v2004
    %v2024 = vadd.f32 %v1923, %v2023
    %v2025 = vtanh.pop %v2024
    %v2026 = vsub.f32 1.0, %v2022
    %v2027 = vmul.f32 %v2026, %v2025
    %v2028 = vmul.f32 %v2022, %v1917
    %v2029 = vadd.f32 %v2027, %v2028
    %s2030 = scalar_lea.vmem [#allocation3], 16
    %2031 = vst.msk [vmem:[%s2030] sm:$0xff] %vm230, %v2029
    %s2032 = scalar_lea.vmem [#allocation2], 72
    %v2033 = vld [vmem:[%s2032] sm:$0xff]
    %v2034 = vld [vmem:[%s2032 + $0x8] sm:$0xff]
    %v2035 = vld [vmem:[%s2032 + $0x10] sm:$0xff]
    %v2036 = vpack.c.bf16 %v2029, %v2029
    %v2038 = vsel %vm230, %v2036, 0
    %2040 = vmatprep.subr.bf16.mxu0 0
    %2041 = vmatpush1.bf16.msra.mxu0 0
    %2042 = vmatprep.subr.bf16.mxu0 0
    %2043 = vmatpush1.bf16.msra.mxu0 0
    %2044 = vmatprep.subr.bf16.mxu0 0
    %2045 = vmatpush1.bf16.msra.mxu0 0
    %2046 = vmatprep.subr.bf16.mxu0 0
    %2047 = vmatpush1.bf16.msra.mxu0 0
    %2048 = vmatprep.subr.bf16.mxu0 0
    %2049 = vmatpush1.bf16.msra.mxu0 0
    %2050 = vmatprep.subr.bf16.mxu0 %v1691
    %2051 = vmatpush1.bf16.msra.mxu0 %v1690
    %2052 = vmatprep.subr.bf16.mxu0 %v1688
    %2053 = vmatpush1.bf16.msra.mxu0 %v1687
    %2054 = vmatprep.subr.bf16.mxu0 %v1685
    %2055 = vmatpush1.bf16.msra.mxu0 %v1684
    %2056 = vmatprep.subr.bf16.mxu0 0
    %2057 = vmatpush2.bf16.msra.mxu0 0
    %2058 = vmatprep.subr.bf16.mxu0 0
    %2059 = vmatpush2.bf16.msra.mxu0 0
    %2060 = vmatprep.subr.bf16.mxu0 0
    %2061 = vmatpush2.bf16.msra.mxu0 0
    %2062 = vmatprep.subr.bf16.mxu0 0
    %2063 = vmatpush2.bf16.msra.mxu0 0
    %2064 = vmatprep.subr.bf16.mxu0 0
    %2065 = vmatpush2.bf16.msra.mxu0 0
    %2066 = vmatprep.subr.bf16.mxu0 0
    %2067 = vmatpush2.bf16.msra.mxu0 0
    %2068 = vmatprep.subr.bf16.mxu0 0
    %2069 = vmatpush2.bf16.msra.mxu0 0
    %2070 = vmatprep.subr.bf16.mxu0 0
    %2071 = vmatpush2.bf16.msra.mxu0 0
    %2072 = vmatprep.mubr.bf16.mxu0 0
    %2073 = vmatmul.mubr.bf16.gmra.mxu0 %v2038
    %v2074 = vpop.f32.mrf.mxu0
    %v2075 = vadd.f32 %v1642, %v2074
    %v2076 = vpop.f32.mrf.mxu0
    %v2077 = vadd.f32 %v1646, %v2076
    %v2078 = vpop.f32.mrf.mxu0
    %v2079 = vpop.f32.mrf.mxu0
    %2080 = vdwg.mxu0
    %2081 = vmatprep.subr.bf16.mxu0 0
    %2082 = vmatpush1.bf16.msra.mxu0 0
    %2083 = vmatprep.subr.bf16.mxu0 0
    %2084 = vmatpush1.bf16.msra.mxu0 0
    %2085 = vmatprep.subr.bf16.mxu0 0
    %2086 = vmatpush1.bf16.msra.mxu0 0
    %2087 = vmatprep.subr.bf16.mxu0 0
    %2088 = vmatpush1.bf16.msra.mxu0 0
    %2089 = vmatprep.subr.bf16.mxu0 0
    %2090 = vmatpush1.bf16.msra.mxu0 0
    %2091 = vmatprep.subr.bf16.mxu0 0
    %2092 = vmatpush1.bf16.msra.mxu0 %v1692
    %2093 = vmatprep.subr.bf16.mxu0 0
    %2094 = vmatpush1.bf16.msra.mxu0 %v1689
    %2095 = vmatprep.subr.bf16.mxu0 0
    %2096 = vmatpush1.bf16.msra.mxu0 %v1686
    %2097 = vmatprep.subr.bf16.mxu0 0
    %2098 = vmatpush2.bf16.msra.mxu0 0
    %2099 = vmatprep.subr.bf16.mxu0 0
    %2100 = vmatpush2.bf16.msra.mxu0 0
    %2101 = vmatprep.subr.bf16.mxu0 0
    %2102 = vmatpush2.bf16.msra.mxu0 0
    %2103 = vmatprep.subr.bf16.mxu0 0
    %2104 = vmatpush2.bf16.msra.mxu0 0
    %2105 = vmatprep.subr.bf16.mxu0 0
    %2106 = vmatpush2.bf16.msra.mxu0 0
    %2107 = vmatprep.subr.bf16.mxu0 0
    %2108 = vmatpush2.bf16.msra.mxu0 0
    %2109 = vmatprep.subr.bf16.mxu0 0
    %2110 = vmatpush2.bf16.msra.mxu0 0
    %2111 = vmatprep.subr.bf16.mxu0 0
    %2112 = vmatpush2.bf16.msra.mxu0 0
    %2113 = vmatprep.mubr.bf16.mxu0 0
    %2114 = vmatmul.mubr.bf16.gmra.mxu0 %v2038
    %v2115 = vpop.f32.mrf.mxu0
    %v2116 = vadd.f32 %v1650, %v2115
    %v2117 = vpop.f32.mrf.mxu0
    %v2118 = vpop.f32.mrf.mxu0
    %v2119 = vpop.f32.mrf.mxu0
    %2120 = vdwg.mxu0
    %v2121 = vadd.f32 %v2033, %v2075
    %v2122 = vxor.u32 %v2121, 2147483648
    %v2123 = vmul.f32 %v2122, 1.442695
    %v2124 = vpow.pop %v2123
    %v2125 = vadd.f32 %v2124, 1.0
    %v2126 = vrcp.pop %v2125
    %v2127 = vmul.f32 1.0, %v2126
    %v2128 = vadd.f32 %v2034, %v2077
    %v2129 = vxor.u32 %v2128, 2147483648
    %v2130 = vmul.f32 %v2129, 1.442695
    %v2131 = vpow.pop %v2130
    %v2132 = vadd.f32 %v2131, 1.0
    %v2133 = vrcp.pop %v2132
    %v2134 = vmul.f32 1.0, %v2133
    %v2135 = vmul.f32 %v2127, %v2116
    %v2136 = vadd.f32 %v2035, %v2135
    %v2137 = vtanh.pop %v2136
    %v2138 = vsub.f32 1.0, %v2134
    %v2139 = vmul.f32 %v2138, %v2137
    %v2140 = vmul.f32 %v2134, %v2029
    %v2141 = vadd.f32 %v2139, %v2140
    %s2142 = scalar_lea.vmem [#allocation3], 24
    %2143 = vst.msk [vmem:[%s2142] sm:$0xff] %vm230, %v2141
    %s2144 = scalar_lea.vmem [#allocation2], 96
    %v2145 = vld [vmem:[%s2144] sm:$0xff]
    %v2146 = vld [vmem:[%s2144 + $0x8] sm:$0xff]
    %v2147 = vld [vmem:[%s2144 + $0x10] sm:$0xff]
    %v2148 = vpack.c.bf16 %v2141, %v2141
    %v2150 = vsel %vm230, %v2148, 0
    %2152 = vmatprep.subr.bf16.mxu0 0
    %2153 = vmatpush1.bf16.msra.mxu0 0
    %2154 = vmatprep.subr.bf16.mxu0 0
    %2155 = vmatpush1.bf16.msra.mxu0 0
    %2156 = vmatprep.subr.bf16.mxu0 0
    %2157 = vmatpush1.bf16.msra.mxu0 0
    %2158 = vmatprep.subr.bf16.mxu0 0
    %2159 = vmatpush1.bf16.msra.mxu0 0
    %2160 = vmatprep.subr.bf16.mxu0 0
    %2161 = vmatpush1.bf16.msra.mxu0 0
    %2162 = vmatprep.subr.bf16.mxu0 %v1691
    %2163 = vmatpush1.bf16.msra.mxu0 %v1690
    %2164 = vmatprep.subr.bf16.mxu0 %v1688
    %2165 = vmatpush1.bf16.msra.mxu0 %v1687
    %2166 = vmatprep.subr.bf16.mxu0 %v1685
    %2167 = vmatpush1.bf16.msra.mxu0 %v1684
    %2168 = vmatprep.subr.bf16.mxu0 0
    %2169 = vmatpush2.bf16.msra.mxu0 0
    %2170 = vmatprep.subr.bf16.mxu0 0
    %2171 = vmatpush2.bf16.msra.mxu0 0
    %2172 = vmatprep.subr.bf16.mxu0 0
    %2173 = vmatpush2.bf16.msra.mxu0 0
    %2174 = vmatprep.subr.bf16.mxu0 0
    %2175 = vmatpush2.bf16.msra.mxu0 0
    %2176 = vmatprep.subr.bf16.mxu0 0
    %2177 = vmatpush2.bf16.msra.mxu0 0
    %2178 = vmatprep.subr.bf16.mxu0 0
    %2179 = vmatpush2.bf16.msra.mxu0 0
    %2180 = vmatprep.subr.bf16.mxu0 0
    %2181 = vmatpush2.bf16.msra.mxu0 0
    %2182 = vmatprep.subr.bf16.mxu0 0
    %2183 = vmatpush2.bf16.msra.mxu0 0
    %2184 = vmatprep.mubr.bf16.mxu0 0
    %2185 = vmatmul.mubr.bf16.gmra.mxu0 %v2150
    %v2186 = vpop.f32.mrf.mxu0
    %v2187 = vadd.f32 %v1642, %v2186
    %v2188 = vpop.f32.mrf.mxu0
    %v2189 = vadd.f32 %v1646, %v2188
    %v2190 = vpop.f32.mrf.mxu0
    %v2191 = vpop.f32.mrf.mxu0
    %2192 = vdwg.mxu0
    %2193 = vmatprep.subr.bf16.mxu0 0
    %2194 = vmatpush1.bf16.msra.mxu0 0
    %2195 = vmatprep.subr.bf16.mxu0 0
    %2196 = vmatpush1.bf16.msra.mxu0 0
    %2197 = vmatprep.subr.bf16.mxu0 0
    %2198 = vmatpush1.bf16.msra.mxu0 0
    %2199 = vmatprep.subr.bf16.mxu0 0
    %2200 = vmatpush1.bf16.msra.mxu0 0
    %2201 = vmatprep.subr.bf16.mxu0 0
    %2202 = vmatpush1.bf16.msra.mxu0 0
    %2203 = vmatprep.subr.bf16.mxu0 0
    %2204 = vmatpush1.bf16.msra.mxu0 %v1692
    %2205 = vmatprep.subr.bf16.mxu0 0
    %2206 = vmatpush1.bf16.msra.mxu0 %v1689
    %2207 = vmatprep.subr.bf16.mxu0 0
    %2208 = vmatpush1.bf16.msra.mxu0 %v1686
    %2209 = vmatprep.subr.bf16.mxu0 0
    %2210 = vmatpush2.bf16.msra.mxu0 0
    %2211 = vmatprep.subr.bf16.mxu0 0
    %2212 = vmatpush2.bf16.msra.mxu0 0
    %2213 = vmatprep.subr.bf16.mxu0 0
    %2214 = vmatpush2.bf16.msra.mxu0 0
    %2215 = vmatprep.subr.bf16.mxu0 0
    %2216 = vmatpush2.bf16.msra.mxu0 0
    %2217 = vmatprep.subr.bf16.mxu0 0
    %2218 = vmatpush2.bf16.msra.mxu0 0
    %2219 = vmatprep.subr.bf16.mxu0 0
    %2220 = vmatpush2.bf16.msra.mxu0 0
    %2221 = vmatprep.subr.bf16.mxu0 0
    %2222 = vmatpush2.bf16.msra.mxu0 0
    %2223 = vmatprep.subr.bf16.mxu0 0
    %2224 = vmatpush2.bf16.msra.mxu0 0
    %2225 = vmatprep.mubr.bf16.mxu0 0
    %2226 = vmatmul.mubr.bf16.gmra.mxu0 %v2150
    %v2227 = vpop.f32.mrf.mxu0
    %v2228 = vadd.f32 %v1650, %v2227
    %v2229 = vpop.f32.mrf.mxu0
    %v2230 = vpop.f32.mrf.mxu0
    %v2231 = vpop.f32.mrf.mxu0
    %2232 = vdwg.mxu0
    %v2233 = vadd.f32 %v2145, %v2187
    %v2234 = vxor.u32 %v2233, 2147483648
    %v2235 = vmul.f32 %v2234, 1.442695
    %v2236 = vpow.pop %v2235
    %v2237 = vadd.f32 %v2236, 1.0
    %v2238 = vrcp.pop %v2237
    %v2239 = vmul.f32 1.0, %v2238
    %v2240 = vadd.f32 %v2146, %v2189
    %v2241 = vxor.u32 %v2240, 2147483648
    %v2242 = vmul.f32 %v2241, 1.442695
    %v2243 = vpow.pop %v2242
    %v2244 = vadd.f32 %v2243, 1.0
    %v2245 = vrcp.pop %v2244
    %v2246 = vmul.f32 1.0, %v2245
    %v2247 = vmul.f32 %v2239, %v2228
    %v2248 = vadd.f32 %v2147, %v2247
    %v2249 = vtanh.pop %v2248
    %v2250 = vsub.f32 1.0, %v2246
    %v2251 = vmul.f32 %v2250, %v2249
    %v2252 = vmul.f32 %v2246, %v2141
    %v2253 = vadd.f32 %v2251, %v2252
    %s2254 = scalar_lea.vmem [#allocation3], 32
    %2255 = vst.msk [vmem:[%s2254] sm:$0xff] %vm230, %v2253
    %s2256 = scalar_lea.vmem [#allocation2], 120
    %v2257 = vld [vmem:[%s2256] sm:$0xff]
    %v2258 = vld [vmem:[%s2256 + $0x8] sm:$0xff]
    %v2259 = vld [vmem:[%s2256 + $0x10] sm:$0xff]
    %v2260 = vpack.c.bf16 %v2253, %v2253
    %v2262 = vsel %vm230, %v2260, 0
    %2264 = vmatprep.subr.bf16.mxu0 0
    %2265 = vmatpush1.bf16.msra.mxu0 0
    %2266 = vmatprep.subr.bf16.mxu0 0
    %2267 = vmatpush1.bf16.msra.mxu0 0
    %2268 = vmatprep.subr.bf16.mxu0 0
    %2269 = vmatpush1.bf16.msra.mxu0 0
    %2270 = vmatprep.subr.bf16.mxu0 0
    %2271 = vmatpush1.bf16.msra.mxu0 0
    %2272 = vmatprep.subr.bf16.mxu0 0
    %2273 = vmatpush1.bf16.msra.mxu0 0
    %2274 = vmatprep.subr.bf16.mxu0 %v1691
    %2275 = vmatpush1.bf16.msra.mxu0 %v1690
    %2276 = vmatprep.subr.bf16.mxu0 %v1688
    %2277 = vmatpush1.bf16.msra.mxu0 %v1687
    %2278 = vmatprep.subr.bf16.mxu0 %v1685
    %2279 = vmatpush1.bf16.msra.mxu0 %v1684
    %2280 = vmatprep.subr.bf16.mxu0 0
    %2281 = vmatpush2.bf16.msra.mxu0 0
    %2282 = vmatprep.subr.bf16.mxu0 0
    %2283 = vmatpush2.bf16.msra.mxu0 0
    %2284 = vmatprep.subr.bf16.mxu0 0
    %2285 = vmatpush2.bf16.msra.mxu0 0
    %2286 = vmatprep.subr.bf16.mxu0 0
    %2287 = vmatpush2.bf16.msra.mxu0 0
    %2288 = vmatprep.subr.bf16.mxu0 0
    %2289 = vmatpush2.bf16.msra.mxu0 0
    %2290 = vmatprep.subr.bf16.mxu0 0
    %2291 = vmatpush2.bf16.msra.mxu0 0
    %2292 = vmatprep.subr.bf16.mxu0 0
    %2293 = vmatpush2.bf16.msra.mxu0 0
    %2294 = vmatprep.subr.bf16.mxu0 0
    %2295 = vmatpush2.bf16.msra.mxu0 0
    %2296 = vmatprep.mubr.bf16.mxu0 0
    %2297 = vmatmul.mubr.bf16.gmra.mxu0 %v2262
    %v2298 = vpop.f32.mrf.mxu0
    %v2299 = vadd.f32 %v1642, %v2298
    %v2300 = vpop.f32.mrf.mxu0
    %v2301 = vadd.f32 %v1646, %v2300
    %v2302 = vpop.f32.mrf.mxu0
    %v2303 = vpop.f32.mrf.mxu0
    %2304 = vdwg.mxu0
    %2305 = vmatprep.subr.bf16.mxu0 0
    %2306 = vmatpush1.bf16.msra.mxu0 0
    %2307 = vmatprep.subr.bf16.mxu0 0
    %2308 = vmatpush1.bf16.msra.mxu0 0
    %2309 = vmatprep.subr.bf16.mxu0 0
    %2310 = vmatpush1.bf16.msra.mxu0 0
    %2311 = vmatprep.subr.bf16.mxu0 0
    %2312 = vmatpush1.bf16.msra.mxu0 0
    %2313 = vmatprep.subr.bf16.mxu0 0
    %2314 = vmatpush1.bf16.msra.mxu0 0
    %2315 = vmatprep.subr.bf16.mxu0 0
    %2316 = vmatpush1.bf16.msra.mxu0 %v1692
    %2317 = vmatprep.subr.bf16.mxu0 0
    %2318 = vmatpush1.bf16.msra.mxu0 %v1689
    %2319 = vmatprep.subr.bf16.mxu0 0
    %2320 = vmatpush1.bf16.msra.mxu0 %v1686
    %2321 = vmatprep.subr.bf16.mxu0 0
    %2322 = vmatpush2.bf16.msra.mxu0 0
    %2323 = vmatprep.subr.bf16.mxu0 0
    %2324 = vmatpush2.bf16.msra.mxu0 0
    %2325 = vmatprep.subr.bf16.mxu0 0
    %2326 = vmatpush2.bf16.msra.mxu0 0
    %2327 = vmatprep.subr.bf16.mxu0 0
    %2328 = vmatpush2.bf16.msra.mxu0 0
    %2329 = vmatprep.subr.bf16.mxu0 0
    %2330 = vmatpush2.bf16.msra.mxu0 0
    %2331 = vmatprep.subr.bf16.mxu0 0
    %2332 = vmatpush2.bf16.msra.mxu0 0
    %2333 = vmatprep.subr.bf16.mxu0 0
    %2334 = vmatpush2.bf16.msra.mxu0 0
    %2335 = vmatprep.subr.bf16.mxu0 0
    %2336 = vmatpush2.bf16.msra.mxu0 0
    %2337 = vmatprep.mubr.bf16.mxu0 0
    %2338 = vmatmul.mubr.bf16.gmra.mxu0 %v2262
    %v2339 = vpop.f32.mrf.mxu0
    %v2340 = vadd.f32 %v1650, %v2339
    %v2341 = vpop.f32.mrf.mxu0
    %v2342 = vpop.f32.mrf.mxu0
    %v2343 = vpop.f32.mrf.mxu0
    %2344 = vdwg.mxu0
    %v2345 = vadd.f32 %v2257, %v2299
    %v2346 = vxor.u32 %v2345, 2147483648
    %v2347 = vmul.f32 %v2346, 1.442695
    %v2348 = vpow.pop %v2347
    %v2349 = vadd.f32 %v2348, 1.0
    %v2350 = vrcp.pop %v2349
    %v2351 = vmul.f32 1.0, %v2350
    %v2352 = vadd.f32 %v2258, %v2301
    %v2353 = vxor.u32 %v2352, 2147483648
    %v2354 = vmul.f32 %v2353, 1.442695
    %v2355 = vpow.pop %v2354
    %v2356 = vadd.f32 %v2355, 1.0
    %v2357 = vrcp.pop %v2356
    %v2358 = vmul.f32 1.0, %v2357
    %v2359 = vmul.f32 %v2351, %v2340
    %v2360 = vadd.f32 %v2259, %v2359
    %v2361 = vtanh.pop %v2360
    %v2362 = vsub.f32 1.0, %v2358
    %v2363 = vmul.f32 %v2362, %v2361
    %v2364 = vmul.f32 %v2358, %v2253
    %v2365 = vadd.f32 %v2363, %v2364
    %s2366 = scalar_lea.vmem [#allocation3], 40
    %2367 = vst.msk [vmem:[%s2366] sm:$0xff] %vm230, %v2365
    %s2368 = scalar_lea.vmem [#allocation2], 144
    %v2369 = vld [vmem:[%s2368] sm:$0xff]
    %v2370 = vld [vmem:[%s2368 + $0x8] sm:$0xff]
    %v2371 = vld [vmem:[%s2368 + $0x10] sm:$0xff]
    %v2372 = vpack.c.bf16 %v2365, %v2365
    %v2374 = vsel %vm230, %v2372, 0
    %2376 = vmatprep.subr.bf16.mxu0 0
    %2377 = vmatpush1.bf16.msra.mxu0 0
    %2378 = vmatprep.subr.bf16.mxu0 0
    %2379 = vmatpush1.bf16.msra.mxu0 0
    %2380 = vmatprep.subr.bf16.mxu0 0
    %2381 = vmatpush1.bf16.msra.mxu0 0
    %2382 = vmatprep.subr.bf16.mxu0 0
    %2383 = vmatpush1.bf16.msra.mxu0 0
    %2384 = vmatprep.subr.bf16.mxu0 0
    %2385 = vmatpush1.bf16.msra.mxu0 0
    %2386 = vmatprep.subr.bf16.mxu0 %v1691
    %2387 = vmatpush1.bf16.msra.mxu0 %v1690
    %2388 = vmatprep.subr.bf16.mxu0 %v1688
    %2389 = vmatpush1.bf16.msra.mxu0 %v1687
    %2390 = vmatprep.subr.bf16.mxu0 %v1685
    %2391 = vmatpush1.bf16.msra.mxu0 %v1684
    %2392 = vmatprep.subr.bf16.mxu0 0
    %2393 = vmatpush2.bf16.msra.mxu0 0
    %2394 = vmatprep.subr.bf16.mxu0 0
    %2395 = vmatpush2.bf16.msra.mxu0 0
    %2396 = vmatprep.subr.bf16.mxu0 0
    %2397 = vmatpush2.bf16.msra.mxu0 0
    %2398 = vmatprep.subr.bf16.mxu0 0
    %2399 = vmatpush2.bf16.msra.mxu0 0
    %2400 = vmatprep.subr.bf16.mxu0 0
    %2401 = vmatpush2.bf16.msra.mxu0 0
    %2402 = vmatprep.subr.bf16.mxu0 0
    %2403 = vmatpush2.bf16.msra.mxu0 0
    %2404 = vmatprep.subr.bf16.mxu0 0
    %2405 = vmatpush2.bf16.msra.mxu0 0
    %2406 = vmatprep.subr.bf16.mxu0 0
    %2407 = vmatpush2.bf16.msra.mxu0 0
    %2408 = vmatprep.mubr.bf16.mxu0 0
    %2409 = vmatmul.mubr.bf16.gmra.mxu0 %v2374
    %v2410 = vpop.f32.mrf.mxu0
    %v2411 = vadd.f32 %v1642, %v2410
    %v2412 = vpop.f32.mrf.mxu0
    %v2413 = vadd.f32 %v1646, %v2412
    %v2414 = vpop.f32.mrf.mxu0
    %v2415 = vpop.f32.mrf.mxu0
    %2416 = vdwg.mxu0
    %2417 = vmatprep.subr.bf16.mxu0 0
    %2418 = vmatpush1.bf16.msra.mxu0 0
    %2419 = vmatprep.subr.bf16.mxu0 0
    %2420 = vmatpush1.bf16.msra.mxu0 0
    %2421 = vmatprep.subr.bf16.mxu0 0
    %2422 = vmatpush1.bf16.msra.mxu0 0
    %2423 = vmatprep.subr.bf16.mxu0 0
    %2424 = vmatpush1.bf16.msra.mxu0 0
    %2425 = vmatprep.subr.bf16.mxu0 0
    %2426 = vmatpush1.bf16.msra.mxu0 0
    %2427 = vmatprep.subr.bf16.mxu0 0
    %2428 = vmatpush1.bf16.msra.mxu0 %v1692
    %2429 = vmatprep.subr.bf16.mxu0 0
    %2430 = vmatpush1.bf16.msra.mxu0 %v1689
    %2431 = vmatprep.subr.bf16.mxu0 0
    %2432 = vmatpush1.bf16.msra.mxu0 %v1686
    %2433 = vmatprep.subr.bf16.mxu0 0
    %2434 = vmatpush2.bf16.msra.mxu0 0
    %2435 = vmatprep.subr.bf16.mxu0 0
    %2436 = vmatpush2.bf16.msra.mxu0 0
    %2437 = vmatprep.subr.bf16.mxu0 0
    %2438 = vmatpush2.bf16.msra.mxu0 0
    %2439 = vmatprep.subr.bf16.mxu0 0
    %2440 = vmatpush2.bf16.msra.mxu0 0
    %2441 = vmatprep.subr.bf16.mxu0 0
    %2442 = vmatpush2.bf16.msra.mxu0 0
    %2443 = vmatprep.subr.bf16.mxu0 0
    %2444 = vmatpush2.bf16.msra.mxu0 0
    %2445 = vmatprep.subr.bf16.mxu0 0
    %2446 = vmatpush2.bf16.msra.mxu0 0
    %2447 = vmatprep.subr.bf16.mxu0 0
    %2448 = vmatpush2.bf16.msra.mxu0 0
    %2449 = vmatprep.mubr.bf16.mxu0 0
    %2450 = vmatmul.mubr.bf16.gmra.mxu0 %v2374
    %v2451 = vpop.f32.mrf.mxu0
    %v2452 = vadd.f32 %v1650, %v2451
    %v2453 = vpop.f32.mrf.mxu0
    %v2454 = vpop.f32.mrf.mxu0
    %v2455 = vpop.f32.mrf.mxu0
    %2456 = vdwg.mxu0
    %v2457 = vadd.f32 %v2369, %v2411
    %v2458 = vxor.u32 %v2457, 2147483648
    %v2459 = vmul.f32 %v2458, 1.442695
    %v2460 = vpow.pop %v2459
    %v2461 = vadd.f32 %v2460, 1.0
    %v2462 = vrcp.pop %v2461
    %v2463 = vmul.f32 1.0, %v2462
    %v2464 = vadd.f32 %v2370, %v2413
    %v2465 = vxor.u32 %v2464, 2147483648
    %v2466 = vmul.f32 %v2465, 1.442695
    %v2467 = vpow.pop %v2466
    %v2468 = vadd.f32 %v2467, 1.0
    %v2469 = vrcp.pop %v2468
    %v2470 = vmul.f32 1.0, %v2469
    %v2471 = vmul.f32 %v2463, %v2452
    %v2472 = vadd.f32 %v2371, %v2471
    %v2473 = vtanh.pop %v2472
    %v2474 = vsub.f32 1.0, %v2470
    %v2475 = vmul.f32 %v2474, %v2473
    %v2476 = vmul.f32 %v2470, %v2365
    %v2477 = vadd.f32 %v2475, %v2476
    %s2478 = scalar_lea.vmem [#allocation3], 48
    %2479 = vst.msk [vmem:[%s2478] sm:$0xff] %vm230, %v2477
    %s2480 = scalar_lea.vmem [#allocation2], 168
    %v2481 = vld [vmem:[%s2480] sm:$0xff]
    %v2482 = vld [vmem:[%s2480 + $0x8] sm:$0xff]
    %v2483 = vld [vmem:[%s2480 + $0x10] sm:$0xff]
    %v2484 = vpack.c.bf16 %v2477, %v2477
    %v2486 = vsel %vm230, %v2484, 0
    %2488 = vmatprep.subr.bf16.mxu0 0
    %2489 = vmatpush1.bf16.msra.mxu0 0
    %2490 = vmatprep.subr.bf16.mxu0 0
    %2491 = vmatpush1.bf16.msra.mxu0 0
    %2492 = vmatprep.subr.bf16.mxu0 0
    %2493 = vmatpush1.bf16.msra.mxu0 0
    %2494 = vmatprep.subr.bf16.mxu0 0
    %2495 = vmatpush1.bf16.msra.mxu0 0
    %2496 = vmatprep.subr.bf16.mxu0 0
    %2497 = vmatpush1.bf16.msra.mxu0 0
    %2498 = vmatprep.subr.bf16.mxu0 %v1691
    %2499 = vmatpush1.bf16.msra.mxu0 %v1690
    %2500 = vmatprep.subr.bf16.mxu0 %v1688
    %2501 = vmatpush1.bf16.msra.mxu0 %v1687
    %2502 = vmatprep.subr.bf16.mxu0 %v1685
    %2503 = vmatpush1.bf16.msra.mxu0 %v1684
    %2504 = vmatprep.subr.bf16.mxu0 0
    %2505 = vmatpush2.bf16.msra.mxu0 0
    %2506 = vmatprep.subr.bf16.mxu0 0
    %2507 = vmatpush2.bf16.msra.mxu0 0
    %2508 = vmatprep.subr.bf16.mxu0 0
    %2509 = vmatpush2.bf16.msra.mxu0 0
    %2510 = vmatprep.subr.bf16.mxu0 0
    %2511 = vmatpush2.bf16.msra.mxu0 0
    %2512 = vmatprep.subr.bf16.mxu0 0
    %2513 = vmatpush2.bf16.msra.mxu0 0
    %2514 = vmatprep.subr.bf16.mxu0 0
    %2515 = vmatpush2.bf16.msra.mxu0 0
    %2516 = vmatprep.subr.bf16.mxu0 0
    %2517 = vmatpush2.bf16.msra.mxu0 0
    %2518 = vmatprep.subr.bf16.mxu0 0
    %2519 = vmatpush2.bf16.msra.mxu0 0
    %2520 = vmatprep.mubr.bf16.mxu0 0
    %2521 = vmatmul.mubr.bf16.gmra.mxu0 %v2486
    %v2522 = vpop.f32.mrf.mxu0
    %v2523 = vadd.f32 %v1642, %v2522
    %v2524 = vpop.f32.mrf.mxu0
    %v2525 = vadd.f32 %v1646, %v2524
    %v2526 = vpop.f32.mrf.mxu0
    %v2527 = vpop.f32.mrf.mxu0
    %2528 = vdwg.mxu0
    %2529 = vmatprep.subr.bf16.mxu0 0
    %2530 = vmatpush1.bf16.msra.mxu0 0
    %2531 = vmatprep.subr.bf16.mxu0 0
    %2532 = vmatpush1.bf16.msra.mxu0 0
    %2533 = vmatprep.subr.bf16.mxu0 0
    %2534 = vmatpush1.bf16.msra.mxu0 0
    %2535 = vmatprep.subr.bf16.mxu0 0
    %2536 = vmatpush1.bf16.msra.mxu0 0
    %2537 = vmatprep.subr.bf16.mxu0 0
    %2538 = vmatpush1.bf16.msra.mxu0 0
    %2539 = vmatprep.subr.bf16.mxu0 0
    %2540 = vmatpush1.bf16.msra.mxu0 %v1692
    %2541 = vmatprep.subr.bf16.mxu0 0
    %2542 = vmatpush1.bf16.msra.mxu0 %v1689
    %2543 = vmatprep.subr.bf16.mxu0 0
    %2544 = vmatpush1.bf16.msra.mxu0 %v1686
    %2545 = vmatprep.subr.bf16.mxu0 0
    %2546 = vmatpush2.bf16.msra.mxu0 0
    %2547 = vmatprep.subr.bf16.mxu0 0
    %2548 = vmatpush2.bf16.msra.mxu0 0
    %2549 = vmatprep.subr.bf16.mxu0 0
    %2550 = vmatpush2.bf16.msra.mxu0 0
    %2551 = vmatprep.subr.bf16.mxu0 0
    %2552 = vmatpush2.bf16.msra.mxu0 0
    %2553 = vmatprep.subr.bf16.mxu0 0
    %2554 = vmatpush2.bf16.msra.mxu0 0
    %2555 = vmatprep.subr.bf16.mxu0 0
    %2556 = vmatpush2.bf16.msra.mxu0 0
    %2557 = vmatprep.subr.bf16.mxu0 0
    %2558 = vmatpush2.bf16.msra.mxu0 0
    %2559 = vmatprep.subr.bf16.mxu0 0
    %2560 = vmatpush2.bf16.msra.mxu0 0
    %2561 = vmatprep.mubr.bf16.mxu0 0
    %2562 = vmatmul.mubr.bf16.gmra.mxu0 %v2486
    %v2563 = vpop.f32.mrf.mxu0
    %v2564 = vadd.f32 %v1650, %v2563
    %v2565 = vpop.f32.mrf.mxu0
    %v2566 = vpop.f32.mrf.mxu0
    %v2567 = vpop.f32.mrf.mxu0
    %2568 = vdwg.mxu0
    %v2569 = vadd.f32 %v2481, %v2523
    %v2570 = vxor.u32 %v2569, 2147483648
    %v2571 = vmul.f32 %v2570, 1.442695
    %v2572 = vpow.pop %v2571
    %v2573 = vadd.f32 %v2572, 1.0
    %v2574 = vrcp.pop %v2573
    %v2575 = vmul.f32 1.0, %v2574
    %v2576 = vadd.f32 %v2482, %v2525
    %v2577 = vxor.u32 %v2576, 2147483648
    %v2578 = vmul.f32 %v2577, 1.442695
    %v2579 = vpow.pop %v2578
    %v2580 = vadd.f32 %v2579, 1.0
    %v2581 = vrcp.pop %v2580
    %v2582 = vmul.f32 1.0, %v2581
    %v2583 = vmul.f32 %v2575, %v2564
    %v2584 = vadd.f32 %v2483, %v2583
    %v2585 = vtanh.pop %v2584
    %v2586 = vsub.f32 1.0, %v2582
    %v2587 = vmul.f32 %v2586, %v2585
    %v2588 = vmul.f32 %v2582, %v2477
    %v2589 = vadd.f32 %v2587, %v2588
    %s2590 = scalar_lea.vmem [#allocation3], 56
    %2591 = vst.msk [vmem:[%s2590] sm:$0xff] %vm230, %v2589
    %v2592 = vld [vmem:[#allocation3] sm:$0xff]
    %v2593 = vld [vmem:[#allocation3 + $0x8] sm:$0xff]
    %v2594 = vld [vmem:[#allocation3 + $0x10] sm:$0xff]
    %v2595 = vld [vmem:[#allocation3 + $0x18] sm:$0xff]
    %v2596 = vld [vmem:[#allocation3 + $0x20] sm:$0xff]
    %v2597 = vld [vmem:[#allocation3 + $0x28] sm:$0xff]
    %v2598 = vld [vmem:[#allocation3 + $0x30] sm:$0xff]
    %v2599 = vld [vmem:[#allocation3 + $0x38] sm:$0xff]
    %s2600 = scalar_lea.vmem [#allocation7], 144
    %v2601 = vld [vmem:[%s2600] sm:$0xff]
    %v2602 = vld [vmem:[%s2600 + $0x8] sm:$0xf]
    %v2603 = vld [vmem:[%s2600 + $0xc] sm:$0xff]
    %v2604 = vld [vmem:[%s2600 + $0x14] sm:$0xf]
    %v2605 = vld [vmem:[%s2600 + $0x18] sm:$0xff]
    %v2606 = vld [vmem:[%s2600 + $0x20] sm:$0xf]
    %v2607 = vld [vmem:[%s2600 + $0x24] sm:$0xff]
    %v2608 = vld [vmem:[%s2600 + $0x2c] sm:$0xf]
    %v2609 = vld [vmem:[%s2600 + $0x30] sm:$0xff]
    %v2610 = vld [vmem:[%s2600 + $0x38] sm:$0xf]
    %v2611 = vld [vmem:[%s2600 + $0x3c] sm:$0xff]
    %v2612 = vld [vmem:[%s2600 + $0x44] sm:$0xf]
    %s2613 = scalar_lea.vmem [#allocation7], 216
    %v2614 = vld [vmem:[%s2613] sm:$0xff]
    %v2615 = vld [vmem:[%s2613 + $0x8] sm:$0xf]
    %v2616 = vld [vmem:[%s2613 + $0xc] sm:$0xff]
    %v2617 = vld [vmem:[%s2613 + $0x14] sm:$0xf]
    %v2618 = vld [vmem:[%s2613 + $0x18] sm:$0xff]
    %v2619 = vld [vmem:[%s2613 + $0x20] sm:$0xf]
    %v2620 = vld [vmem:[%s2613 + $0x24] sm:$0xff]
    %v2621 = vld [vmem:[%s2613 + $0x2c] sm:$0xf]
    %v2622 = vld [vmem:[%s2613 + $0x30] sm:$0xff]
    %v2623 = vld [vmem:[%s2613 + $0x38] sm:$0xf]
    %v2624 = vld [vmem:[%s2613 + $0x3c] sm:$0xff]
    %v2625 = vld [vmem:[%s2613 + $0x44] sm:$0xf]
    %s2626 = scalar_lea.vmem %s5, 2
    %v2627 = vld [vmem:[%s2626] ss:$4 sm:$0x7]
    %s2628 = scalar_lea.vmem %s5, 3
    %v2629 = vld [vmem:[%s2628] ss:$4 sm:$0x7]
    %v2630 = vpack.c.bf16 %v2593, %v2592
    %v2631 = vpack.c.bf16 %v2595, %v2594
    %v2632 = vpack.c.bf16 %v2597, %v2596
    %v2633 = vpack.c.bf16 %v2599, %v2598
    %v2635 = vlaneseq
    %v2636 = vshrl.u32 %v2635, 7
    %v2637 = vsub.s32 0, %v2636
    %v2638 = vrot.slane %v2627, %v2637
    %v2639 = vlaneseq
    %v2640 = vshrl.u32 %v2639, 7
    %v2641 = vsub.s32 1, %v2640
    %v2642 = vrot.slane %v2627, %v2641
    %v2643 = vlaneseq
    %v2644 = vshrl.u32 %v2643, 7
    %v2645 = vsub.s32 2, %v2644
    %v2646 = vrot.slane %v2627, %v2645
    %v2662 = vunpack.c.l.b16 %v2601
    %v2663 = vunpack.c.h.b16 %v2601
    %v2664 = vunpack.c.l.b16 %v2602
    %v2665 = vunpack.c.l.b16 %v2603
    %v2666 = vunpack.c.h.b16 %v2603
    %v2667 = vunpack.c.l.b16 %v2604
    %v2668 = vunpack.c.l.b16 %v2605
    %v2669 = vunpack.c.h.b16 %v2605
    %v2670 = vunpack.c.l.b16 %v2606
    %v2671 = vunpack.c.l.b16 %v2607
    %v2672 = vunpack.c.h.b16 %v2607
    %v2673 = vunpack.c.l.b16 %v2608
    %v2674 = vunpack.c.l.b16 %v2609
    %v2675 = vunpack.c.h.b16 %v2609
    %v2676 = vunpack.c.l.b16 %v2610
    %v2677 = vunpack.c.l.b16 %v2611
    %v2678 = vunpack.c.h.b16 %v2611
    %v2679 = vunpack.c.l.b16 %v2612
    %v2680 = vpack.c.b16 %v2665, %v2662
    %v2681 = vpack.c.b16 %v2666, %v2663
    %v2682 = vpack.c.b16 %v2667, %v2664
    %v2683 = vpack.c.b16 %v2671, %v2668
    %v2684 = vpack.c.b16 %v2672, %v2669
    %v2685 = vpack.c.b16 %v2673, %v2670
    %v2686 = vpack.c.b16 %v2677, %v2674
    %v2687 = vpack.c.b16 %v2678, %v2675
    %v2688 = vpack.c.b16 %v2679, %v2676
    %v2699 = vsel %vm230, %v2630, 0
    %v2702 = vsel %vm230, %v2631, 0
    %v2705 = vsel %vm230, %v2632, 0
    %v2708 = vsel %vm230, %v2633, 0
    %2710 = vmatprep.subr.bf16.mxu0 0
    %2711 = vmatpush1.bf16.msra.mxu0 0
    %2712 = vmatprep.subr.bf16.mxu0 0
    %2713 = vmatpush1.bf16.msra.mxu0 0
    %2714 = vmatprep.subr.bf16.mxu0 0
    %2715 = vmatpush1.bf16.msra.mxu0 0
    %2716 = vmatprep.subr.bf16.mxu0 0
    %2717 = vmatpush1.bf16.msra.mxu0 0
    %2718 = vmatprep.subr.bf16.mxu0 0
    %2719 = vmatpush1.bf16.msra.mxu0 0
    %2720 = vmatprep.subr.bf16.mxu0 %v2687
    %2721 = vmatpush1.bf16.msra.mxu0 %v2686
    %2722 = vmatprep.subr.bf16.mxu0 %v2684
    %2723 = vmatpush1.bf16.msra.mxu0 %v2683
    %2724 = vmatprep.subr.bf16.mxu0 %v2681
    %2725 = vmatpush1.bf16.msra.mxu0 %v2680
    %2726 = vmatprep.subr.bf16.mxu0 0
    %2727 = vmatpush2.bf16.msra.mxu0 0
    %2728 = vmatprep.subr.bf16.mxu0 0
    %2729 = vmatpush2.bf16.msra.mxu0 0
    %2730 = vmatprep.subr.bf16.mxu0 0
    %2731 = vmatpush2.bf16.msra.mxu0 0
    %2732 = vmatprep.subr.bf16.mxu0 0
    %2733 = vmatpush2.bf16.msra.mxu0 0
    %2734 = vmatprep.subr.bf16.mxu0 0
    %2735 = vmatpush2.bf16.msra.mxu0 0
    %2736 = vmatprep.subr.bf16.mxu0 0
    %2737 = vmatpush2.bf16.msra.mxu0 0
    %2738 = vmatprep.subr.bf16.mxu0 0
    %2739 = vmatpush2.bf16.msra.mxu0 0
    %2740 = vmatprep.subr.bf16.mxu0 0
    %2741 = vmatpush2.bf16.msra.mxu0 0
    %2742 = vmatprep.mubr.bf16.mxu0 0
    %2743 = vmatmul.mubr.bf16.gmra.mxu0 %v2699
    %v2744 = vpop.f32.mrf.mxu0
    %v2745 = vadd.f32 %v2638, %v2744
    %v2746 = vpop.f32.mrf.mxu0
    %v2747 = vadd.f32 %v2642, %v2746
    %v2748 = vpop.f32.mrf.mxu0
    %v2749 = vadd.f32 %v2638, %v2748
    %v2750 = vpop.f32.mrf.mxu0
    %v2751 = vadd.f32 %v2642, %v2750
    %2752 = vmatprep.mubr.bf16.mxu0 0
    %2753 = vmatmul.mubr.bf16.gmra.mxu0 %v2702
    %v2754 = vpop.f32.mrf.mxu0
    %v2755 = vadd.f32 %v2638, %v2754
    %v2756 = vpop.f32.mrf.mxu0
    %v2757 = vadd.f32 %v2642, %v2756
    %v2758 = vpop.f32.mrf.mxu0
    %v2759 = vadd.f32 %v2638, %v2758
    %v2760 = vpop.f32.mrf.mxu0
    %v2761 = vadd.f32 %v2642, %v2760
    %2762 = vmatprep.mubr.bf16.mxu0 0
    %2763 = vmatmul.mubr.bf16.gmra.mxu0 %v2705
    %v2764 = vpop.f32.mrf.mxu0
    %v2765 = vadd.f32 %v2638, %v2764
    %v2766 = vpop.f32.mrf.mxu0
    %v2767 = vadd.f32 %v2642, %v2766
    %v2768 = vpop.f32.mrf.mxu0
    %v2769 = vadd.f32 %v2638, %v2768
    %v2770 = vpop.f32.mrf.mxu0
    %v2771 = vadd.f32 %v2642, %v2770
    %2772 = vmatprep.mubr.bf16.mxu0 0
    %2773 = vmatmul.mubr.bf16.gmra.mxu0 %v2708
    %v2774 = vpop.f32.mrf.mxu0
    %v2775 = vadd.f32 %v2638, %v2774
    %v2776 = vpop.f32.mrf.mxu0
    %v2777 = vadd.f32 %v2642, %v2776
    %v2778 = vpop.f32.mrf.mxu0
    %v2779 = vadd.f32 %v2638, %v2778
    %v2780 = vpop.f32.mrf.mxu0
    %v2781 = vadd.f32 %v2642, %v2780
    %2782 = vdwg.mxu0
    %2783 = vmatprep.subr.bf16.mxu0 0
    %2784 = vmatpush1.bf16.msra.mxu0 0
    %2785 = vmatprep.subr.bf16.mxu0 0
    %2786 = vmatpush1.bf16.msra.mxu0 0
    %2787 = vmatprep.subr.bf16.mxu0 0
    %2788 = vmatpush1.bf16.msra.mxu0 0
    %2789 = vmatprep.subr.bf16.mxu0 0
    %2790 = vmatpush1.bf16.msra.mxu0 0
    %2791 = vmatprep.subr.bf16.mxu0 0
    %2792 = vmatpush1.bf16.msra.mxu0 0
    %2793 = vmatprep.subr.bf16.mxu0 0
    %2794 = vmatpush1.bf16.msra.mxu0 %v2688
    %2795 = vmatprep.subr.bf16.mxu0 0
    %2796 = vmatpush1.bf16.msra.mxu0 %v2685
    %2797 = vmatprep.subr.bf16.mxu0 0
    %2798 = vmatpush1.bf16.msra.mxu0 %v2682
    %2799 = vmatprep.subr.bf16.mxu0 0
    %2800 = vmatpush2.bf16.msra.mxu0 0
    %2801 = vmatprep.subr.bf16.mxu0 0
    %2802 = vmatpush2.bf16.msra.mxu0 0
    %2803 = vmatprep.subr.bf16.mxu0 0
    %2804 = vmatpush2.bf16.msra.mxu0 0
    %2805 = vmatprep.subr.bf16.mxu0 0
    %2806 = vmatpush2.bf16.msra.mxu0 0
    %2807 = vmatprep.subr.bf16.mxu0 0
    %2808 = vmatpush2.bf16.msra.mxu0 0
    %2809 = vmatprep.subr.bf16.mxu0 0
    %2810 = vmatpush2.bf16.msra.mxu0 0
    %2811 = vmatprep.subr.bf16.mxu0 0
    %2812 = vmatpush2.bf16.msra.mxu0 0
    %2813 = vmatprep.subr.bf16.mxu0 0
    %2814 = vmatpush2.bf16.msra.mxu0 0
    %2815 = vmatprep.mubr.bf16.mxu0 0
    %2816 = vmatmul.mubr.bf16.gmra.mxu0 %v2699
    %v2817 = vpop.f32.mrf.mxu0
    %v2818 = vadd.f32 %v2646, %v2817
    %v2819 = vpop.f32.mrf.mxu0
    %v2820 = vpop.f32.mrf.mxu0
    %v2821 = vadd.f32 %v2646, %v2820
    %v2822 = vpop.f32.mrf.mxu0
    %2823 = vmatprep.mubr.bf16.mxu0 0
    %2824 = vmatmul.mubr.bf16.gmra.mxu0 %v2702
    %v2825 = vpop.f32.mrf.mxu0
    %v2826 = vadd.f32 %v2646, %v2825
    %v2827 = vpop.f32.mrf.mxu0
    %v2828 = vpop.f32.mrf.mxu0
    %v2829 = vadd.f32 %v2646, %v2828
    %v2830 = vpop.f32.mrf.mxu0
    %2831 = vmatprep.mubr.bf16.mxu0 0
    %2832 = vmatmul.mubr.bf16.gmra.mxu0 %v2705
    %v2833 = vpop.f32.mrf.mxu0
    %v2834 = vadd.f32 %v2646, %v2833
    %v2835 = vpop.f32.mrf.mxu0
    %v2836 = vpop.f32.mrf.mxu0
    %v2837 = vadd.f32 %v2646, %v2836
    %v2838 = vpop.f32.mrf.mxu0
    %2839 = vmatprep.mubr.bf16.mxu0 0
    %2840 = vmatmul.mubr.bf16.gmra.mxu0 %v2708
    %v2841 = vpop.f32.mrf.mxu0
    %v2842 = vadd.f32 %v2646, %v2841
    %v2843 = vpop.f32.mrf.mxu0
    %v2844 = vpop.f32.mrf.mxu0
    %v2845 = vadd.f32 %v2646, %v2844
    %v2846 = vpop.f32.mrf.mxu0
    %2847 = vdwg.mxu0
    %2848 = vst [vmem:[#allocation2] sm:$0xff] %v2745
    %2849 = vst [vmem:[#allocation2 + $0x8] sm:$0xff] %v2747
    %2850 = vst [vmem:[#allocation2 + $0x10] sm:$0xff] %v2818
    %2851 = vst [vmem:[#allocation2 + $0x18] sm:$0xff] %v2749
    %2852 = vst [vmem:[#allocation2 + $0x20] sm:$0xff] %v2751
    %2853 = vst [vmem:[#allocation2 + $0x28] sm:$0xff] %v2821
    %2854 = vst [vmem:[#allocation2 + $0x30] sm:$0xff] %v2755
    %2855 = vst [vmem:[#allocation2 + $0x38] sm:$0xff] %v2757
    %2856 = vst [vmem:[#allocation2 + $0x40] sm:$0xff] %v2826
    %2857 = vst [vmem:[#allocation2 + $0x48] sm:$0xff] %v2759
    %2858 = vst [vmem:[#allocation2 + $0x50] sm:$0xff] %v2761
    %2859 = vst [vmem:[#allocation2 + $0x58] sm:$0xff] %v2829
    %2860 = vst [vmem:[#allocation2 + $0x60] sm:$0xff] %v2765
    %2861 = vst [vmem:[#allocation2 + $0x68] sm:$0xff] %v2767
    %2862 = vst [vmem:[#allocation2 + $0x70] sm:$0xff] %v2834
    %2863 = vst [vmem:[#allocation2 + $0x78] sm:$0xff] %v2769
    %2864 = vst [vmem:[#allocation2 + $0x80] sm:$0xff] %v2771
    %2865 = vst [vmem:[#allocation2 + $0x88] sm:$0xff] %v2837
    %2866 = vst [vmem:[#allocation2 + $0x90] sm:$0xff] %v2775
    %2867 = vst [vmem:[#allocation2 + $0x98] sm:$0xff] %v2777
    %2868 = vst [vmem:[#allocation2 + $0xa0] sm:$0xff] %v2842
    %2869 = vst [vmem:[#allocation2 + $0xa8] sm:$0xff] %v2779
    %2870 = vst [vmem:[#allocation2 + $0xb0] sm:$0xff] %v2781
    %2871 = vst [vmem:[#allocation2 + $0xb8] sm:$0xff] %v2845
    %v2872 = vld [vmem:[#allocation2] sm:$0xff]
    %v2873 = vld [vmem:[#allocation2 + $0x8] sm:$0xff]
    %v2874 = vld [vmem:[#allocation2 + $0x10] sm:$0xff]
    %v2876 = vlaneseq
    %v2877 = vshrl.u32 %v2876, 7
    %v2878 = vsub.s32 0, %v2877
    %v2879 = vrot.slane %v2629, %v2878
    %v2880 = vlaneseq
    %v2881 = vshrl.u32 %v2880, 7
    %v2882 = vsub.s32 1, %v2881
    %v2883 = vrot.slane %v2629, %v2882
    %v2884 = vlaneseq
    %v2885 = vshrl.u32 %v2884, 7
    %v2886 = vsub.s32 2, %v2885
    %v2887 = vrot.slane %v2629, %v2886
    %v2903 = vunpack.c.l.b16 %v2614
    %v2904 = vunpack.c.h.b16 %v2614
    %v2905 = vunpack.c.l.b16 %v2615
    %v2906 = vunpack.c.l.b16 %v2616
    %v2907 = vunpack.c.h.b16 %v2616
    %v2908 = vunpack.c.l.b16 %v2617
    %v2909 = vunpack.c.l.b16 %v2618
    %v2910 = vunpack.c.h.b16 %v2618
    %v2911 = vunpack.c.l.b16 %v2619
    %v2912 = vunpack.c.l.b16 %v2620
    %v2913 = vunpack.c.h.b16 %v2620
    %v2914 = vunpack.c.l.b16 %v2621
    %v2915 = vunpack.c.l.b16 %v2622
    %v2916 = vunpack.c.h.b16 %v2622
    %v2917 = vunpack.c.l.b16 %v2623
    %v2918 = vunpack.c.l.b16 %v2624
    %v2919 = vunpack.c.h.b16 %v2624
    %v2920 = vunpack.c.l.b16 %v2625
    %v2921 = vpack.c.b16 %v2906, %v2903
    %v2922 = vpack.c.b16 %v2907, %v2904
    %v2923 = vpack.c.b16 %v2908, %v2905
    %v2924 = vpack.c.b16 %v2912, %v2909
    %v2925 = vpack.c.b16 %v2913, %v2910
    %v2926 = vpack.c.b16 %v2914, %v2911
    %v2927 = vpack.c.b16 %v2918, %v2915
    %v2928 = vpack.c.b16 %v2919, %v2916
    %v2929 = vpack.c.b16 %v2920, %v2917
    %2939 = vmatprep.subr.bf16.mxu0 0
    %2940 = vmatpush1.bf16.msra.mxu0 0
    %2941 = vmatprep.subr.bf16.mxu0 0
    %2942 = vmatpush1.bf16.msra.mxu0 0
    %2943 = vmatprep.subr.bf16.mxu0 0
    %2944 = vmatpush1.bf16.msra.mxu0 0
    %2945 = vmatprep.subr.bf16.mxu0 0
    %2946 = vmatpush1.bf16.msra.mxu0 0
    %2947 = vmatprep.subr.bf16.mxu0 0
    %2948 = vmatpush1.bf16.msra.mxu0 0
    %2949 = vmatprep.subr.bf16.mxu0 %v2928
    %2950 = vmatpush1.bf16.msra.mxu0 %v2927
    %2951 = vmatprep.subr.bf16.mxu0 %v2925
    %2952 = vmatpush1.bf16.msra.mxu0 %v2924
    %2953 = vmatprep.subr.bf16.mxu0 %v2922
    %2954 = vmatpush1.bf16.msra.mxu0 %v2921
    %2955 = vmatprep.subr.bf16.mxu0 0
    %2956 = vmatpush2.bf16.msra.mxu0 0
    %2957 = vmatprep.subr.bf16.mxu0 0
    %2958 = vmatpush2.bf16.msra.mxu0 0
    %2959 = vmatprep.subr.bf16.mxu0 0
    %2960 = vmatpush2.bf16.msra.mxu0 0
    %2961 = vmatprep.subr.bf16.mxu0 0
    %2962 = vmatpush2.bf16.msra.mxu0 0
    %2963 = vmatprep.subr.bf16.mxu0 0
    %2964 = vmatpush2.bf16.msra.mxu0 0
    %2965 = vmatprep.subr.bf16.mxu0 0
    %2966 = vmatpush2.bf16.msra.mxu0 0
    %2967 = vmatprep.subr.bf16.mxu0 0
    %2968 = vmatpush2.bf16.msra.mxu0 0
    %2969 = vmatprep.subr.bf16.mxu0 0
    %2970 = vmatpush2.bf16.msra.mxu0 0
    %2971 = vmatprep.mubr.bf16.mxu0 0
    %2972 = vmatmul.mubr.bf16.gmra.mxu0 %v1703
    %v2973 = vpop.f32.mrf.mxu0
    %v2974 = vadd.f32 %v2879, %v2973
    %v2975 = vpop.f32.mrf.mxu0
    %v2976 = vadd.f32 %v2883, %v2975
    %v2977 = vpop.f32.mrf.mxu0
    %v2978 = vpop.f32.mrf.mxu0
    %2979 = vdwg.mxu0
    %2980 = vmatprep.subr.bf16.mxu0 0
    %2981 = vmatpush1.bf16.msra.mxu0 0
    %2982 = vmatprep.subr.bf16.mxu0 0
    %2983 = vmatpush1.bf16.msra.mxu0 0
    %2984 = vmatprep.subr.bf16.mxu0 0
    %2985 = vmatpush1.bf16.msra.mxu0 0
    %2986 = vmatprep.subr.bf16.mxu0 0
    %2987 = vmatpush1.bf16.msra.mxu0 0
    %2988 = vmatprep.subr.bf16.mxu0 0
    %2989 = vmatpush1.bf16.msra.mxu0 0
    %2990 = vmatprep.subr.bf16.mxu0 0
    %2991 = vmatpush1.bf16.msra.mxu0 %v2929
    %2992 = vmatprep.subr.bf16.mxu0 0
    %2993 = vmatpush1.bf16.msra.mxu0 %v2926
    %2994 = vmatprep.subr.bf16.mxu0 0
    %2995 = vmatpush1.bf16.msra.mxu0 %v2923
    %2996 = vmatprep.subr.bf16.mxu0 0
    %2997 = vmatpush2.bf16.msra.mxu0 0
    %2998 = vmatprep.subr.bf16.mxu0 0
    %2999 = vmatpush2.bf16.msra.mxu0 0
    %3000 = vmatprep.subr.bf16.mxu0 0
    %3001 = vmatpush2.bf16.msra.mxu0 0
    %3002 = vmatprep.subr.bf16.mxu0 0
    %3003 = vmatpush2.bf16.msra.mxu0 0
    %3004 = vmatprep.subr.bf16.mxu0 0
    %3005 = vmatpush2.bf16.msra.mxu0 0
    %3006 = vmatprep.subr.bf16.mxu0 0
    %3007 = vmatpush2.bf16.msra.mxu0 0
    %3008 = vmatprep.subr.bf16.mxu0 0
    %3009 = vmatpush2.bf16.msra.mxu0 0
    %3010 = vmatprep.subr.bf16.mxu0 0
    %3011 = vmatpush2.bf16.msra.mxu0 0
    %3012 = vmatprep.mubr.bf16.mxu0 0
    %3013 = vmatmul.mubr.bf16.gmra.mxu0 %v1703
    %v3014 = vpop.f32.mrf.mxu0
    %v3015 = vadd.f32 %v2887, %v3014
    %v3016 = vpop.f32.mrf.mxu0
    %v3017 = vpop.f32.mrf.mxu0
    %v3018 = vpop.f32.mrf.mxu0
    %3019 = vdwg.mxu0
    %v3020 = vadd.f32 %v2872, %v2974
    %v3021 = vxor.u32 %v3020, 2147483648
    %v3022 = vmul.f32 %v3021, 1.442695
    %v3023 = vpow.pop %v3022
    %v3024 = vadd.f32 %v3023, 1.0
    %v3025 = vrcp.pop %v3024
    %v3026 = vmul.f32 1.0, %v3025
    %v3027 = vadd.f32 %v2873, %v2976
    %v3028 = vxor.u32 %v3027, 2147483648
    %v3029 = vmul.f32 %v3028, 1.442695
    %v3030 = vpow.pop %v3029
    %v3031 = vadd.f32 %v3030, 1.0
    %v3032 = vrcp.pop %v3031
    %v3033 = vmul.f32 1.0, %v3032
    %v3034 = vmul.f32 %v3026, %v3015
    %v3035 = vadd.f32 %v2874, %v3034
    %v3036 = vtanh.pop %v3035
    %v3037 = vsub.f32 1.0, %v3033
    %v3038 = vmul.f32 %v3037, %v3036
    %v3039 = vmul.f32 %v3033, 0.0
    %v3040 = vadd.f32 %v3038, %v3039
    %3041 = vst.msk [vmem:[#allocation3] sm:$0xff] %vm230, %v3040
    %v3042 = vld [vmem:[%s1808] sm:$0xff]
    %v3043 = vld [vmem:[%s1808 + $0x8] sm:$0xff]
    %v3044 = vld [vmem:[%s1808 + $0x10] sm:$0xff]
    %v3045 = vpack.c.bf16 %v3040, %v3040
    %v3047 = vsel %vm230, %v3045, 0
    %3049 = vmatprep.subr.bf16.mxu0 0
    %3050 = vmatpush1.bf16.msra.mxu0 0
    %3051 = vmatprep.subr.bf16.mxu0 0
    %3052 = vmatpush1.bf16.msra.mxu0 0
    %3053 = vmatprep.subr.bf16.mxu0 0
    %3054 = vmatpush1.bf16.msra.mxu0 0
    %3055 = vmatprep.subr.bf16.mxu0 0
    %3056 = vmatpush1.bf16.msra.mxu0 0
    %3057 = vmatprep.subr.bf16.mxu0 0
    %3058 = vmatpush1.bf16.msra.mxu0 0
    %3059 = vmatprep.subr.bf16.mxu0 %v2928
    %3060 = vmatpush1.bf16.msra.mxu0 %v2927
    %3061 = vmatprep.subr.bf16.mxu0 %v2925
    %3062 = vmatpush1.bf16.msra.mxu0 %v2924
    %3063 = vmatprep.subr.bf16.mxu0 %v2922
    %3064 = vmatpush1.bf16.msra.mxu0 %v2921
    %3065 = vmatprep.subr.bf16.mxu0 0
    %3066 = vmatpush2.bf16.msra.mxu0 0
    %3067 = vmatprep.subr.bf16.mxu0 0
    %3068 = vmatpush2.bf16.msra.mxu0 0
    %3069 = vmatprep.subr.bf16.mxu0 0
    %3070 = vmatpush2.bf16.msra.mxu0 0
    %3071 = vmatprep.subr.bf16.mxu0 0
    %3072 = vmatpush2.bf16.msra.mxu0 0
    %3073 = vmatprep.subr.bf16.mxu0 0
    %3074 = vmatpush2.bf16.msra.mxu0 0
    %3075 = vmatprep.subr.bf16.mxu0 0
    %3076 = vmatpush2.bf16.msra.mxu0 0
    %3077 = vmatprep.subr.bf16.mxu0 0
    %3078 = vmatpush2.bf16.msra.mxu0 0
    %3079 = vmatprep.subr.bf16.mxu0 0
    %3080 = vmatpush2.bf16.msra.mxu0 0
    %3081 = vmatprep.mubr.bf16.mxu0 0
    %3082 = vmatmul.mubr.bf16.gmra.mxu0 %v3047
    %v3083 = vpop.f32.mrf.mxu0
    %v3084 = vadd.f32 %v2879, %v3083
    %v3085 = vpop.f32.mrf.mxu0
    %v3086 = vadd.f32 %v2883, %v3085
    %v3087 = vpop.f32.mrf.mxu0
    %v3088 = vpop.f32.mrf.mxu0
    %3089 = vdwg.mxu0
    %3090 = vmatprep.subr.bf16.mxu0 0
    %3091 = vmatpush1.bf16.msra.mxu0 0
    %3092 = vmatprep.subr.bf16.mxu0 0
    %3093 = vmatpush1.bf16.msra.mxu0 0
    %3094 = vmatprep.subr.bf16.mxu0 0
    %3095 = vmatpush1.bf16.msra.mxu0 0
    %3096 = vmatprep.subr.bf16.mxu0 0
    %3097 = vmatpush1.bf16.msra.mxu0 0
    %3098 = vmatprep.subr.bf16.mxu0 0
    %3099 = vmatpush1.bf16.msra.mxu0 0
    %3100 = vmatprep.subr.bf16.mxu0 0
    %3101 = vmatpush1.bf16.msra.mxu0 %v2929
    %3102 = vmatprep.subr.bf16.mxu0 0
    %3103 = vmatpush1.bf16.msra.mxu0 %v2926
    %3104 = vmatprep.subr.bf16.mxu0 0
    %3105 = vmatpush1.bf16.msra.mxu0 %v2923
    %3106 = vmatprep.subr.bf16.mxu0 0
    %3107 = vmatpush2.bf16.msra.mxu0 0
    %3108 = vmatprep.subr.bf16.mxu0 0
    %3109 = vmatpush2.bf16.msra.mxu0 0
    %3110 = vmatprep.subr.bf16.mxu0 0
    %3111 = vmatpush2.bf16.msra.mxu0 0
    %3112 = vmatprep.subr.bf16.mxu0 0
    %3113 = vmatpush2.bf16.msra.mxu0 0
    %3114 = vmatprep.subr.bf16.mxu0 0
    %3115 = vmatpush2.bf16.msra.mxu0 0
    %3116 = vmatprep.subr.bf16.mxu0 0
    %3117 = vmatpush2.bf16.msra.mxu0 0
    %3118 = vmatprep.subr.bf16.mxu0 0
    %3119 = vmatpush2.bf16.msra.mxu0 0
    %3120 = vmatprep.subr.bf16.mxu0 0
    %3121 = vmatpush2.bf16.msra.mxu0 0
    %3122 = vmatprep.mubr.bf16.mxu0 0
    %3123 = vmatmul.mubr.bf16.gmra.mxu0 %v3047
    %v3124 = vpop.f32.mrf.mxu0
    %v3125 = vadd.f32 %v2887, %v3124
    %v3126 = vpop.f32.mrf.mxu0
    %v3127 = vpop.f32.mrf.mxu0
    %v3128 = vpop.f32.mrf.mxu0
    %3129 = vdwg.mxu0
    %v3130 = vadd.f32 %v3042, %v3084
    %v3131 = vxor.u32 %v3130, 2147483648
    %v3132 = vmul.f32 %v3131, 1.442695
    %v3133 = vpow.pop %v3132
    %v3134 = vadd.f32 %v3133, 1.0
    %v3135 = vrcp.pop %v3134
    %v3136 = vmul.f32 1.0, %v3135
    %v3137 = vadd.f32 %v3043, %v3086
    %v3138 = vxor.u32 %v3137, 2147483648
    %v3139 = vmul.f32 %v3138, 1.442695
    %v3140 = vpow.pop %v3139
    %v3141 = vadd.f32 %v3140, 1.0
    %v3142 = vrcp.pop %v3141
    %v3143 = vmul.f32 1.0, %v3142
    %v3144 = vmul.f32 %v3136, %v3125
    %v3145 = vadd.f32 %v3044, %v3144
    %v3146 = vtanh.pop %v3145
    %v3147 = vsub.f32 1.0, %v3143
    %v3148 = vmul.f32 %v3147, %v3146
    %v3149 = vmul.f32 %v3143, %v3040
    %v3150 = vadd.f32 %v3148, %v3149
    %3151 = vst.msk [vmem:[%s1918] sm:$0xff] %vm230, %v3150
    %v3152 = vld [vmem:[%s1920] sm:$0xff]
    %v3153 = vld [vmem:[%s1920 + $0x8] sm:$0xff]
    %v3154 = vld [vmem:[%s1920 + $0x10] sm:$0xff]
    %v3155 = vpack.c.bf16 %v3150, %v3150
    %v3157 = vsel %vm230, %v3155, 0
    %3159 = vmatprep.subr.bf16.mxu0 0
    %3160 = vmatpush1.bf16.msra.mxu0 0
    %3161 = vmatprep.subr.bf16.mxu0 0
    %3162 = vmatpush1.bf16.msra.mxu0 0
    %3163 = vmatprep.subr.bf16.mxu0 0
    %3164 = vmatpush1.bf16.msra.mxu0 0
    %3165 = vmatprep.subr.bf16.mxu0 0
    %3166 = vmatpush1.bf16.msra.mxu0 0
    %3167 = vmatprep.subr.bf16.mxu0 0
    %3168 = vmatpush1.bf16.msra.mxu0 0
    %3169 = vmatprep.subr.bf16.mxu0 %v2928
    %3170 = vmatpush1.bf16.msra.mxu0 %v2927
    %3171 = vmatprep.subr.bf16.mxu0 %v2925
    %3172 = vmatpush1.bf16.msra.mxu0 %v2924
    %3173 = vmatprep.subr.bf16.mxu0 %v2922
    %3174 = vmatpush1.bf16.msra.mxu0 %v2921
    %3175 = vmatprep.subr.bf16.mxu0 0
    %3176 = vmatpush2.bf16.msra.mxu0 0
    %3177 = vmatprep.subr.bf16.mxu0 0
    %3178 = vmatpush2.bf16.msra.mxu0 0
    %3179 = vmatprep.subr.bf16.mxu0 0
    %3180 = vmatpush2.bf16.msra.mxu0 0
    %3181 = vmatprep.subr.bf16.mxu0 0
    %3182 = vmatpush2.bf16.msra.mxu0 0
    %3183 = vmatprep.subr.bf16.mxu0 0
    %3184 = vmatpush2.bf16.msra.mxu0 0
    %3185 = vmatprep.subr.bf16.mxu0 0
    %3186 = vmatpush2.bf16.msra.mxu0 0
    %3187 = vmatprep.subr.bf16.mxu0 0
    %3188 = vmatpush2.bf16.msra.mxu0 0
    %3189 = vmatprep.subr.bf16.mxu0 0
    %3190 = vmatpush2.bf16.msra.mxu0 0
    %3191 = vmatprep.mubr.bf16.mxu0 0
    %3192 = vmatmul.mubr.bf16.gmra.mxu0 %v3157
    %v3193 = vpop.f32.mrf.mxu0
    %v3194 = vadd.f32 %v2879, %v3193
    %v3195 = vpop.f32.mrf.mxu0
    %v3196 = vadd.f32 %v2883, %v3195
    %v3197 = vpop.f32.mrf.mxu0
    %v3198 = vpop.f32.mrf.mxu0
    %3199 = vdwg.mxu0
    %3200 = vmatprep.subr.bf16.mxu0 0
    %3201 = vmatpush1.bf16.msra.mxu0 0
    %3202 = vmatprep.subr.bf16.mxu0 0
    %3203 = vmatpush1.bf16.msra.mxu0 0
    %3204 = vmatprep.subr.bf16.mxu0 0
    %3205 = vmatpush1.bf16.msra.mxu0 0
    %3206 = vmatprep.subr.bf16.mxu0 0
    %3207 = vmatpush1.bf16.msra.mxu0 0
    %3208 = vmatprep.subr.bf16.mxu0 0
    %3209 = vmatpush1.bf16.msra.mxu0 0
    %3210 = vmatprep.subr.bf16.mxu0 0
    %3211 = vmatpush1.bf16.msra.mxu0 %v2929
    %3212 = vmatprep.subr.bf16.mxu0 0
    %3213 = vmatpush1.bf16.msra.mxu0 %v2926
    %3214 = vmatprep.subr.bf16.mxu0 0
    %3215 = vmatpush1.bf16.msra.mxu0 %v2923
    %3216 = vmatprep.subr.bf16.mxu0 0
    %3217 = vmatpush2.bf16.msra.mxu0 0
    %3218 = vmatprep.subr.bf16.mxu0 0
    %3219 = vmatpush2.bf16.msra.mxu0 0
    %3220 = vmatprep.subr.bf16.mxu0 0
    %3221 = vmatpush2.bf16.msra.mxu0 0
    %3222 = vmatprep.subr.bf16.mxu0 0
    %3223 = vmatpush2.bf16.msra.mxu0 0
    %3224 = vmatprep.subr.bf16.mxu0 0
    %3225 = vmatpush2.bf16.msra.mxu0 0
    %3226 = vmatprep.subr.bf16.mxu0 0
    %3227 = vmatpush2.bf16.msra.mxu0 0
    %3228 = vmatprep.subr.bf16.mxu0 0
    %3229 = vmatpush2.bf16.msra.mxu0 0
    %3230 = vmatprep.subr.bf16.mxu0 0
    %3231 = vmatpush2.bf16.msra.mxu0 0
    %3232 = vmatprep.mubr.bf16.mxu0 0
    %3233 = vmatmul.mubr.bf16.gmra.mxu0 %v3157
    %v3234 = vpop.f32.mrf.mxu0
    %v3235 = vadd.f32 %v2887, %v3234
    %v3236 = vpop.f32.mrf.mxu0
    %v3237 = vpop.f32.mrf.mxu0
    %v3238 = vpop.f32.mrf.mxu0
    %3239 = vdwg.mxu0
    %v3240 = vadd.f32 %v3152, %v3194
    %v3241 = vxor.u32 %v3240, 2147483648
    %v3242 = vmul.f32 %v3241, 1.442695
    %v3243 = vpow.pop %v3242
    %v3244 = vadd.f32 %v3243, 1.0
    %v3245 = vrcp.pop %v3244
    %v3246 = vmul.f32 1.0, %v3245
    %v3247 = vadd.f32 %v3153, %v3196
    %v3248 = vxor.u32 %v3247, 2147483648
    %v3249 = vmul.f32 %v3248, 1.442695
    %v3250 = vpow.pop %v3249
    %v3251 = vadd.f32 %v3250, 1.0
    %v3252 = vrcp.pop %v3251
    %v3253 = vmul.f32 1.0, %v3252
    %v3254 = vmul.f32 %v3246, %v3235
    %v3255 = vadd.f32 %v3154, %v3254
    %v3256 = vtanh.pop %v3255
    %v3257 = vsub.f32 1.0, %v3253
    %v3258 = vmul.f32 %v3257, %v3256
    %v3259 = vmul.f32 %v3253, %v3150
    %v3260 = vadd.f32 %v3258, %v3259
    %3261 = vst.msk [vmem:[%s2030] sm:$0xff] %vm230, %v3260
    %v3262 = vld [vmem:[%s2032] sm:$0xff]
    %v3263 = vld [vmem:[%s2032 + $0x8] sm:$0xff]
    %v3264 = vld [vmem:[%s2032 + $0x10] sm:$0xff]
    %v3265 = vpack.c.bf16 %v3260, %v3260
    %v3267 = vsel %vm230, %v3265, 0
    %3269 = vmatprep.subr.bf16.mxu0 0
    %3270 = vmatpush1.bf16.msra.mxu0 0
    %3271 = vmatprep.subr.bf16.mxu0 0
    %3272 = vmatpush1.bf16.msra.mxu0 0
    %3273 = vmatprep.subr.bf16.mxu0 0
    %3274 = vmatpush1.bf16.msra.mxu0 0
    %3275 = vmatprep.subr.bf16.mxu0 0
    %3276 = vmatpush1.bf16.msra.mxu0 0
    %3277 = vmatprep.subr.bf16.mxu0 0
    %3278 = vmatpush1.bf16.msra.mxu0 0
    %3279 = vmatprep.subr.bf16.mxu0 %v2928
    %3280 = vmatpush1.bf16.msra.mxu0 %v2927
    %3281 = vmatprep.subr.bf16.mxu0 %v2925
    %3282 = vmatpush1.bf16.msra.mxu0 %v2924
    %3283 = vmatprep.subr.bf16.mxu0 %v2922
    %3284 = vmatpush1.bf16.msra.mxu0 %v2921
    %3285 = vmatprep.subr.bf16.mxu0 0
    %3286 = vmatpush2.bf16.msra.mxu0 0
    %3287 = vmatprep.subr.bf16.mxu0 0
    %3288 = vmatpush2.bf16.msra.mxu0 0
    %3289 = vmatprep.subr.bf16.mxu0 0
    %3290 = vmatpush2.bf16.msra.mxu0 0
    %3291 = vmatprep.subr.bf16.mxu0 0
    %3292 = vmatpush2.bf16.msra.mxu0 0
    %3293 = vmatprep.subr.bf16.mxu0 0
    %3294 = vmatpush2.bf16.msra.mxu0 0
    %3295 = vmatprep.subr.bf16.mxu0 0
    %3296 = vmatpush2.bf16.msra.mxu0 0
    %3297 = vmatprep.subr.bf16.mxu0 0
    %3298 = vmatpush2.bf16.msra.mxu0 0
    %3299 = vmatprep.subr.bf16.mxu0 0
    %3300 = vmatpush2.bf16.msra.mxu0 0
    %3301 = vmatprep.mubr.bf16.mxu0 0
    %3302 = vmatmul.mubr.bf16.gmra.mxu0 %v3267
    %v3303 = vpop.f32.mrf.mxu0
    %v3304 = vadd.f32 %v2879, %v3303
    %v3305 = vpop.f32.mrf.mxu0
    %v3306 = vadd.f32 %v2883, %v3305
    %v3307 = vpop.f32.mrf.mxu0
    %v3308 = vpop.f32.mrf.mxu0
    %3309 = vdwg.mxu0
    %3310 = vmatprep.subr.bf16.mxu0 0
    %3311 = vmatpush1.bf16.msra.mxu0 0
    %3312 = vmatprep.subr.bf16.mxu0 0
    %3313 = vmatpush1.bf16.msra.mxu0 0
    %3314 = vmatprep.subr.bf16.mxu0 0
    %3315 = vmatpush1.bf16.msra.mxu0 0
    %3316 = vmatprep.subr.bf16.mxu0 0
    %3317 = vmatpush1.bf16.msra.mxu0 0
    %3318 = vmatprep.subr.bf16.mxu0 0
    %3319 = vmatpush1.bf16.msra.mxu0 0
    %3320 = vmatprep.subr.bf16.mxu0 0
    %3321 = vmatpush1.bf16.msra.mxu0 %v2929
    %3322 = vmatprep.subr.bf16.mxu0 0
    %3323 = vmatpush1.bf16.msra.mxu0 %v2926
    %3324 = vmatprep.subr.bf16.mxu0 0
    %3325 = vmatpush1.bf16.msra.mxu0 %v2923
    %3326 = vmatprep.subr.bf16.mxu0 0
    %3327 = vmatpush2.bf16.msra.mxu0 0
    %3328 = vmatprep.subr.bf16.mxu0 0
    %3329 = vmatpush2.bf16.msra.mxu0 0
    %3330 = vmatprep.subr.bf16.mxu0 0
    %3331 = vmatpush2.bf16.msra.mxu0 0
    %3332 = vmatprep.subr.bf16.mxu0 0
    %3333 = vmatpush2.bf16.msra.mxu0 0
    %3334 = vmatprep.subr.bf16.mxu0 0
    %3335 = vmatpush2.bf16.msra.mxu0 0
    %3336 = vmatprep.subr.bf16.mxu0 0
    %3337 = vmatpush2.bf16.msra.mxu0 0
    %3338 = vmatprep.subr.bf16.mxu0 0
    %3339 = vmatpush2.bf16.msra.mxu0 0
    %3340 = vmatprep.subr.bf16.mxu0 0
    %3341 = vmatpush2.bf16.msra.mxu0 0
    %3342 = vmatprep.mubr.bf16.mxu0 0
    %3343 = vmatmul.mubr.bf16.gmra.mxu0 %v3267
    %v3344 = vpop.f32.mrf.mxu0
    %v3345 = vadd.f32 %v2887, %v3344
    %v3346 = vpop.f32.mrf.mxu0
    %v3347 = vpop.f32.mrf.mxu0
    %v3348 = vpop.f32.mrf.mxu0
    %3349 = vdwg.mxu0
    %v3350 = vadd.f32 %v3262, %v3304
    %v3351 = vxor.u32 %v3350, 2147483648
    %v3352 = vmul.f32 %v3351, 1.442695
    %v3353 = vpow.pop %v3352
    %v3354 = vadd.f32 %v3353, 1.0
    %v3355 = vrcp.pop %v3354
    %v3356 = vmul.f32 1.0, %v3355
    %v3357 = vadd.f32 %v3263, %v3306
    %v3358 = vxor.u32 %v3357, 2147483648
    %v3359 = vmul.f32 %v3358, 1.442695
    %v3360 = vpow.pop %v3359
    %v3361 = vadd.f32 %v3360, 1.0
    %v3362 = vrcp.pop %v3361
    %v3363 = vmul.f32 1.0, %v3362
    %v3364 = vmul.f32 %v3356, %v3345
    %v3365 = vadd.f32 %v3264, %v3364
    %v3366 = vtanh.pop %v3365
    %v3367 = vsub.f32 1.0, %v3363
    %v3368 = vmul.f32 %v3367, %v3366
    %v3369 = vmul.f32 %v3363, %v3260
    %v3370 = vadd.f32 %v3368, %v3369
    %3371 = vst.msk [vmem:[%s2142] sm:$0xff] %vm230, %v3370
    %v3372 = vld [vmem:[%s2144] sm:$0xff]
    %v3373 = vld [vmem:[%s2144 + $0x8] sm:$0xff]
    %v3374 = vld [vmem:[%s2144 + $0x10] sm:$0xff]
    %v3375 = vpack.c.bf16 %v3370, %v3370
    %v3377 = vsel %vm230, %v3375, 0
    %3379 = vmatprep.subr.bf16.mxu0 0
    %3380 = vmatpush1.bf16.msra.mxu0 0
    %3381 = vmatprep.subr.bf16.mxu0 0
    %3382 = vmatpush1.bf16.msra.mxu0 0
    %3383 = vmatprep.subr.bf16.mxu0 0
    %3384 = vmatpush1.bf16.msra.mxu0 0
    %3385 = vmatprep.subr.bf16.mxu0 0
    %3386 = vmatpush1.bf16.msra.mxu0 0
    %3387 = vmatprep.subr.bf16.mxu0 0
    %3388 = vmatpush1.bf16.msra.mxu0 0
    %3389 = vmatprep.subr.bf16.mxu0 %v2928
    %3390 = vmatpush1.bf16.msra.mxu0 %v2927
    %3391 = vmatprep.subr.bf16.mxu0 %v2925
    %3392 = vmatpush1.bf16.msra.mxu0 %v2924
    %3393 = vmatprep.subr.bf16.mxu0 %v2922
    %3394 = vmatpush1.bf16.msra.mxu0 %v2921
    %3395 = vmatprep.subr.bf16.mxu0 0
    %3396 = vmatpush2.bf16.msra.mxu0 0
    %3397 = vmatprep.subr.bf16.mxu0 0
    %3398 = vmatpush2.bf16.msra.mxu0 0
    %3399 = vmatprep.subr.bf16.mxu0 0
    %3400 = vmatpush2.bf16.msra.mxu0 0
    %3401 = vmatprep.subr.bf16.mxu0 0
    %3402 = vmatpush2.bf16.msra.mxu0 0
    %3403 = vmatprep.subr.bf16.mxu0 0
    %3404 = vmatpush2.bf16.msra.mxu0 0
    %3405 = vmatprep.subr.bf16.mxu0 0
    %3406 = vmatpush2.bf16.msra.mxu0 0
    %3407 = vmatprep.subr.bf16.mxu0 0
    %3408 = vmatpush2.bf16.msra.mxu0 0
    %3409 = vmatprep.subr.bf16.mxu0 0
    %3410 = vmatpush2.bf16.msra.mxu0 0
    %3411 = vmatprep.mubr.bf16.mxu0 0
    %3412 = vmatmul.mubr.bf16.gmra.mxu0 %v3377
    %v3413 = vpop.f32.mrf.mxu0
    %v3414 = vadd.f32 %v2879, %v3413
    %v3415 = vpop.f32.mrf.mxu0
    %v3416 = vadd.f32 %v2883, %v3415
    %v3417 = vpop.f32.mrf.mxu0
    %v3418 = vpop.f32.mrf.mxu0
    %3419 = vdwg.mxu0
    %3420 = vmatprep.subr.bf16.mxu0 0
    %3421 = vmatpush1.bf16.msra.mxu0 0
    %3422 = vmatprep.subr.bf16.mxu0 0
    %3423 = vmatpush1.bf16.msra.mxu0 0
    %3424 = vmatprep.subr.bf16.mxu0 0
    %3425 = vmatpush1.bf16.msra.mxu0 0
    %3426 = vmatprep.subr.bf16.mxu0 0
    %3427 = vmatpush1.bf16.msra.mxu0 0
    %3428 = vmatprep.subr.bf16.mxu0 0
    %3429 = vmatpush1.bf16.msra.mxu0 0
    %3430 = vmatprep.subr.bf16.mxu0 0
    %3431 = vmatpush1.bf16.msra.mxu0 %v2929
    %3432 = vmatprep.subr.bf16.mxu0 0
    %3433 = vmatpush1.bf16.msra.mxu0 %v2926
    %3434 = vmatprep.subr.bf16.mxu0 0
    %3435 = vmatpush1.bf16.msra.mxu0 %v2923
    %3436 = vmatprep.subr.bf16.mxu0 0
    %3437 = vmatpush2.bf16.msra.mxu0 0
    %3438 = vmatprep.subr.bf16.mxu0 0
    %3439 = vmatpush2.bf16.msra.mxu0 0
    %3440 = vmatprep.subr.bf16.mxu0 0
    %3441 = vmatpush2.bf16.msra.mxu0 0
    %3442 = vmatprep.subr.bf16.mxu0 0
    %3443 = vmatpush2.bf16.msra.mxu0 0
    %3444 = vmatprep.subr.bf16.mxu0 0
    %3445 = vmatpush2.bf16.msra.mxu0 0
    %3446 = vmatprep.subr.bf16.mxu0 0
    %3447 = vmatpush2.bf16.msra.mxu0 0
    %3448 = vmatprep.subr.bf16.mxu0 0
    %3449 = vmatpush2.bf16.msra.mxu0 0
    %3450 = vmatprep.subr.bf16.mxu0 0
    %3451 = vmatpush2.bf16.msra.mxu0 0
    %3452 = vmatprep.mubr.bf16.mxu0 0
    %3453 = vmatmul.mubr.bf16.gmra.mxu0 %v3377
    %v3454 = vpop.f32.mrf.mxu0
    %v3455 = vadd.f32 %v2887, %v3454
    %v3456 = vpop.f32.mrf.mxu0
    %v3457 = vpop.f32.mrf.mxu0
    %v3458 = vpop.f32.mrf.mxu0
    %3459 = vdwg.mxu0
    %v3460 = vadd.f32 %v3372, %v3414
    %v3461 = vxor.u32 %v3460, 2147483648
    %v3462 = vmul.f32 %v3461, 1.442695
    %v3463 = vpow.pop %v3462
    %v3464 = vadd.f32 %v3463, 1.0
    %v3465 = vrcp.pop %v3464
    %v3466 = vmul.f32 1.0, %v3465
    %v3467 = vadd.f32 %v3373, %v3416
    %v3468 = vxor.u32 %v3467, 2147483648
    %v3469 = vmul.f32 %v3468, 1.442695
    %v3470 = vpow.pop %v3469
    %v3471 = vadd.f32 %v3470, 1.0
    %v3472 = vrcp.pop %v3471
    %v3473 = vmul.f32 1.0, %v3472
    %v3474 = vmul.f32 %v3466, %v3455
    %v3475 = vadd.f32 %v3374, %v3474
    %v3476 = vtanh.pop %v3475
    %v3477 = vsub.f32 1.0, %v3473
    %v3478 = vmul.f32 %v3477, %v3476
    %v3479 = vmul.f32 %v3473, %v3370
    %v3480 = vadd.f32 %v3478, %v3479
    %3481 = vst.msk [vmem:[%s2254] sm:$0xff] %vm230, %v3480
    %v3482 = vld [vmem:[%s2256] sm:$0xff]
    %v3483 = vld [vmem:[%s2256 + $0x8] sm:$0xff]
    %v3484 = vld [vmem:[%s2256 + $0x10] sm:$0xff]
    %v3485 = vpack.c.bf16 %v3480, %v3480
    %v3487 = vsel %vm230, %v3485, 0
    %3489 = vmatprep.subr.bf16.mxu0 0
    %3490 = vmatpush1.bf16.msra.mxu0 0
    %3491 = vmatprep.subr.bf16.mxu0 0
    %3492 = vmatpush1.bf16.msra.mxu0 0
    %3493 = vmatprep.subr.bf16.mxu0 0
    %3494 = vmatpush1.bf16.msra.mxu0 0
    %3495 = vmatprep.subr.bf16.mxu0 0
    %3496 = vmatpush1.bf16.msra.mxu0 0
    %3497 = vmatprep.subr.bf16.mxu0 0
    %3498 = vmatpush1.bf16.msra.mxu0 0
    %3499 = vmatprep.subr.bf16.mxu0 %v2928
    %3500 = vmatpush1.bf16.msra.mxu0 %v2927
    %3501 = vmatprep.subr.bf16.mxu0 %v2925
    %3502 = vmatpush1.bf16.msra.mxu0 %v2924
    %3503 = vmatprep.subr.bf16.mxu0 %v2922
    %3504 = vmatpush1.bf16.msra.mxu0 %v2921
    %3505 = vmatprep.subr.bf16.mxu0 0
    %3506 = vmatpush2.bf16.msra.mxu0 0
    %3507 = vmatprep.subr.bf16.mxu0 0
    %3508 = vmatpush2.bf16.msra.mxu0 0
    %3509 = vmatprep.subr.bf16.mxu0 0
    %3510 = vmatpush2.bf16.msra.mxu0 0
    %3511 = vmatprep.subr.bf16.mxu0 0
    %3512 = vmatpush2.bf16.msra.mxu0 0
    %3513 = vmatprep.subr.bf16.mxu0 0
    %3514 = vmatpush2.bf16.msra.mxu0 0
    %3515 = vmatprep.subr.bf16.mxu0 0
    %3516 = vmatpush2.bf16.msra.mxu0 0
    %3517 = vmatprep.subr.bf16.mxu0 0
    %3518 = vmatpush2.bf16.msra.mxu0 0
    %3519 = vmatprep.subr.bf16.mxu0 0
    %3520 = vmatpush2.bf16.msra.mxu0 0
    %3521 = vmatprep.mubr.bf16.mxu0 0
    %3522 = vmatmul.mubr.bf16.gmra.mxu0 %v3487
    %v3523 = vpop.f32.mrf.mxu0
    %v3524 = vadd.f32 %v2879, %v3523
    %v3525 = vpop.f32.mrf.mxu0
    %v3526 = vadd.f32 %v2883, %v3525
    %v3527 = vpop.f32.mrf.mxu0
    %v3528 = vpop.f32.mrf.mxu0
    %3529 = vdwg.mxu0
    %3530 = vmatprep.subr.bf16.mxu0 0
    %3531 = vmatpush1.bf16.msra.mxu0 0
    %3532 = vmatprep.subr.bf16.mxu0 0
    %3533 = vmatpush1.bf16.msra.mxu0 0
    %3534 = vmatprep.subr.bf16.mxu0 0
    %3535 = vmatpush1.bf16.msra.mxu0 0
    %3536 = vmatprep.subr.bf16.mxu0 0
    %3537 = vmatpush1.bf16.msra.mxu0 0
    %3538 = vmatprep.subr.bf16.mxu0 0
    %3539 = vmatpush1.bf16.msra.mxu0 0
    %3540 = vmatprep.subr.bf16.mxu0 0
    %3541 = vmatpush1.bf16.msra.mxu0 %v2929
    %3542 = vmatprep.subr.bf16.mxu0 0
    %3543 = vmatpush1.bf16.msra.mxu0 %v2926
    %3544 = vmatprep.subr.bf16.mxu0 0
    %3545 = vmatpush1.bf16.msra.mxu0 %v2923
    %3546 = vmatprep.subr.bf16.mxu0 0
    %3547 = vmatpush2.bf16.msra.mxu0 0
    %3548 = vmatprep.subr.bf16.mxu0 0
    %3549 = vmatpush2.bf16.msra.mxu0 0
    %3550 = vmatprep.subr.bf16.mxu0 0
    %3551 = vmatpush2.bf16.msra.mxu0 0
    %3552 = vmatprep.subr.bf16.mxu0 0
    %3553 = vmatpush2.bf16.msra.mxu0 0
    %3554 = vmatprep.subr.bf16.mxu0 0
    %3555 = vmatpush2.bf16.msra.mxu0 0
    %3556 = vmatprep.subr.bf16.mxu0 0
    %3557 = vmatpush2.bf16.msra.mxu0 0
    %3558 = vmatprep.subr.bf16.mxu0 0
    %3559 = vmatpush2.bf16.msra.mxu0 0
    %3560 = vmatprep.subr.bf16.mxu0 0
    %3561 = vmatpush2.bf16.msra.mxu0 0
    %3562 = vmatprep.mubr.bf16.mxu0 0
    %3563 = vmatmul.mubr.bf16.gmra.mxu0 %v3487
    %v3564 = vpop.f32.mrf.mxu0
    %v3565 = vadd.f32 %v2887, %v3564
    %v3566 = vpop.f32.mrf.mxu0
    %v3567 = vpop.f32.mrf.mxu0
    %v3568 = vpop.f32.mrf.mxu0
    %3569 = vdwg.mxu0
    %v3570 = vadd.f32 %v3482, %v3524
    %v3571 = vxor.u32 %v3570, 2147483648
    %v3572 = vmul.f32 %v3571, 1.442695
    %v3573 = vpow.pop %v3572
    %v3574 = vadd.f32 %v3573, 1.0
    %v3575 = vrcp.pop %v3574
    %v3576 = vmul.f32 1.0, %v3575
    %v3577 = vadd.f32 %v3483, %v3526
    %v3578 = vxor.u32 %v3577, 2147483648
    %v3579 = vmul.f32 %v3578, 1.442695
    %v3580 = vpow.pop %v3579
    %v3581 = vadd.f32 %v3580, 1.0
    %v3582 = vrcp.pop %v3581
    %v3583 = vmul.f32 1.0, %v3582
    %v3584 = vmul.f32 %v3576, %v3565
    %v3585 = vadd.f32 %v3484, %v3584
    %v3586 = vtanh.pop %v3585
    %v3587 = vsub.f32 1.0, %v3583
    %v3588 = vmul.f32 %v3587, %v3586
    %v3589 = vmul.f32 %v3583, %v3480
    %v3590 = vadd.f32 %v3588, %v3589
    %3591 = vst.msk [vmem:[%s2366] sm:$0xff] %vm230, %v3590
    %v3592 = vld [vmem:[%s2368] sm:$0xff]
    %v3593 = vld [vmem:[%s2368 + $0x8] sm:$0xff]
    %v3594 = vld [vmem:[%s2368 + $0x10] sm:$0xff]
    %v3595 = vpack.c.bf16 %v3590, %v3590
    %v3597 = vsel %vm230, %v3595, 0
    %3599 = vmatprep.subr.bf16.mxu0 0
    %3600 = vmatpush1.bf16.msra.mxu0 0
    %3601 = vmatprep.subr.bf16.mxu0 0
    %3602 = vmatpush1.bf16.msra.mxu0 0
    %3603 = vmatprep.subr.bf16.mxu0 0
    %3604 = vmatpush1.bf16.msra.mxu0 0
    %3605 = vmatprep.subr.bf16.mxu0 0
    %3606 = vmatpush1.bf16.msra.mxu0 0
    %3607 = vmatprep.subr.bf16.mxu0 0
    %3608 = vmatpush1.bf16.msra.mxu0 0
    %3609 = vmatprep.subr.bf16.mxu0 %v2928
    %3610 = vmatpush1.bf16.msra.mxu0 %v2927
    %3611 = vmatprep.subr.bf16.mxu0 %v2925
    %3612 = vmatpush1.bf16.msra.mxu0 %v2924
    %3613 = vmatprep.subr.bf16.mxu0 %v2922
    %3614 = vmatpush1.bf16.msra.mxu0 %v2921
    %3615 = vmatprep.subr.bf16.mxu0 0
    %3616 = vmatpush2.bf16.msra.mxu0 0
    %3617 = vmatprep.subr.bf16.mxu0 0
    %3618 = vmatpush2.bf16.msra.mxu0 0
    %3619 = vmatprep.subr.bf16.mxu0 0
    %3620 = vmatpush2.bf16.msra.mxu0 0
    %3621 = vmatprep.subr.bf16.mxu0 0
    %3622 = vmatpush2.bf16.msra.mxu0 0
    %3623 = vmatprep.subr.bf16.mxu0 0
    %3624 = vmatpush2.bf16.msra.mxu0 0
    %3625 = vmatprep.subr.bf16.mxu0 0
    %3626 = vmatpush2.bf16.msra.mxu0 0
    %3627 = vmatprep.subr.bf16.mxu0 0
    %3628 = vmatpush2.bf16.msra.mxu0 0
    %3629 = vmatprep.subr.bf16.mxu0 0
    %3630 = vmatpush2.bf16.msra.mxu0 0
    %3631 = vmatprep.mubr.bf16.mxu0 0
    %3632 = vmatmul.mubr.bf16.gmra.mxu0 %v3597
    %v3633 = vpop.f32.mrf.mxu0
    %v3634 = vadd.f32 %v2879, %v3633
    %v3635 = vpop.f32.mrf.mxu0
    %v3636 = vadd.f32 %v2883, %v3635
    %v3637 = vpop.f32.mrf.mxu0
    %v3638 = vpop.f32.mrf.mxu0
    %3639 = vdwg.mxu0
    %3640 = vmatprep.subr.bf16.mxu0 0
    %3641 = vmatpush1.bf16.msra.mxu0 0
    %3642 = vmatprep.subr.bf16.mxu0 0
    %3643 = vmatpush1.bf16.msra.mxu0 0
    %3644 = vmatprep.subr.bf16.mxu0 0
    %3645 = vmatpush1.bf16.msra.mxu0 0
    %3646 = vmatprep.subr.bf16.mxu0 0
    %3647 = vmatpush1.bf16.msra.mxu0 0
    %3648 = vmatprep.subr.bf16.mxu0 0
    %3649 = vmatpush1.bf16.msra.mxu0 0
    %3650 = vmatprep.subr.bf16.mxu0 0
    %3651 = vmatpush1.bf16.msra.mxu0 %v2929
    %3652 = vmatprep.subr.bf16.mxu0 0
    %3653 = vmatpush1.bf16.msra.mxu0 %v2926
    %3654 = vmatprep.subr.bf16.mxu0 0
    %3655 = vmatpush1.bf16.msra.mxu0 %v2923
    %3656 = vmatprep.subr.bf16.mxu0 0
    %3657 = vmatpush2.bf16.msra.mxu0 0
    %3658 = vmatprep.subr.bf16.mxu0 0
    %3659 = vmatpush2.bf16.msra.mxu0 0
    %3660 = vmatprep.subr.bf16.mxu0 0
    %3661 = vmatpush2.bf16.msra.mxu0 0
    %3662 = vmatprep.subr.bf16.mxu0 0
    %3663 = vmatpush2.bf16.msra.mxu0 0
    %3664 = vmatprep.subr.bf16.mxu0 0
    %3665 = vmatpush2.bf16.msra.mxu0 0
    %3666 = vmatprep.subr.bf16.mxu0 0
    %3667 = vmatpush2.bf16.msra.mxu0 0
    %3668 = vmatprep.subr.bf16.mxu0 0
    %3669 = vmatpush2.bf16.msra.mxu0 0
    %3670 = vmatprep.subr.bf16.mxu0 0
    %3671 = vmatpush2.bf16.msra.mxu0 0
    %3672 = vmatprep.mubr.bf16.mxu0 0
    %3673 = vmatmul.mubr.bf16.gmra.mxu0 %v3597
    %v3674 = vpop.f32.mrf.mxu0
    %v3675 = vadd.f32 %v2887, %v3674
    %v3676 = vpop.f32.mrf.mxu0
    %v3677 = vpop.f32.mrf.mxu0
    %v3678 = vpop.f32.mrf.mxu0
    %3679 = vdwg.mxu0
    %v3680 = vadd.f32 %v3592, %v3634
    %v3681 = vxor.u32 %v3680, 2147483648
    %v3682 = vmul.f32 %v3681, 1.442695
    %v3683 = vpow.pop %v3682
    %v3684 = vadd.f32 %v3683, 1.0
    %v3685 = vrcp.pop %v3684
    %v3686 = vmul.f32 1.0, %v3685
    %v3687 = vadd.f32 %v3593, %v3636
    %v3688 = vxor.u32 %v3687, 2147483648
    %v3689 = vmul.f32 %v3688, 1.442695
    %v3690 = vpow.pop %v3689
    %v3691 = vadd.f32 %v3690, 1.0
    %v3692 = vrcp.pop %v3691
    %v3693 = vmul.f32 1.0, %v3692
    %v3694 = vmul.f32 %v3686, %v3675
    %v3695 = vadd.f32 %v3594, %v3694
    %v3696 = vtanh.pop %v3695
    %v3697 = vsub.f32 1.0, %v3693
    %v3698 = vmul.f32 %v3697, %v3696
    %v3699 = vmul.f32 %v3693, %v3590
    %v3700 = vadd.f32 %v3698, %v3699
    %3701 = vst.msk [vmem:[%s2478] sm:$0xff] %vm230, %v3700
    %v3702 = vld [vmem:[%s2480] sm:$0xff]
    %v3703 = vld [vmem:[%s2480 + $0x8] sm:$0xff]
    %v3704 = vld [vmem:[%s2480 + $0x10] sm:$0xff]
    %v3705 = vpack.c.bf16 %v3700, %v3700
    %v3707 = vsel %vm230, %v3705, 0
    %3709 = vmatprep.subr.bf16.mxu0 0
    %3710 = vmatpush1.bf16.msra.mxu0 0
    %3711 = vmatprep.subr.bf16.mxu0 0
    %3712 = vmatpush1.bf16.msra.mxu0 0
    %3713 = vmatprep.subr.bf16.mxu0 0
    %3714 = vmatpush1.bf16.msra.mxu0 0
    %3715 = vmatprep.subr.bf16.mxu0 0
    %3716 = vmatpush1.bf16.msra.mxu0 0
    %3717 = vmatprep.subr.bf16.mxu0 0
    %3718 = vmatpush1.bf16.msra.mxu0 0
    %3719 = vmatprep.subr.bf16.mxu0 %v2928
    %3720 = vmatpush1.bf16.msra.mxu0 %v2927
    %3721 = vmatprep.subr.bf16.mxu0 %v2925
    %3722 = vmatpush1.bf16.msra.mxu0 %v2924
    %3723 = vmatprep.subr.bf16.mxu0 %v2922
    %3724 = vmatpush1.bf16.msra.mxu0 %v2921
    %3725 = vmatprep.subr.bf16.mxu0 0
    %3726 = vmatpush2.bf16.msra.mxu0 0
    %3727 = vmatprep.subr.bf16.mxu0 0
    %3728 = vmatpush2.bf16.msra.mxu0 0
    %3729 = vmatprep.subr.bf16.mxu0 0
    %3730 = vmatpush2.bf16.msra.mxu0 0
    %3731 = vmatprep.subr.bf16.mxu0 0
    %3732 = vmatpush2.bf16.msra.mxu0 0
    %3733 = vmatprep.subr.bf16.mxu0 0
    %3734 = vmatpush2.bf16.msra.mxu0 0
    %3735 = vmatprep.subr.bf16.mxu0 0
    %3736 = vmatpush2.bf16.msra.mxu0 0
    %3737 = vmatprep.subr.bf16.mxu0 0
    %3738 = vmatpush2.bf16.msra.mxu0 0
    %3739 = vmatprep.subr.bf16.mxu0 0
    %3740 = vmatpush2.bf16.msra.mxu0 0
    %3741 = vmatprep.mubr.bf16.mxu0 0
    %3742 = vmatmul.mubr.bf16.gmra.mxu0 %v3707
    %v3743 = vpop.f32.mrf.mxu0
    %v3744 = vadd.f32 %v2879, %v3743
    %v3745 = vpop.f32.mrf.mxu0
    %v3746 = vadd.f32 %v2883, %v3745
    %v3747 = vpop.f32.mrf.mxu0
    %v3748 = vpop.f32.mrf.mxu0
    %3749 = vdwg.mxu0
    %3750 = vmatprep.subr.bf16.mxu0 0
    %3751 = vmatpush1.bf16.msra.mxu0 0
    %3752 = vmatprep.subr.bf16.mxu0 0
    %3753 = vmatpush1.bf16.msra.mxu0 0
    %3754 = vmatprep.subr.bf16.mxu0 0
    %3755 = vmatpush1.bf16.msra.mxu0 0
    %3756 = vmatprep.subr.bf16.mxu0 0
    %3757 = vmatpush1.bf16.msra.mxu0 0
    %3758 = vmatprep.subr.bf16.mxu0 0
    %3759 = vmatpush1.bf16.msra.mxu0 0
    %3760 = vmatprep.subr.bf16.mxu0 0
    %3761 = vmatpush1.bf16.msra.mxu0 %v2929
    %3762 = vmatprep.subr.bf16.mxu0 0
    %3763 = vmatpush1.bf16.msra.mxu0 %v2926
    %3764 = vmatprep.subr.bf16.mxu0 0
    %3765 = vmatpush1.bf16.msra.mxu0 %v2923
    %3766 = vmatprep.subr.bf16.mxu0 0
    %3767 = vmatpush2.bf16.msra.mxu0 0
    %3768 = vmatprep.subr.bf16.mxu0 0
    %3769 = vmatpush2.bf16.msra.mxu0 0
    %3770 = vmatprep.subr.bf16.mxu0 0
    %3771 = vmatpush2.bf16.msra.mxu0 0
    %3772 = vmatprep.subr.bf16.mxu0 0
    %3773 = vmatpush2.bf16.msra.mxu0 0
    %3774 = vmatprep.subr.bf16.mxu0 0
    %3775 = vmatpush2.bf16.msra.mxu0 0
    %3776 = vmatprep.subr.bf16.mxu0 0
    %3777 = vmatpush2.bf16.msra.mxu0 0
    %3778 = vmatprep.subr.bf16.mxu0 0
    %3779 = vmatpush2.bf16.msra.mxu0 0
    %3780 = vmatprep.subr.bf16.mxu0 0
    %3781 = vmatpush2.bf16.msra.mxu0 0
    %3782 = vmatprep.mubr.bf16.mxu0 0
    %3783 = vmatmul.mubr.bf16.gmra.mxu0 %v3707
    %v3784 = vpop.f32.mrf.mxu0
    %v3785 = vadd.f32 %v2887, %v3784
    %v3786 = vpop.f32.mrf.mxu0
    %v3787 = vpop.f32.mrf.mxu0
    %v3788 = vpop.f32.mrf.mxu0
    %3789 = vdwg.mxu0
    %v3790 = vadd.f32 %v3702, %v3744
    %v3791 = vxor.u32 %v3790, 2147483648
    %v3792 = vmul.f32 %v3791, 1.442695
    %v3793 = vpow.pop %v3792
    %v3794 = vadd.f32 %v3793, 1.0
    %v3795 = vrcp.pop %v3794
    %v3796 = vmul.f32 1.0, %v3795
    %v3797 = vadd.f32 %v3703, %v3746
    %v3798 = vxor.u32 %v3797, 2147483648
    %v3799 = vmul.f32 %v3798, 1.442695
    %v3800 = vpow.pop %v3799
    %v3801 = vadd.f32 %v3800, 1.0
    %v3802 = vrcp.pop %v3801
    %v3803 = vmul.f32 1.0, %v3802
    %v3804 = vmul.f32 %v3796, %v3785
    %v3805 = vadd.f32 %v3704, %v3804
    %v3806 = vtanh.pop %v3805
    %v3807 = vsub.f32 1.0, %v3803
    %v3808 = vmul.f32 %v3807, %v3806
    %v3809 = vmul.f32 %v3803, %v3700
    %v3810 = vadd.f32 %v3808, %v3809
    %3811 = vst.msk [vmem:[%s2590] sm:$0xff] %vm230, %v3810
    %v3812 = vld [vmem:[#allocation3] sm:$0xff]
    %v3813 = vld [vmem:[#allocation3 + $0x8] sm:$0xff]
    %v3814 = vld [vmem:[#allocation3 + $0x10] sm:$0xff]
    %v3815 = vld [vmem:[#allocation3 + $0x18] sm:$0xff]
    %v3816 = vld [vmem:[#allocation3 + $0x20] sm:$0xff]
    %v3817 = vld [vmem:[#allocation3 + $0x28] sm:$0xff]
    %v3818 = vld [vmem:[#allocation3 + $0x30] sm:$0xff]
    %v3819 = vld [vmem:[#allocation3 + $0x38] sm:$0xff]
    %v3820 = vld [vmem:[%s3 + $0xb] sm:$0x1]
    %v3821 = vlaneseq
    %v3822 = vshrl.u32 %v3821, 7
    %v3823 = vsub.s32 0, %v3822
    %v3824 = vrot.slane %v3820, %v3823
    %v3825 = vmul.f32 %v3812, %v3824
    %v3826 = vmul.f32 %v3813, %v3824
    %v3827 = vmul.f32 %v3814, %v3824
    %v3828 = vmul.f32 %v3815, %v3824
    %v3829 = vmul.f32 %v3816, %v3824
    %v3830 = vmul.f32 %v3817, %v3824
    %v3831 = vmul.f32 %v3818, %v3824
    %v3832 = vmul.f32 %v3819, %v3824
    %v3833 = vsel %vm230, %v3825, 0.0
    %3834 = vadd.xlane.f32.xlu0 %v3833
    %v3835 = vpop.xlane.xlu0 %3834
    %v3836 = vsel %vm230, %v3826, 0.0
    %3837 = vadd.xlane.f32.xlu0 %v3836
    %v3838 = vpop.xlane.xlu0 %3837
    %v3839 = vsel %vm230, %v3827, 0.0
    %3840 = vadd.xlane.f32.xlu0 %v3839
    %v3841 = vpop.xlane.xlu0 %3840
    %v3842 = vsel %vm230, %v3828, 0.0
    %3843 = vadd.xlane.f32.xlu0 %v3842
    %v3844 = vpop.xlane.xlu0 %3843
    %v3845 = vsel %vm230, %v3829, 0.0
    %3846 = vadd.xlane.f32.xlu0 %v3845
    %v3847 = vpop.xlane.xlu0 %3846
    %v3848 = vsel %vm230, %v3830, 0.0
    %3849 = vadd.xlane.f32.xlu0 %v3848
    %v3850 = vpop.xlane.xlu0 %3849
    %v3851 = vsel %vm230, %v3831, 0.0
    %3852 = vadd.xlane.f32.xlu0 %v3851
    %v3853 = vpop.xlane.xlu0 %3852
    %v3854 = vsel %vm230, %v3832, 0.0
    %3855 = vadd.xlane.f32.xlu0 %v3854
    %v3856 = vpop.xlane.xlu0 %3855
    %v3857 = vld [vmem:[%s3 + $0xc] sm:$0x1]
    %3859 = vset.pattern.permute.xlu0 0
    %3860 = vperm.xlu0 %3859, %v3857
    %v3861 = vpop.permute.xlu0 %3860
    %v3862 = vlaneseq
    %v3863 = vshrl.u32 %v3862, 7
    %v3864 = vsub.s32 0, %v3863
    %v3865 = vrot.slane %v3861, %v3864
    %v3867 = vadd.f32 %v3835, %v3865
    %v3868 = vadd.f32 %v3838, %v3865
    %v3869 = vadd.f32 %v3841, %v3865
    %v3870 = vadd.f32 %v3844, %v3865
    %v3871 = vadd.f32 %v3847, %v3865
    %v3872 = vadd.f32 %v3850, %v3865
    %v3873 = vadd.f32 %v3853, %v3865
    %v3874 = vadd.f32 %v3856, %v3865
    %v3875 = vxor.u32 %v3867, 2147483648
    %v3876 = vxor.u32 %v3868, 2147483648
    %v3877 = vxor.u32 %v3869, 2147483648
    %v3878 = vxor.u32 %v3870, 2147483648
    %v3879 = vxor.u32 %v3871, 2147483648
    %v3880 = vxor.u32 %v3872, 2147483648
    %v3881 = vxor.u32 %v3873, 2147483648
    %v3882 = vxor.u32 %v3874, 2147483648
    %v3883 = vmul.f32 %v3875, 1.442695
    %v3884 = vpow.pop %v3883
    %v3885 = vmul.f32 %v3876, 1.442695
    %v3886 = vpow.pop %v3885
    %v3887 = vmul.f32 %v3877, 1.442695
    %v3888 = vpow.pop %v3887
    %v3889 = vmul.f32 %v3878, 1.442695
    %v3890 = vpow.pop %v3889
    %v3891 = vmul.f32 %v3879, 1.442695
    %v3892 = vpow.pop %v3891
    %v3893 = vmul.f32 %v3880, 1.442695
    %v3894 = vpow.pop %v3893
    %v3895 = vmul.f32 %v3881, 1.442695
    %v3896 = vpow.pop %v3895
    %v3897 = vmul.f32 %v3882, 1.442695
    %v3898 = vpow.pop %v3897
    %v3899 = vadd.f32 %v3884, 1.0
    %v3900 = vadd.f32 %v3886, 1.0
    %v3901 = vadd.f32 %v3888, 1.0
    %v3902 = vadd.f32 %v3890, 1.0
    %v3903 = vadd.f32 %v3892, 1.0
    %v3904 = vadd.f32 %v3894, 1.0
    %v3905 = vadd.f32 %v3896, 1.0
    %v3906 = vadd.f32 %v3898, 1.0
    %v3907 = vrcp.pop %v3899
    %v3908 = vmul.f32 1.0, %v3907
    %v3909 = vrcp.pop %v3900
    %v3910 = vmul.f32 1.0, %v3909
    %v3911 = vrcp.pop %v3901
    %v3912 = vmul.f32 1.0, %v3911
    %v3913 = vrcp.pop %v3902
    %v3914 = vmul.f32 1.0, %v3913
    %v3915 = vrcp.pop %v3903
    %v3916 = vmul.f32 1.0, %v3915
    %v3917 = vrcp.pop %v3904
    %v3918 = vmul.f32 1.0, %v3917
    %v3919 = vrcp.pop %v3905
    %v3920 = vmul.f32 1.0, %v3919
    %v3921 = vrcp.pop %v3906
    %v3922 = vmul.f32 1.0, %v3921
    %3931 = vset.pattern.permute.xlu0 0
    %3932 = vperm.xlu0 %3931, %v3908
    %v3933 = vpop.permute.xlu0 %3932
    %3934 = vset.pattern.permute.xlu0 0
    %3935 = vperm.xlu0 %3934, %v3910
    %v3936 = vpop.permute.xlu0 %3935
    %3937 = vset.pattern.permute.xlu0 0
    %3938 = vperm.xlu0 %3937, %v3912
    %v3939 = vpop.permute.xlu0 %3938
    %3940 = vset.pattern.permute.xlu0 0
    %3941 = vperm.xlu0 %3940, %v3914
    %v3942 = vpop.permute.xlu0 %3941
    %3943 = vset.pattern.permute.xlu0 0
    %3944 = vperm.xlu0 %3943, %v3916
    %v3945 = vpop.permute.xlu0 %3944
    %3946 = vset.pattern.permute.xlu0 0
    %3947 = vperm.xlu0 %3946, %v3918
    %v3948 = vpop.permute.xlu0 %3947
    %3949 = vset.pattern.permute.xlu0 0
    %3950 = vperm.xlu0 %3949, %v3920
    %v3951 = vpop.permute.xlu0 %3950
    %3952 = vset.pattern.permute.xlu0 0
    %3953 = vperm.xlu0 %3952, %v3922
    %v3954 = vpop.permute.xlu0 %3953
    %v3955 = vlaneseq
    %v3956 = vand.u32 %v3955, 127
    %v3957 = vlaneseq
    %v3958 = vshrl.u32 %v3957, 7
    %v3959 = vsub.s32 %v3956, %v3958
    %v3960 = vrot.slane %v3933, %v3959
    %v3961 = vadd.s32 %v3956, 4294967288
    %v3962 = vlaneseq
    %v3963 = vshrl.u32 %v3962, 7
    %v3964 = vsub.s32 %v3961, %v3963
    %v3965 = vrot.slane %v3936, %v3964
    %vm3966 = vcmask 130112
    %v3967 = vsel %vm3966, %v3965, %v3960
    %v3968 = vadd.s32 %v3956, 4294967280
    %v3969 = vlaneseq
    %v3970 = vshrl.u32 %v3969, 7
    %v3971 = vsub.s32 %v3968, %v3970
    %v3972 = vrot.slane %v3939, %v3971
    %vm3973 = vcmask 195712
    %v3974 = vsel %vm3973, %v3972, %v3967
    %v3975 = vadd.s32 %v3956, 4294967272
    %v3976 = vlaneseq
    %v3977 = vshrl.u32 %v3976, 7
    %v3978 = vsub.s32 %v3975, %v3977
    %v3979 = vrot.slane %v3942, %v3978
    %vm3980 = vcmask 261312
    %v3981 = vsel %vm3980, %v3979, %v3974
    %v3982 = vadd.s32 %v3956, 4294967264
    %v3983 = vlaneseq
    %v3984 = vshrl.u32 %v3983, 7
    %v3985 = vsub.s32 %v3982, %v3984
    %v3986 = vrot.slane %v3945, %v3985
    %vm3987 = vcmask 326912
    %v3988 = vsel %vm3987, %v3986, %v3981
    %v3989 = vadd.s32 %v3956, 4294967256
    %v3990 = vlaneseq
    %v3991 = vshrl.u32 %v3990, 7
    %v3992 = vsub.s32 %v3989, %v3991
    %v3993 = vrot.slane %v3948, %v3992
    %vm3994 = vcmask 392512
    %v3995 = vsel %vm3994, %v3993, %v3988
    %v3996 = vadd.s32 %v3956, 4294967248
    %v3997 = vlaneseq
    %v3998 = vshrl.u32 %v3997, 7
    %v3999 = vsub.s32 %v3996, %v3998
    %v4000 = vrot.slane %v3951, %v3999
    %vm4001 = vcmask 458112
    %v4002 = vsel %vm4001, %v4000, %v3995
    %v4003 = vadd.s32 %v3956, 4294967240
    %v4004 = vlaneseq
    %v4005 = vshrl.u32 %v4004, 7
    %v4006 = vsub.s32 %v4003, %v4005
    %v4007 = vrot.slane %v3954, %v4006
    %vm4008 = vcmask 523712
    %v4009 = vsel %vm4008, %v4007, %v4002
    %vm4011 = vcmask 516096
    %4012 = vst.msk [vmem:[#allocation9] sm:$0x1] %vm4011, %v4009
    // Predicated region
    $region34: #{tpu_custom_call.1} parent=1 // pred_check
      _
    $region35: #{tpu_custom_call.1} parent=1 // pred_check_branch
      %4014 = sbr.rel (0) target = $region37
    $region36: #{tpu_custom_call.1} parent=1 // pred_region
      %s4016 = ssub.s32 16, 16
      %4017 = vsyncadd [#allocation6], %s4016
      %s4019 = sshll.u32 [#allocation9], 4
      %s4020 = int_to_ptr.vmem [resolvable:$true] %s4019
      %4022 = dma.vmem_to_hbm [thread:$0]  %s4020, 16, %s6, [#allocation6]
    $region37: #{tpu_custom_call.1} parent=1 // pred_fallthru
      _
    // Predicated region
    $region38: #{tpu_custom_call.1} parent=1 // pred_check
      _
    $region39: #{tpu_custom_call.1} parent=1 // pred_check_branch
      %4024 = sbr.rel (0) target = $region41
    $region40: #{tpu_custom_call.1} parent=1 // pred_region
      %4025 = dma.done [#allocation6], 16
    $region41: #{tpu_custom_call.1} parent=1 // pred_fallthru
      _
    %4026 = vsyncpa [#allocation5], 1
    %4027 = vsyncpa [#allocation8], 1
    %4028 = vsyncpa [#allocation6], 1

</llo_original>
